<compile_context>
chip_gen: v6e
topology: v6e:2x2x1
jax: 0.10.0
libtpu: 0.0.40
codegen_flags: <defaults>
</compile_context>

<pallas_src>
import math

import jax
import jax.numpy as jnp
from jax import lax
from jax.experimental import pallas as pl
from jax.experimental.pallas import tpu as pltpu

# ---------------- model dims (small, consistent with the module) ------------
D_MODEL = 32
D_STATE = 16
D_CONV = 4
EXPAND = 2
D_INNER = EXPAND * D_MODEL           # 64
D_HALF = D_INNER // 2                # 32
DT_RANK = math.ceil(D_MODEL / 16)    # 2
N_PROJ = DT_RANK + 2 * D_STATE       # 34
BATCH = 2
SEQLEN = 16
BL = BATCH * SEQLEN                  # 32
BC = BATCH * D_HALF                  # 64 (lane-packed batch*channel)


# ---------------------------- in-kernel helpers ------------------------------
def _silu(x):
    return x * (1.0 / (1.0 + jnp.exp(-x)))


def _softplus(x):
    # numerically stable softplus using only exp/log/abs/max
    return jnp.maximum(x, 0.0) + jnp.log(1.0 + jnp.exp(-jnp.abs(x)))


# -------------------------------- wrapper -------------------------------------
def mamba_vision_mixer(hidden, p):
    B, L, Dm = hidden.shape
    h2d = hidden.reshape(B * L, Dm)

    # ---- build kernel-layout parameters (tiny one-time XLA ops) -------------
    w_in_t = p["w_in"].T                                           # (Dm, Di)
    w_conv_cat = jnp.concatenate([p["wconv_x"].T, p["wconv_z"].T], axis=1)  # (K, Di)
    # dt_proj composed with the dt rows of x_proj: (C, C)
    w_dt_comb = p["w_xproj"][:DT_RANK, :].T @ p["w_dt"].T
    dtb_row = p["dt_bias"][None, :]                                # (1, C)
    w_b = p["w_xproj"][DT_RANK:DT_RANK + D_STATE, :]               # (N, C)
    w_c = p["w_xproj"][DT_RANK + D_STATE:, :]                      # (N, C)
    a_log_t = p["a_log"].T                                         # (N, C)
    w_out_t = p["w_out"].T                                         # (Di, Dm)
    w_y = w_out_t[:D_HALF, :]                                      # (C, Dm)
    w_z = w_out_t[D_HALF:, :]                                      # (C, Dm)
    # fused out_proj weight for columns [y | xc | zc]:
    #   y -> Wy,  xc -> D*Wy (skip-connection),  zc -> Wz
    w_out_fused = jnp.concatenate(
        [w_y, p["d"][:, None] * w_y, w_z], axis=0)                 # (3C, Dm)

    # ------------------------------- kernel ----------------------------------
    def kernel(h_ref, w_in_ref, w_conv_ref, w_dtc_ref, dtb_ref,
               w_b_ref, w_c_ref, a_log_ref, w_out_ref,
               out_ref, da_scr, db_scr, cf_scr):
        f32 = jnp.float32

        # in_proj over all B*L tokens at once
        xz = jnp.dot(h_ref[...], w_in_ref[...], preferred_element_type=f32)  # (BL, Di)

        # fused depthwise conv1d (k=4, pad 1 left / 2 right) + SiLU.
        # Batches are contiguous L-row blocks; the hoisted in-sequence index
        # masks both the 'same' padding and any cross-batch leakage of roll.
        w_conv = w_conv_ref[...]                                   # (K, Di)
        pos = lax.broadcasted_iota(jnp.int32, (BL, 1), 0) % L
        acc = xz * w_conv[1:2, :]                                  # tap d = 0
        for k, d in ((0, -1), (2, 1), (3, 2)):
            rolled = pltpu.roll(xz, shift=(-d) % BL, axis=0)
            valid = jnp.logical_and(pos + d >= 0, pos + d < L)
            acc = acc + jnp.where(valid, rolled, 0.0) * w_conv[k:k + 1, :]
        xz_c = _silu(acc)                                          # (BL, Di)
        xc = xz_c[:, :D_HALF]                                      # (BL, C)

        # dt / B / C projections (no lane-offset slices of a fused output)
        delta = _softplus(
            jnp.dot(xc, w_dtc_ref[...], preferred_element_type=f32)
            + dtb_ref[...])                                        # (BL, C)
        xu = delta * xc                                            # (BL, C)
        bT = jnp.einsum('nc,lc->nl', w_b_ref[...], xc,
                        preferred_element_type=f32)                # (N, BL)
        cT = jnp.einsum('nc,lc->nl', w_c_ref[...], xc,
                        preferred_element_type=f32)                # (N, BL)
        a_neg = -jnp.exp(a_log_ref[...])                           # (N, C)
        ones_c = jnp.ones((1, D_HALF), f32)

        # ------- hoisted precompute (OFF the serial chain) -------------------
        # Batched EUP exp and all lane/sublane broadcasts happen here, staged
        # into VMEM; the scan below is load + pure VPU FMA (+ off-chain reduce).
        for t in range(L):
            r0, r1 = t, L + t                                      # batch 0 / 1 rows
            da_scr[t] = jnp.exp(jnp.concatenate(
                [delta[r0:r0 + 1, :] * a_neg,
                 delta[r1:r1 + 1, :] * a_neg], axis=1))            # (N, B*C)
            db_scr[t] = jnp.concatenate(
                [xu[r0:r0 + 1, :] * bT[:, r0:r0 + 1],
                 xu[r1:r1 + 1, :] * bT[:, r1:r1 + 1]], axis=1)     # (N, B*C)
            cf_scr[t] = jnp.concatenate(
                [cT[:, r0:r0 + 1] * ones_c,
                 cT[:, r1:r1 + 1] * ones_c], axis=1)               # (N, B*C)

        # ------- selective scan: both batches packed along lanes -------------
        state = jnp.zeros((D_STATE, BC), f32)
        y_rows = []
        for t in range(L):
            state = da_scr[t] * state + db_scr[t]                  # pure VPU FMA
            # y[t] = sum_n C[t,n] * state[n,:]  (VPU mult + XLU reduce, off-chain)
            y_rows.append(jnp.sum(cf_scr[t] * state, axis=0, keepdims=True))
        y_p = jnp.concatenate(y_rows, axis=0)                      # (L, B*C)
        y = jnp.concatenate([y_p[:, :D_HALF], y_p[:, D_HALF:]], axis=0)  # (BL, C)

        # fused out_proj: [y | xc | zc] @ [Wy ; D*Wy ; Wz]
        yz = jnp.concatenate([y, xz_c], axis=1)                    # (BL, 3C)
        out = jnp.dot(yz, w_out_ref[...], preferred_element_type=f32)
        out_ref[...] = out.astype(out_ref.dtype)

    def spec2(shape):
        return pl.BlockSpec(shape, lambda i: (0, 0))

    grid_spec = pltpu.PrefetchScalarGridSpec(
        num_scalar_prefetch=0,
        grid=(1,),
        in_specs=[
            spec2((BL, Dm)),               # hidden, flattened tokens
            spec2((Dm, D_INNER)),          # in_proj.weight^T
            spec2((D_CONV, D_INNER)),      # [conv1d_x | conv1d_z] weights^T
            spec2((D_HALF, D_HALF)),       # x_proj(dt rows) @ dt_proj, composed
            spec2((1, D_HALF)),            # dt_proj.bias
            spec2((D_STATE, D_HALF)),      # x_proj B rows
            spec2((D_STATE, D_HALF)),      # x_proj C rows
            spec2((D_STATE, D_HALF)),      # A_log^T
            spec2((3 * D_HALF, Dm)),       # fused out_proj weight [Wy; D*Wy; Wz]
        ],
        out_specs=spec2((BL, Dm)),
        scratch_shapes=[
            pltpu.VMEM((SEQLEN, D_STATE, BC), jnp.float32),        # dA staging
            pltpu.VMEM((SEQLEN, D_STATE, BC), jnp.float32),        # dBu staging
            pltpu.VMEM((SEQLEN, D_STATE, BC), jnp.float32),        # C-factor staging
        ],
    )

    out2d = pl.pallas_call(
        kernel,
        out_shape=jax.ShapeDtypeStruct((BL, Dm), jnp.float32),
        grid_spec=grid_spec,
        compiler_params=pltpu.CompilerParams(
            dimension_semantics=("arbitrary",)),
    )(h2d, w_in_t, w_conv_cat, w_dt_comb, dtb_row, w_b, w_c, a_log_t,
      w_out_fused)
    return out2d.reshape(B, L, Dm)


# ---------------------- deterministic synthetic parameters --------------------
def init_params(key):
    ks = jax.random.split(key, 8)
    w_in = jax.random.normal(ks[0], (D_INNER, D_MODEL), jnp.float32) * 0.05
    wconv_x = jax.random.normal(ks[1], (D_HALF, D_CONV), jnp.float32) * 0.2
    wconv_z = jax.random.normal(ks[2], (D_HALF, D_CONV), jnp.float32) * 0.2
    w_xproj = jax.random.normal(ks[3], (N_PROJ, D_HALF), jnp.float32) * 0.05

    dt_init_std = DT_RANK ** -0.5
    w_dt = jax.random.uniform(ks[4], (D_HALF, DT_RANK), jnp.float32,
                              -dt_init_std, dt_init_std)
    dt = jnp.exp(jax.random.uniform(ks[5], (D_HALF,), jnp.float32)
                 * (math.log(0.1) - math.log(0.001)) + math.log(0.001))
    dt = jnp.maximum(dt, 1e-4)
    inv_dt = dt + jnp.log(-jnp.expm1(-dt))                 # dt_proj.bias init

    a = jnp.tile(jnp.arange(1, D_STATE + 1, dtype=jnp.float32)[None, :],
                 (D_HALF, 1))
    a_log = jnp.log(a)
    d_param = jnp.ones((D_HALF,), jnp.float32)
    w_out = jax.random.normal(ks[6], (D_MODEL, D_INNER), jnp.float32) * 0.05

    return dict(w_in=w_in, wconv_x=wconv_x, wconv_z=wconv_z, w_xproj=w_xproj,
                w_dt=w_dt, dt_bias=inv_dt, a_log=a_log, d=d_param, w_out=w_out)


# -------------------------- pure-JAX reference --------------------------------
def reference_forward(hidden, p):
    B, L, _ = hidden.shape
    xz = hidden @ p["w_in"].T                                   # (B, L, Di)
    x = xz[..., :D_HALF]
    z = xz[..., D_HALF:]

    def dwconv(v, w):                                           # v (B,L,C), w (C,K)
        vp = jnp.pad(v, ((0, 0), (1, 2), (0, 0)))               # same-pad for k=4
        out = jnp.zeros_like(v)
        for k in range(D_CONV):
            out = out + vp[:, k:k + L, :] * w[None, None, :, k]
        return out

    xc = jax.nn.silu(dwconv(x, p["wconv_x"]))
    zc = jax.nn.silu(dwconv(z, p["wconv_z"]))

    xdb = xc @ p["w_xproj"].T                                   # (B, L, R+2N)
    dtr = xdb[..., :DT_RANK]
    bm = xdb[..., DT_RANK:DT_RANK + D_STATE]
    cm = xdb[..., DT_RANK + D_STATE:]
    delta = jax.nn.softplus(dtr @ p["w_dt"].T + p["dt_bias"])   # (B, L, C)

    a = -jnp.exp(p["a_log"])                                    # (C, N)
    dA = jnp.exp(jnp.einsum('blc,cn->lbcn', delta, a))
    dBu = jnp.einsum('blc,bln,blc->lbcn', delta, bm, xc)

    def step(state, inp):
        dA_t, dBu_t, c_t = inp
        state = dA_t * state + dBu_t
        return state, jnp.einsum('bcn,bn->bc', state, c_t)

    _, ys = lax.scan(step, jnp.zeros((B, D_HALF, D_STATE), jnp.float32),
                     (dA, dBu, jnp.transpose(cm, (1, 0, 2))))
    y = jnp.transpose(ys, (1, 0, 2)) + xc * p["d"][None, None, :]
    yz = jnp.concatenate([y, zc], axis=-1)
    return yz @ p["w_out"].T


# ----------------------------------- main --------------------------------------
if __name__ == "__main__":
    key = jax.random.PRNGKey(0)
    pkey, xkey = jax.random.split(key)
    params = init_params(pkey)
    hidden = jax.random.normal(xkey, (BATCH, SEQLEN, D_MODEL), jnp.float32)

    out = jax.block_until_ready(mamba_vision_mixer(hidden, params))

    ref = reference_forward(hidden, params)
    assert out.shape == hidden.shape
    max_err = float(jnp.max(jnp.abs(out - ref)))
    if max_err > 5e-3:
        raise AssertionError(f"kernel/reference mismatch: max abs err {max_err}")
    print("KERNEL_OK")
</pallas_src>

<mosaic_0001>
module attributes {stable_mosaic.version = 11 : i64} {
  func.func @kernel(%arg0: i32, %arg1: memref<32x32xf32, #tpu.memory_space<vmem>>, %arg2: memref<32x64xf32, #tpu.memory_space<vmem>>, %arg3: memref<4x64xf32, #tpu.memory_space<vmem>>, %arg4: memref<32x32xf32, #tpu.memory_space<vmem>>, %arg5: memref<1x32xf32, #tpu.memory_space<vmem>>, %arg6: memref<16x32xf32, #tpu.memory_space<vmem>>, %arg7: memref<16x32xf32, #tpu.memory_space<vmem>>, %arg8: memref<16x32xf32, #tpu.memory_space<vmem>>, %arg9: memref<96x32xf32, #tpu.memory_space<vmem>>, %arg10: memref<32x32xf32, #tpu.memory_space<vmem>>, %arg11: memref<16x16x64xf32, #tpu.memory_space<vmem>>, %arg12: memref<16x16x64xf32, #tpu.memory_space<vmem>>, %arg13: memref<16x16x64xf32, #tpu.memory_space<vmem>>) attributes {dimension_semantics = [#tpu.dimension_semantics<arbitrary>], iteration_bounds = array<i64: 1>, scalar_prefetch = 0 : i64, scratch_operands = 3 : i64, tpu.core_type = #tpu.core_type<tc>, window_params = [{pipeline_mode = #tpu.pipeline_mode<synchronous>, transform_indices = @transform_0, window_bounds = array<i64: 32, 32>}, {pipeline_mode = #tpu.pipeline_mode<synchronous>, transform_indices = @transform_1, window_bounds = array<i64: 32, 64>}, {pipeline_mode = #tpu.pipeline_mode<synchronous>, transform_indices = @transform_2, window_bounds = array<i64: 4, 64>}, {pipeline_mode = #tpu.pipeline_mode<synchronous>, transform_indices = @transform_3, window_bounds = array<i64: 32, 32>}, {pipeline_mode = #tpu.pipeline_mode<synchronous>, transform_indices = @transform_4, window_bounds = array<i64: 1, 32>}, {pipeline_mode = #tpu.pipeline_mode<synchronous>, transform_indices = @transform_5, window_bounds = array<i64: 16, 32>}, {pipeline_mode = #tpu.pipeline_mode<synchronous>, transform_indices = @transform_6, window_bounds = array<i64: 16, 32>}, {pipeline_mode = #tpu.pipeline_mode<synchronous>, transform_indices = @transform_7, window_bounds = array<i64: 16, 32>}, {pipeline_mode = #tpu.pipeline_mode<synchronous>, transform_indices = @transform_8, window_bounds = array<i64: 96, 32>}, {pipeline_mode = #tpu.pipeline_mode<synchronous>, transform_indices = @transform_9, window_bounds = array<i64: 32, 32>}]} {
    %c0 = arith.constant 0 : index
    %c0_0 = arith.constant 0 : index
    %0 = vector.load %arg1[%c0, %c0_0] : memref<32x32xf32, #tpu.memory_space<vmem>>, vector<32x32xf32>
    %c0_1 = arith.constant 0 : index
    %c0_2 = arith.constant 0 : index
    %1 = vector.load %arg2[%c0_1, %c0_2] : memref<32x64xf32, #tpu.memory_space<vmem>>, vector<32x64xf32>
    %cst = arith.constant dense<0.000000e+00> : vector<32x64xf32>
    %2 = tpu.matmul %0, %1, %cst {dimension_numbers = #tpu.dot_dimension_numbers<[1], [0], [0], [1], [0, 0, 1, 1], [], []>} : vector<32x32xf32>, vector<32x64xf32>, vector<32x64xf32> -> vector<32x64xf32>
    %c0_3 = arith.constant 0 : index
    %c0_4 = arith.constant 0 : index
    %3 = vector.load %arg3[%c0_3, %c0_4] : memref<4x64xf32, #tpu.memory_space<vmem>>, vector<4x64xf32>
    %4 = tpu.iota {dimensions = array<i32: 0>} : vector<32x1xi32>
    %c16_i32 = arith.constant 16 : i32
    %c0_i32 = arith.constant 0 : i32
    %5 = arith.cmpi eq, %c16_i32, %c0_i32 : i32
    %c1_i32 = arith.constant 1 : i32
    %6 = arith.select %5, %c1_i32, %c16_i32 : i32
    %7 = vector.broadcast %6 : i32 to vector<32x1xi32>
    %8 = arith.remsi %4, %7 : vector<32x1xi32>
    %c0_i32_5 = arith.constant 0 : i32
    %9 = vector.broadcast %c0_i32_5 : i32 to vector<32x1xi32>
    %10 = arith.cmpi ne, %8, %9 : vector<32x1xi32>
    %c0_i32_6 = arith.constant 0 : i32
    %11 = vector.broadcast %c0_i32_6 : i32 to vector<32x1xi32>
    %12 = arith.cmpi slt, %8, %11 : vector<32x1xi32>
    %c0_i32_7 = arith.constant 0 : i32
    %13 = arith.cmpi slt, %6, %c0_i32_7 : i32
    %14 = vector.broadcast %13 : i1 to vector<32x1xi1>
    %15 = vector.broadcast %14 : vector<32x1xi1> to vector<32x1xi1>
    %16 = arith.xori %12, %15 : vector<32x1xi1>
    %17 = arith.andi %16, %10 : vector<32x1xi1>
    %18 = vector.broadcast %6 : i32 to vector<32x1xi32>
    %19 = arith.addi %8, %18 : vector<32x1xi32>
    %20 = arith.select %17, %19, %8 : vector<32x1xi1>, vector<32x1xi32>
    %21 = vector.extract_strided_slice %3 {offsets = [1, 0], sizes = [1, 64], strides = [1, 1]} : vector<4x64xf32> to vector<1x64xf32>
    %22 = vector.broadcast %21 : vector<1x64xf32> to vector<32x64xf32>
    %23 = arith.mulf %2, %22 : vector<32x64xf32>
    %c1_i32_8 = arith.constant 1 : i32
    %24 = tpu.dynamic_rotate %2 by %c1_i32_8 dim 0 : vector<32x64xf32>, i32 -> vector<32x64xf32>
    %c-1_i32 = arith.constant -1 : i32
    %25 = vector.broadcast %c-1_i32 : i32 to vector<32x1xi32>
    %26 = arith.addi %20, %25 : vector<32x1xi32>
    %c0_i32_9 = arith.constant 0 : i32
    %27 = vector.broadcast %c0_i32_9 : i32 to vector<32x1xi32>
    %28 = arith.cmpi sge, %26, %27 : vector<32x1xi32>
    %c-1_i32_10 = arith.constant -1 : i32
    %29 = vector.broadcast %c-1_i32_10 : i32 to vector<32x1xi32>
    %30 = arith.addi %20, %29 : vector<32x1xi32>
    %c16_i32_11 = arith.constant 16 : i32
    %31 = vector.broadcast %c16_i32_11 : i32 to vector<32x1xi32>
    %32 = arith.cmpi slt, %30, %31 : vector<32x1xi32>
    %33 = arith.andi %28, %32 : vector<32x1xi1>
    %cst_12 = arith.constant 0.000000e+00 : f32
    %34 = vector.shape_cast %33 : vector<32x1xi1> to vector<32x1xi1>
    %35 = vector.broadcast %34 : vector<32x1xi1> to vector<32x64xi1>
    %36 = vector.broadcast %cst_12 : f32 to vector<32x64xf32>
    %37 = arith.select %35, %24, %36 : vector<32x64xi1>, vector<32x64xf32>
    %38 = vector.extract_strided_slice %3 {offsets = [0, 0], sizes = [1, 64], strides = [1, 1]} : vector<4x64xf32> to vector<1x64xf32>
    %39 = vector.broadcast %38 : vector<1x64xf32> to vector<32x64xf32>
    %40 = arith.mulf %37, %39 : vector<32x64xf32>
    %41 = arith.addf %23, %40 : vector<32x64xf32>
    %c31_i32 = arith.constant 31 : i32
    %42 = tpu.dynamic_rotate %2 by %c31_i32 dim 0 : vector<32x64xf32>, i32 -> vector<32x64xf32>
    %c1_i32_13 = arith.constant 1 : i32
    %43 = vector.broadcast %c1_i32_13 : i32 to vector<32x1xi32>
    %44 = arith.addi %20, %43 : vector<32x1xi32>
    %c0_i32_14 = arith.constant 0 : i32
    %45 = vector.broadcast %c0_i32_14 : i32 to vector<32x1xi32>
    %46 = arith.cmpi sge, %44, %45 : vector<32x1xi32>
    %c1_i32_15 = arith.constant 1 : i32
    %47 = vector.broadcast %c1_i32_15 : i32 to vector<32x1xi32>
    %48 = arith.addi %20, %47 : vector<32x1xi32>
    %c16_i32_16 = arith.constant 16 : i32
    %49 = vector.broadcast %c16_i32_16 : i32 to vector<32x1xi32>
    %50 = arith.cmpi slt, %48, %49 : vector<32x1xi32>
    %51 = arith.andi %46, %50 : vector<32x1xi1>
    %cst_17 = arith.constant 0.000000e+00 : f32
    %52 = vector.shape_cast %51 : vector<32x1xi1> to vector<32x1xi1>
    %53 = vector.broadcast %52 : vector<32x1xi1> to vector<32x64xi1>
    %54 = vector.broadcast %cst_17 : f32 to vector<32x64xf32>
    %55 = arith.select %53, %42, %54 : vector<32x64xi1>, vector<32x64xf32>
    %56 = vector.extract_strided_slice %3 {offsets = [2, 0], sizes = [1, 64], strides = [1, 1]} : vector<4x64xf32> to vector<1x64xf32>
    %57 = vector.broadcast %56 : vector<1x64xf32> to vector<32x64xf32>
    %58 = arith.mulf %55, %57 : vector<32x64xf32>
    %59 = arith.addf %41, %58 : vector<32x64xf32>
    %c30_i32 = arith.constant 30 : i32
    %60 = tpu.dynamic_rotate %2 by %c30_i32 dim 0 : vector<32x64xf32>, i32 -> vector<32x64xf32>
    %c2_i32 = arith.constant 2 : i32
    %61 = vector.broadcast %c2_i32 : i32 to vector<32x1xi32>
    %62 = arith.addi %20, %61 : vector<32x1xi32>
    %c0_i32_18 = arith.constant 0 : i32
    %63 = vector.broadcast %c0_i32_18 : i32 to vector<32x1xi32>
    %64 = arith.cmpi sge, %62, %63 : vector<32x1xi32>
    %c2_i32_19 = arith.constant 2 : i32
    %65 = vector.broadcast %c2_i32_19 : i32 to vector<32x1xi32>
    %66 = arith.addi %20, %65 : vector<32x1xi32>
    %c16_i32_20 = arith.constant 16 : i32
    %67 = vector.broadcast %c16_i32_20 : i32 to vector<32x1xi32>
    %68 = arith.cmpi slt, %66, %67 : vector<32x1xi32>
    %69 = arith.andi %64, %68 : vector<32x1xi1>
    %cst_21 = arith.constant 0.000000e+00 : f32
    %70 = vector.shape_cast %69 : vector<32x1xi1> to vector<32x1xi1>
    %71 = vector.broadcast %70 : vector<32x1xi1> to vector<32x64xi1>
    %72 = vector.broadcast %cst_21 : f32 to vector<32x64xf32>
    %73 = arith.select %71, %60, %72 : vector<32x64xi1>, vector<32x64xf32>
    %74 = vector.extract_strided_slice %3 {offsets = [3, 0], sizes = [1, 64], strides = [1, 1]} : vector<4x64xf32> to vector<1x64xf32>
    %75 = vector.broadcast %74 : vector<1x64xf32> to vector<32x64xf32>
    %76 = arith.mulf %73, %75 : vector<32x64xf32>
    %77 = arith.addf %59, %76 : vector<32x64xf32>
    %cst_22 = arith.constant 0.000000e+00 : f32
    %78 = vector.broadcast %cst_22 : f32 to vector<32x64xf32>
    %79 = arith.subf %78, %77 : vector<32x64xf32>
    %80 = math.exp %79 : vector<32x64xf32>
    %cst_23 = arith.constant 1.000000e+00 : f32
    %81 = vector.broadcast %cst_23 : f32 to vector<32x64xf32>
    %82 = arith.addf %81, %80 : vector<32x64xf32>
    %cst_24 = arith.constant 1.000000e+00 : f32
    %83 = vector.broadcast %cst_24 : f32 to vector<32x64xf32>
    %84 = arith.divf %83, %82 : vector<32x64xf32>
    %85 = arith.mulf %77, %84 : vector<32x64xf32>
    %86 = vector.extract_strided_slice %85 {offsets = [0, 0], sizes = [32, 32], strides = [1, 1]} : vector<32x64xf32> to vector<32x32xf32>
    %c0_25 = arith.constant 0 : index
    %c0_26 = arith.constant 0 : index
    %87 = vector.load %arg4[%c0_25, %c0_26] : memref<32x32xf32, #tpu.memory_space<vmem>>, vector<32x32xf32>
    %cst_27 = arith.constant dense<0.000000e+00> : vector<32x32xf32>
    %88 = tpu.matmul %86, %87, %cst_27 {dimension_numbers = #tpu.dot_dimension_numbers<[1], [0], [0], [1], [0, 0, 1, 1], [], []>} : vector<32x32xf32>, vector<32x32xf32>, vector<32x32xf32> -> vector<32x32xf32>
    %c0_28 = arith.constant 0 : index
    %c0_29 = arith.constant 0 : index
    %89 = vector.load %arg5[%c0_28, %c0_29] : memref<1x32xf32, #tpu.memory_space<vmem>>, vector<1x32xf32>
    %90 = vector.broadcast %89 : vector<1x32xf32> to vector<32x32xf32>
    %91 = arith.addf %88, %90 : vector<32x32xf32>
    %cst_30 = arith.constant 0.000000e+00 : f32
    %92 = vector.broadcast %cst_30 : f32 to vector<32x32xf32>
    %93 = arith.maximumf %91, %92 : vector<32x32xf32>
    %94 = math.absf %91 : vector<32x32xf32>
    %cst_31 = arith.constant 0.000000e+00 : f32
    %95 = vector.broadcast %cst_31 : f32 to vector<32x32xf32>
    %96 = arith.subf %95, %94 : vector<32x32xf32>
    %97 = math.exp %96 : vector<32x32xf32>
    %cst_32 = arith.constant 1.000000e+00 : f32
    %98 = vector.broadcast %cst_32 : f32 to vector<32x32xf32>
    %99 = arith.addf %98, %97 : vector<32x32xf32>
    %100 = math.log %99 : vector<32x32xf32>
    %101 = arith.addf %93, %100 : vector<32x32xf32>
    %102 = arith.mulf %101, %86 : vector<32x32xf32>
    %c0_33 = arith.constant 0 : index
    %c0_34 = arith.constant 0 : index
    %103 = vector.load %arg6[%c0_33, %c0_34] : memref<16x32xf32, #tpu.memory_space<vmem>>, vector<16x32xf32>
    "tpu.trace_start"() <{level = 10 : i32, message = "nc,lc->nl"}> : () -> ()
    %cst_35 = arith.constant dense<0.000000e+00> : vector<16x32xf32>
    %104 = tpu.matmul %103, %86, %cst_35 {dimension_numbers = #tpu.dot_dimension_numbers<[1], [1], [0], [0], [0, 0, 1, 0], [], []>} : vector<16x32xf32>, vector<32x32xf32>, vector<16x32xf32> -> vector<16x32xf32>
    "tpu.trace_stop"() : () -> ()
    %c0_36 = arith.constant 0 : index
    %c0_37 = arith.constant 0 : index
    %105 = vector.load %arg7[%c0_36, %c0_37] : memref<16x32xf32, #tpu.memory_space<vmem>>, vector<16x32xf32>
    "tpu.trace_start"() <{level = 10 : i32, message = "nc,lc->nl"}> : () -> ()
    %cst_38 = arith.constant dense<0.000000e+00> : vector<16x32xf32>
    %106 = tpu.matmul %105, %86, %cst_38 {dimension_numbers = #tpu.dot_dimension_numbers<[1], [1], [0], [0], [0, 0, 1, 0], [], []>} : vector<16x32xf32>, vector<32x32xf32>, vector<16x32xf32> -> vector<16x32xf32>
    "tpu.trace_stop"() : () -> ()
    %c0_39 = arith.constant 0 : index
    %c0_40 = arith.constant 0 : index
    %107 = vector.load %arg8[%c0_39, %c0_40] : memref<16x32xf32, #tpu.memory_space<vmem>>, vector<16x32xf32>
    %108 = math.exp %107 : vector<16x32xf32>
    %cst_41 = arith.constant 0.000000e+00 : f32
    %109 = vector.broadcast %cst_41 : f32 to vector<16x32xf32>
    %110 = arith.subf %109, %108 : vector<16x32xf32>
    %cst_42 = arith.constant 1.000000e+00 : f32
    %111 = vector.broadcast %cst_42 : f32 to vector<1x32xf32>
    %112 = vector.extract_strided_slice %101 {offsets = [0, 0], sizes = [1, 32], strides = [1, 1]} : vector<32x32xf32> to vector<1x32xf32>
    %113 = vector.broadcast %112 : vector<1x32xf32> to vector<16x32xf32>
    %114 = arith.mulf %113, %110 : vector<16x32xf32>
    %115 = vector.extract_strided_slice %101 {offsets = [16, 0], sizes = [1, 32], strides = [1, 1]} : vector<32x32xf32> to vector<1x32xf32>
    %116 = vector.broadcast %115 : vector<1x32xf32> to vector<16x32xf32>
    %117 = arith.mulf %116, %110 : vector<16x32xf32>
    %118 = tpu.concatenate %114, %117 in 1 : vector<16x32xf32>, vector<16x32xf32> -> vector<16x64xf32>
    %119 = math.exp %118 : vector<16x64xf32>
    %c0_43 = arith.constant 0 : index
    %c0_44 = arith.constant 0 : index
    %c0_45 = arith.constant 0 : index
    %120 = vector.load %arg11[%c0_43, %c0_44, %c0_45] : memref<16x16x64xf32, #tpu.memory_space<vmem>>, vector<1x16x64xf32>
    %121 = vector.shape_cast %120 : vector<1x16x64xf32> to vector<16x64xf32>
    %122 = vector.shape_cast %119 : vector<16x64xf32> to vector<1x16x64xf32>
    tpu.vector_store %arg11[%c0_43, %c0_44, %c0_45], %122 {strides = array<i32>} : memref<16x16x64xf32, #tpu.memory_space<vmem>>, vector<1x16x64xf32>,
    %123 = vector.extract_strided_slice %102 {offsets = [0, 0], sizes = [1, 32], strides = [1, 1]} : vector<32x32xf32> to vector<1x32xf32>
    %124 = vector.extract_strided_slice %104 {offsets = [0, 0], sizes = [16, 1], strides = [1, 1]} : vector<16x32xf32> to vector<16x1xf32>
    %125 = vector.broadcast %123 : vector<1x32xf32> to vector<16x32xf32>
    %126 = vector.broadcast %124 : vector<16x1xf32> to vector<16x32xf32>
    %127 = arith.mulf %125, %126 : vector<16x32xf32>
    %128 = vector.extract_strided_slice %102 {offsets = [16, 0], sizes = [1, 32], strides = [1, 1]} : vector<32x32xf32> to vector<1x32xf32>
    %129 = vector.extract_strided_slice %104 {offsets = [0, 16], sizes = [16, 1], strides = [1, 1]} : vector<16x32xf32> to vector<16x1xf32>
    %130 = vector.broadcast %128 : vector<1x32xf32> to vector<16x32xf32>
    %131 = vector.broadcast %129 : vector<16x1xf32> to vector<16x32xf32>
    %132 = arith.mulf %130, %131 : vector<16x32xf32>
    %133 = tpu.concatenate %127, %132 in 1 : vector<16x32xf32>, vector<16x32xf32> -> vector<16x64xf32>
    %c0_46 = arith.constant 0 : index
    %c0_47 = arith.constant 0 : index
    %c0_48 = arith.constant 0 : index
    %134 = vector.load %arg12[%c0_46, %c0_47, %c0_48] : memref<16x16x64xf32, #tpu.memory_space<vmem>>, vector<1x16x64xf32>
    %135 = vector.shape_cast %134 : vector<1x16x64xf32> to vector<16x64xf32>
    %136 = vector.shape_cast %133 : vector<16x64xf32> to vector<1x16x64xf32>
    tpu.vector_store %arg12[%c0_46, %c0_47, %c0_48], %136 {strides = array<i32>} : memref<16x16x64xf32, #tpu.memory_space<vmem>>, vector<1x16x64xf32>,
    %137 = vector.extract_strided_slice %106 {offsets = [0, 0], sizes = [16, 1], strides = [1, 1]} : vector<16x32xf32> to vector<16x1xf32>
    %138 = vector.broadcast %137 : vector<16x1xf32> to vector<16x32xf32>
    %139 = vector.broadcast %111 : vector<1x32xf32> to vector<16x32xf32>
    %140 = arith.mulf %138, %139 : vector<16x32xf32>
    %141 = vector.extract_strided_slice %106 {offsets = [0, 16], sizes = [16, 1], strides = [1, 1]} : vector<16x32xf32> to vector<16x1xf32>
    %142 = vector.broadcast %141 : vector<16x1xf32> to vector<16x32xf32>
    %143 = vector.broadcast %111 : vector<1x32xf32> to vector<16x32xf32>
    %144 = arith.mulf %142, %143 : vector<16x32xf32>
    %145 = tpu.concatenate %140, %144 in 1 : vector<16x32xf32>, vector<16x32xf32> -> vector<16x64xf32>
    %c0_49 = arith.constant 0 : index
    %c0_50 = arith.constant 0 : index
    %c0_51 = arith.constant 0 : index
    %146 = vector.load %arg13[%c0_49, %c0_50, %c0_51] : memref<16x16x64xf32, #tpu.memory_space<vmem>>, vector<1x16x64xf32>
    %147 = vector.shape_cast %146 : vector<1x16x64xf32> to vector<16x64xf32>
    %148 = vector.shape_cast %145 : vector<16x64xf32> to vector<1x16x64xf32>
    tpu.vector_store %arg13[%c0_49, %c0_50, %c0_51], %148 {strides = array<i32>} : memref<16x16x64xf32, #tpu.memory_space<vmem>>, vector<1x16x64xf32>,
    %149 = vector.extract_strided_slice %101 {offsets = [1, 0], sizes = [1, 32], strides = [1, 1]} : vector<32x32xf32> to vector<1x32xf32>
    %150 = vector.broadcast %149 : vector<1x32xf32> to vector<16x32xf32>
    %151 = arith.mulf %150, %110 : vector<16x32xf32>
    %152 = vector.extract_strided_slice %101 {offsets = [17, 0], sizes = [1, 32], strides = [1, 1]} : vector<32x32xf32> to vector<1x32xf32>
    %153 = vector.broadcast %152 : vector<1x32xf32> to vector<16x32xf32>
    %154 = arith.mulf %153, %110 : vector<16x32xf32>
    %155 = tpu.concatenate %151, %154 in 1 : vector<16x32xf32>, vector<16x32xf32> -> vector<16x64xf32>
    %156 = math.exp %155 : vector<16x64xf32>
    %c1 = arith.constant 1 : index
    %c0_52 = arith.constant 0 : index
    %c0_53 = arith.constant 0 : index
    %157 = vector.load %arg11[%c1, %c0_52, %c0_53] : memref<16x16x64xf32, #tpu.memory_space<vmem>>, vector<1x16x64xf32>
    %158 = vector.shape_cast %157 : vector<1x16x64xf32> to vector<16x64xf32>
    %159 = vector.shape_cast %156 : vector<16x64xf32> to vector<1x16x64xf32>
    tpu.vector_store %arg11[%c1, %c0_52, %c0_53], %159 {strides = array<i32>} : memref<16x16x64xf32, #tpu.memory_space<vmem>>, vector<1x16x64xf32>,
    %160 = vector.extract_strided_slice %102 {offsets = [1, 0], sizes = [1, 32], strides = [1, 1]} : vector<32x32xf32> to vector<1x32xf32>
    %161 = vector.extract_strided_slice %104 {offsets = [0, 1], sizes = [16, 1], strides = [1, 1]} : vector<16x32xf32> to vector<16x1xf32>
    %162 = vector.broadcast %160 : vector<1x32xf32> to vector<16x32xf32>
    %163 = vector.broadcast %161 : vector<16x1xf32> to vector<16x32xf32>
    %164 = arith.mulf %162, %163 : vector<16x32xf32>
    %165 = vector.extract_strided_slice %102 {offsets = [17, 0], sizes = [1, 32], strides = [1, 1]} : vector<32x32xf32> to vector<1x32xf32>
    %166 = vector.extract_strided_slice %104 {offsets = [0, 17], sizes = [16, 1], strides = [1, 1]} : vector<16x32xf32> to vector<16x1xf32>
    %167 = vector.broadcast %165 : vector<1x32xf32> to vector<16x32xf32>
    %168 = vector.broadcast %166 : vector<16x1xf32> to vector<16x32xf32>
    %169 = arith.mulf %167, %168 : vector<16x32xf32>
    %170 = tpu.concatenate %164, %169 in 1 : vector<16x32xf32>, vector<16x32xf32> -> vector<16x64xf32>
    %c1_54 = arith.constant 1 : index
    %c0_55 = arith.constant 0 : index
    %c0_56 = arith.constant 0 : index
    %171 = vector.load %arg12[%c1_54, %c0_55, %c0_56] : memref<16x16x64xf32, #tpu.memory_space<vmem>>, vector<1x16x64xf32>
    %172 = vector.shape_cast %171 : vector<1x16x64xf32> to vector<16x64xf32>
    %173 = vector.shape_cast %170 : vector<16x64xf32> to vector<1x16x64xf32>
    tpu.vector_store %arg12[%c1_54, %c0_55, %c0_56], %173 {strides = array<i32>} : memref<16x16x64xf32, #tpu.memory_space<vmem>>, vector<1x16x64xf32>,
    %174 = vector.extract_strided_slice %106 {offsets = [0, 1], sizes = [16, 1], strides = [1, 1]} : vector<16x32xf32> to vector<16x1xf32>
    %175 = vector.broadcast %174 : vector<16x1xf32> to vector<16x32xf32>
    %176 = vector.broadcast %111 : vector<1x32xf32> to vector<16x32xf32>
    %177 = arith.mulf %175, %176 : vector<16x32xf32>
    %178 = vector.extract_strided_slice %106 {offsets = [0, 17], sizes = [16, 1], strides = [1, 1]} : vector<16x32xf32> to vector<16x1xf32>
    %179 = vector.broadcast %178 : vector<16x1xf32> to vector<16x32xf32>
    %180 = vector.broadcast %111 : vector<1x32xf32> to vector<16x32xf32>
    %181 = arith.mulf %179, %180 : vector<16x32xf32>
    %182 = tpu.concatenate %177, %181 in 1 : vector<16x32xf32>, vector<16x32xf32> -> vector<16x64xf32>
    %c1_57 = arith.constant 1 : index
    %c0_58 = arith.constant 0 : index
    %c0_59 = arith.constant 0 : index
    %183 = vector.load %arg13[%c1_57, %c0_58, %c0_59] : memref<16x16x64xf32, #tpu.memory_space<vmem>>, vector<1x16x64xf32>
    %184 = vector.shape_cast %183 : vector<1x16x64xf32> to vector<16x64xf32>
    %185 = vector.shape_cast %182 : vector<16x64xf32> to vector<1x16x64xf32>
    tpu.vector_store %arg13[%c1_57, %c0_58, %c0_59], %185 {strides = array<i32>} : memref<16x16x64xf32, #tpu.memory_space<vmem>>, vector<1x16x64xf32>,
    %186 = vector.extract_strided_slice %101 {offsets = [2, 0], sizes = [1, 32], strides = [1, 1]} : vector<32x32xf32> to vector<1x32xf32>
    %187 = vector.broadcast %186 : vector<1x32xf32> to vector<16x32xf32>
    %188 = arith.mulf %187, %110 : vector<16x32xf32>
    %189 = vector.extract_strided_slice %101 {offsets = [18, 0], sizes = [1, 32], strides = [1, 1]} : vector<32x32xf32> to vector<1x32xf32>
    %190 = vector.broadcast %189 : vector<1x32xf32> to vector<16x32xf32>
    %191 = arith.mulf %190, %110 : vector<16x32xf32>
    %192 = tpu.concatenate %188, %191 in 1 : vector<16x32xf32>, vector<16x32xf32> -> vector<16x64xf32>
    %193 = math.exp %192 : vector<16x64xf32>
    %c2 = arith.constant 2 : index
    %c0_60 = arith.constant 0 : index
    %c0_61 = arith.constant 0 : index
    %194 = vector.load %arg11[%c2, %c0_60, %c0_61] : memref<16x16x64xf32, #tpu.memory_space<vmem>>, vector<1x16x64xf32>
    %195 = vector.shape_cast %194 : vector<1x16x64xf32> to vector<16x64xf32>
    %196 = vector.shape_cast %193 : vector<16x64xf32> to vector<1x16x64xf32>
    tpu.vector_store %arg11[%c2, %c0_60, %c0_61], %196 {strides = array<i32>} : memref<16x16x64xf32, #tpu.memory_space<vmem>>, vector<1x16x64xf32>,
    %197 = vector.extract_strided_slice %102 {offsets = [2, 0], sizes = [1, 32], strides = [1, 1]} : vector<32x32xf32> to vector<1x32xf32>
    %198 = vector.extract_strided_slice %104 {offsets = [0, 2], sizes = [16, 1], strides = [1, 1]} : vector<16x32xf32> to vector<16x1xf32>
    %199 = vector.broadcast %197 : vector<1x32xf32> to vector<16x32xf32>
    %200 = vector.broadcast %198 : vector<16x1xf32> to vector<16x32xf32>
    %201 = arith.mulf %199, %200 : vector<16x32xf32>
    %202 = vector.extract_strided_slice %102 {offsets = [18, 0], sizes = [1, 32], strides = [1, 1]} : vector<32x32xf32> to vector<1x32xf32>
    %203 = vector.extract_strided_slice %104 {offsets = [0, 18], sizes = [16, 1], strides = [1, 1]} : vector<16x32xf32> to vector<16x1xf32>
    %204 = vector.broadcast %202 : vector<1x32xf32> to vector<16x32xf32>
    %205 = vector.broadcast %203 : vector<16x1xf32> to vector<16x32xf32>
    %206 = arith.mulf %204, %205 : vector<16x32xf32>
    %207 = tpu.concatenate %201, %206 in 1 : vector<16x32xf32>, vector<16x32xf32> -> vector<16x64xf32>
    %c2_62 = arith.constant 2 : index
    %c0_63 = arith.constant 0 : index
    %c0_64 = arith.constant 0 : index
    %208 = vector.load %arg12[%c2_62, %c0_63, %c0_64] : memref<16x16x64xf32, #tpu.memory_space<vmem>>, vector<1x16x64xf32>
    %209 = vector.shape_cast %208 : vector<1x16x64xf32> to vector<16x64xf32>
    %210 = vector.shape_cast %207 : vector<16x64xf32> to vector<1x16x64xf32>
    tpu.vector_store %arg12[%c2_62, %c0_63, %c0_64], %210 {strides = array<i32>} : memref<16x16x64xf32, #tpu.memory_space<vmem>>, vector<1x16x64xf32>,
    %211 = vector.extract_strided_slice %106 {offsets = [0, 2], sizes = [16, 1], strides = [1, 1]} : vector<16x32xf32> to vector<16x1xf32>
    %212 = vector.broadcast %211 : vector<16x1xf32> to vector<16x32xf32>
    %213 = vector.broadcast %111 : vector<1x32xf32> to vector<16x32xf32>
    %214 = arith.mulf %212, %213 : vector<16x32xf32>
    %215 = vector.extract_strided_slice %106 {offsets = [0, 18], sizes = [16, 1], strides = [1, 1]} : vector<16x32xf32> to vector<16x1xf32>
    %216 = vector.broadcast %215 : vector<16x1xf32> to vector<16x32xf32>
    %217 = vector.broadcast %111 : vector<1x32xf32> to vector<16x32xf32>
    %218 = arith.mulf %216, %217 : vector<16x32xf32>
    %219 = tpu.concatenate %214, %218 in 1 : vector<16x32xf32>, vector<16x32xf32> -> vector<16x64xf32>
    %c2_65 = arith.constant 2 : index
    %c0_66 = arith.constant 0 : index
    %c0_67 = arith.constant 0 : index
    %220 = vector.load %arg13[%c2_65, %c0_66, %c0_67] : memref<16x16x64xf32, #tpu.memory_space<vmem>>, vector<1x16x64xf32>
    %221 = vector.shape_cast %220 : vector<1x16x64xf32> to vector<16x64xf32>
    %222 = vector.shape_cast %219 : vector<16x64xf32> to vector<1x16x64xf32>
    tpu.vector_store %arg13[%c2_65, %c0_66, %c0_67], %222 {strides = array<i32>} : memref<16x16x64xf32, #tpu.memory_space<vmem>>, vector<1x16x64xf32>,
    %223 = vector.extract_strided_slice %101 {offsets = [3, 0], sizes = [1, 32], strides = [1, 1]} : vector<32x32xf32> to vector<1x32xf32>
    %224 = vector.broadcast %223 : vector<1x32xf32> to vector<16x32xf32>
    %225 = arith.mulf %224, %110 : vector<16x32xf32>
    %226 = vector.extract_strided_slice %101 {offsets = [19, 0], sizes = [1, 32], strides = [1, 1]} : vector<32x32xf32> to vector<1x32xf32>
    %227 = vector.broadcast %226 : vector<1x32xf32> to vector<16x32xf32>
    %228 = arith.mulf %227, %110 : vector<16x32xf32>
    %229 = tpu.concatenate %225, %228 in 1 : vector<16x32xf32>, vector<16x32xf32> -> vector<16x64xf32>
    %230 = math.exp %229 : vector<16x64xf32>
    %c3 = arith.constant 3 : index
    %c0_68 = arith.constant 0 : index
    %c0_69 = arith.constant 0 : index
    %231 = vector.load %arg11[%c3, %c0_68, %c0_69] : memref<16x16x64xf32, #tpu.memory_space<vmem>>, vector<1x16x64xf32>
    %232 = vector.shape_cast %231 : vector<1x16x64xf32> to vector<16x64xf32>
    %233 = vector.shape_cast %230 : vector<16x64xf32> to vector<1x16x64xf32>
    tpu.vector_store %arg11[%c3, %c0_68, %c0_69], %233 {strides = array<i32>} : memref<16x16x64xf32, #tpu.memory_space<vmem>>, vector<1x16x64xf32>,
    %234 = vector.extract_strided_slice %102 {offsets = [3, 0], sizes = [1, 32], strides = [1, 1]} : vector<32x32xf32> to vector<1x32xf32>
    %235 = vector.extract_strided_slice %104 {offsets = [0, 3], sizes = [16, 1], strides = [1, 1]} : vector<16x32xf32> to vector<16x1xf32>
    %236 = vector.broadcast %234 : vector<1x32xf32> to vector<16x32xf32>
    %237 = vector.broadcast %235 : vector<16x1xf32> to vector<16x32xf32>
    %238 = arith.mulf %236, %237 : vector<16x32xf32>
    %239 = vector.extract_strided_slice %102 {offsets = [19, 0], sizes = [1, 32], strides = [1, 1]} : vector<32x32xf32> to vector<1x32xf32>
    %240 = vector.extract_strided_slice %104 {offsets = [0, 19], sizes = [16, 1], strides = [1, 1]} : vector<16x32xf32> to vector<16x1xf32>
    %241 = vector.broadcast %239 : vector<1x32xf32> to vector<16x32xf32>
    %242 = vector.broadcast %240 : vector<16x1xf32> to vector<16x32xf32>
    %243 = arith.mulf %241, %242 : vector<16x32xf32>
    %244 = tpu.concatenate %238, %243 in 1 : vector<16x32xf32>, vector<16x32xf32> -> vector<16x64xf32>
    %c3_70 = arith.constant 3 : index
    %c0_71 = arith.constant 0 : index
    %c0_72 = arith.constant 0 : index
    %245 = vector.load %arg12[%c3_70, %c0_71, %c0_72] : memref<16x16x64xf32, #tpu.memory_space<vmem>>, vector<1x16x64xf32>
    %246 = vector.shape_cast %245 : vector<1x16x64xf32> to vector<16x64xf32>
    %247 = vector.shape_cast %244 : vector<16x64xf32> to vector<1x16x64xf32>
    tpu.vector_store %arg12[%c3_70, %c0_71, %c0_72], %247 {strides = array<i32>} : memref<16x16x64xf32, #tpu.memory_space<vmem>>, vector<1x16x64xf32>,
    %248 = vector.extract_strided_slice %106 {offsets = [0, 3], sizes = [16, 1], strides = [1, 1]} : vector<16x32xf32> to vector<16x1xf32>
    %249 = vector.broadcast %248 : vector<16x1xf32> to vector<16x32xf32>
    %250 = vector.broadcast %111 : vector<1x32xf32> to vector<16x32xf32>
    %251 = arith.mulf %249, %250 : vector<16x32xf32>
    %252 = vector.extract_strided_slice %106 {offsets = [0, 19], sizes = [16, 1], strides = [1, 1]} : vector<16x32xf32> to vector<16x1xf32>
    %253 = vector.broadcast %252 : vector<16x1xf32> to vector<16x32xf32>
    %254 = vector.broadcast %111 : vector<1x32xf32> to vector<16x32xf32>
    %255 = arith.mulf %253, %254 : vector<16x32xf32>
    %256 = tpu.concatenate %251, %255 in 1 : vector<16x32xf32>, vector<16x32xf32> -> vector<16x64xf32>
    %c3_73 = arith.constant 3 : index
    %c0_74 = arith.constant 0 : index
    %c0_75 = arith.constant 0 : index
    %257 = vector.load %arg13[%c3_73, %c0_74, %c0_75] : memref<16x16x64xf32, #tpu.memory_space<vmem>>, vector<1x16x64xf32>
    %258 = vector.shape_cast %257 : vector<1x16x64xf32> to vector<16x64xf32>
    %259 = vector.shape_cast %256 : vector<16x64xf32> to vector<1x16x64xf32>
    tpu.vector_store %arg13[%c3_73, %c0_74, %c0_75], %259 {strides = array<i32>} : memref<16x16x64xf32, #tpu.memory_space<vmem>>, vector<1x16x64xf32>,
    %260 = vector.extract_strided_slice %101 {offsets = [4, 0], sizes = [1, 32], strides = [1, 1]} : vector<32x32xf32> to vector<1x32xf32>
    %261 = vector.broadcast %260 : vector<1x32xf32> to vector<16x32xf32>
    %262 = arith.mulf %261, %110 : vector<16x32xf32>
    %263 = vector.extract_strided_slice %101 {offsets = [20, 0], sizes = [1, 32], strides = [1, 1]} : vector<32x32xf32> to vector<1x32xf32>
    %264 = vector.broadcast %263 : vector<1x32xf32> to vector<16x32xf32>
    %265 = arith.mulf %264, %110 : vector<16x32xf32>
    %266 = tpu.concatenate %262, %265 in 1 : vector<16x32xf32>, vector<16x32xf32> -> vector<16x64xf32>
    %267 = math.exp %266 : vector<16x64xf32>
    %c4 = arith.constant 4 : index
    %c0_76 = arith.constant 0 : index
    %c0_77 = arith.constant 0 : index
    %268 = vector.load %arg11[%c4, %c0_76, %c0_77] : memref<16x16x64xf32, #tpu.memory_space<vmem>>, vector<1x16x64xf32>
    %269 = vector.shape_cast %268 : vector<1x16x64xf32> to vector<16x64xf32>
    %270 = vector.shape_cast %267 : vector<16x64xf32> to vector<1x16x64xf32>
    tpu.vector_store %arg11[%c4, %c0_76, %c0_77], %270 {strides = array<i32>} : memref<16x16x64xf32, #tpu.memory_space<vmem>>, vector<1x16x64xf32>,
    %271 = vector.extract_strided_slice %102 {offsets = [4, 0], sizes = [1, 32], strides = [1, 1]} : vector<32x32xf32> to vector<1x32xf32>
    %272 = vector.extract_strided_slice %104 {offsets = [0, 4], sizes = [16, 1], strides = [1, 1]} : vector<16x32xf32> to vector<16x1xf32>
    %273 = vector.broadcast %271 : vector<1x32xf32> to vector<16x32xf32>
    %274 = vector.broadcast %272 : vector<16x1xf32> to vector<16x32xf32>
    %275 = arith.mulf %273, %274 : vector<16x32xf32>
    %276 = vector.extract_strided_slice %102 {offsets = [20, 0], sizes = [1, 32], strides = [1, 1]} : vector<32x32xf32> to vector<1x32xf32>
    %277 = vector.extract_strided_slice %104 {offsets = [0, 20], sizes = [16, 1], strides = [1, 1]} : vector<16x32xf32> to vector<16x1xf32>
    %278 = vector.broadcast %276 : vector<1x32xf32> to vector<16x32xf32>
    %279 = vector.broadcast %277 : vector<16x1xf32> to vector<16x32xf32>
    %280 = arith.mulf %278, %279 : vector<16x32xf32>
    %281 = tpu.concatenate %275, %280 in 1 : vector<16x32xf32>, vector<16x32xf32> -> vector<16x64xf32>
    %c4_78 = arith.constant 4 : index
    %c0_79 = arith.constant 0 : index
    %c0_80 = arith.constant 0 : index
    %282 = vector.load %arg12[%c4_78, %c0_79, %c0_80] : memref<16x16x64xf32, #tpu.memory_space<vmem>>, vector<1x16x64xf32>
    %283 = vector.shape_cast %282 : vector<1x16x64xf32> to vector<16x64xf32>
    %284 = vector.shape_cast %281 : vector<16x64xf32> to vector<1x16x64xf32>
    tpu.vector_store %arg12[%c4_78, %c0_79, %c0_80], %284 {strides = array<i32>} : memref<16x16x64xf32, #tpu.memory_space<vmem>>, vector<1x16x64xf32>,
    %285 = vector.extract_strided_slice %106 {offsets = [0, 4], sizes = [16, 1], strides = [1, 1]} : vector<16x32xf32> to vector<16x1xf32>
    %286 = vector.broadcast %285 : vector<16x1xf32> to vector<16x32xf32>
    %287 = vector.broadcast %111 : vector<1x32xf32> to vector<16x32xf32>
    %288 = arith.mulf %286, %287 : vector<16x32xf32>
    %289 = vector.extract_strided_slice %106 {offsets = [0, 20], sizes = [16, 1], strides = [1, 1]} : vector<16x32xf32> to vector<16x1xf32>
    %290 = vector.broadcast %289 : vector<16x1xf32> to vector<16x32xf32>
    %291 = vector.broadcast %111 : vector<1x32xf32> to vector<16x32xf32>
    %292 = arith.mulf %290, %291 : vector<16x32xf32>
    %293 = tpu.concatenate %288, %292 in 1 : vector<16x32xf32>, vector<16x32xf32> -> vector<16x64xf32>
    %c4_81 = arith.constant 4 : index
    %c0_82 = arith.constant 0 : index
    %c0_83 = arith.constant 0 : index
    %294 = vector.load %arg13[%c4_81, %c0_82, %c0_83] : memref<16x16x64xf32, #tpu.memory_space<vmem>>, vector<1x16x64xf32>
    %295 = vector.shape_cast %294 : vector<1x16x64xf32> to vector<16x64xf32>
    %296 = vector.shape_cast %293 : vector<16x64xf32> to vector<1x16x64xf32>
    tpu.vector_store %arg13[%c4_81, %c0_82, %c0_83], %296 {strides = array<i32>} : memref<16x16x64xf32, #tpu.memory_space<vmem>>, vector<1x16x64xf32>,
    %297 = vector.extract_strided_slice %101 {offsets = [5, 0], sizes = [1, 32], strides = [1, 1]} : vector<32x32xf32> to vector<1x32xf32>
    %298 = vector.broadcast %297 : vector<1x32xf32> to vector<16x32xf32>
    %299 = arith.mulf %298, %110 : vector<16x32xf32>
    %300 = vector.extract_strided_slice %101 {offsets = [21, 0], sizes = [1, 32], strides = [1, 1]} : vector<32x32xf32> to vector<1x32xf32>
    %301 = vector.broadcast %300 : vector<1x32xf32> to vector<16x32xf32>
    %302 = arith.mulf %301, %110 : vector<16x32xf32>
    %303 = tpu.concatenate %299, %302 in 1 : vector<16x32xf32>, vector<16x32xf32> -> vector<16x64xf32>
    %304 = math.exp %303 : vector<16x64xf32>
    %c5 = arith.constant 5 : index
    %c0_84 = arith.constant 0 : index
    %c0_85 = arith.constant 0 : index
    %305 = vector.load %arg11[%c5, %c0_84, %c0_85] : memref<16x16x64xf32, #tpu.memory_space<vmem>>, vector<1x16x64xf32>
    %306 = vector.shape_cast %305 : vector<1x16x64xf32> to vector<16x64xf32>
    %307 = vector.shape_cast %304 : vector<16x64xf32> to vector<1x16x64xf32>
    tpu.vector_store %arg11[%c5, %c0_84, %c0_85], %307 {strides = array<i32>} : memref<16x16x64xf32, #tpu.memory_space<vmem>>, vector<1x16x64xf32>,
    %308 = vector.extract_strided_slice %102 {offsets = [5, 0], sizes = [1, 32], strides = [1, 1]} : vector<32x32xf32> to vector<1x32xf32>
    %309 = vector.extract_strided_slice %104 {offsets = [0, 5], sizes = [16, 1], strides = [1, 1]} : vector<16x32xf32> to vector<16x1xf32>
    %310 = vector.broadcast %308 : vector<1x32xf32> to vector<16x32xf32>
    %311 = vector.broadcast %309 : vector<16x1xf32> to vector<16x32xf32>
    %312 = arith.mulf %310, %311 : vector<16x32xf32>
    %313 = vector.extract_strided_slice %102 {offsets = [21, 0], sizes = [1, 32], strides = [1, 1]} : vector<32x32xf32> to vector<1x32xf32>
    %314 = vector.extract_strided_slice %104 {offsets = [0, 21], sizes = [16, 1], strides = [1, 1]} : vector<16x32xf32> to vector<16x1xf32>
    %315 = vector.broadcast %313 : vector<1x32xf32> to vector<16x32xf32>
    %316 = vector.broadcast %314 : vector<16x1xf32> to vector<16x32xf32>
    %317 = arith.mulf %315, %316 : vector<16x32xf32>
    %318 = tpu.concatenate %312, %317 in 1 : vector<16x32xf32>, vector<16x32xf32> -> vector<16x64xf32>
    %c5_86 = arith.constant 5 : index
    %c0_87 = arith.constant 0 : index
    %c0_88 = arith.constant 0 : index
    %319 = vector.load %arg12[%c5_86, %c0_87, %c0_88] : memref<16x16x64xf32, #tpu.memory_space<vmem>>, vector<1x16x64xf32>
    %320 = vector.shape_cast %319 : vector<1x16x64xf32> to vector<16x64xf32>
    %321 = vector.shape_cast %318 : vector<16x64xf32> to vector<1x16x64xf32>
    tpu.vector_store %arg12[%c5_86, %c0_87, %c0_88], %321 {strides = array<i32>} : memref<16x16x64xf32, #tpu.memory_space<vmem>>, vector<1x16x64xf32>,
    %322 = vector.extract_strided_slice %106 {offsets = [0, 5], sizes = [16, 1], strides = [1, 1]} : vector<16x32xf32> to vector<16x1xf32>
    %323 = vector.broadcast %322 : vector<16x1xf32> to vector<16x32xf32>
    %324 = vector.broadcast %111 : vector<1x32xf32> to vector<16x32xf32>
    %325 = arith.mulf %323, %324 : vector<16x32xf32>
    %326 = vector.extract_strided_slice %106 {offsets = [0, 21], sizes = [16, 1], strides = [1, 1]} : vector<16x32xf32> to vector<16x1xf32>
    %327 = vector.broadcast %326 : vector<16x1xf32> to vector<16x32xf32>
    %328 = vector.broadcast %111 : vector<1x32xf32> to vector<16x32xf32>
    %329 = arith.mulf %327, %328 : vector<16x32xf32>
    %330 = tpu.concatenate %325, %329 in 1 : vector<16x32xf32>, vector<16x32xf32> -> vector<16x64xf32>
    %c5_89 = arith.constant 5 : index
    %c0_90 = arith.constant 0 : index
    %c0_91 = arith.constant 0 : index
    %331 = vector.load %arg13[%c5_89, %c0_90, %c0_91] : memref<16x16x64xf32, #tpu.memory_space<vmem>>, vector<1x16x64xf32>
    %332 = vector.shape_cast %331 : vector<1x16x64xf32> to vector<16x64xf32>
    %333 = vector.shape_cast %330 : vector<16x64xf32> to vector<1x16x64xf32>
    tpu.vector_store %arg13[%c5_89, %c0_90, %c0_91], %333 {strides = array<i32>} : memref<16x16x64xf32, #tpu.memory_space<vmem>>, vector<1x16x64xf32>,
    %334 = vector.extract_strided_slice %101 {offsets = [6, 0], sizes = [1, 32], strides = [1, 1]} : vector<32x32xf32> to vector<1x32xf32>
    %335 = vector.broadcast %334 : vector<1x32xf32> to vector<16x32xf32>
    %336 = arith.mulf %335, %110 : vector<16x32xf32>
    %337 = vector.extract_strided_slice %101 {offsets = [22, 0], sizes = [1, 32], strides = [1, 1]} : vector<32x32xf32> to vector<1x32xf32>
    %338 = vector.broadcast %337 : vector<1x32xf32> to vector<16x32xf32>
    %339 = arith.mulf %338, %110 : vector<16x32xf32>
    %340 = tpu.concatenate %336, %339 in 1 : vector<16x32xf32>, vector<16x32xf32> -> vector<16x64xf32>
    %341 = math.exp %340 : vector<16x64xf32>
    %c6 = arith.constant 6 : index
    %c0_92 = arith.constant 0 : index
    %c0_93 = arith.constant 0 : index
    %342 = vector.load %arg11[%c6, %c0_92, %c0_93] : memref<16x16x64xf32, #tpu.memory_space<vmem>>, vector<1x16x64xf32>
    %343 = vector.shape_cast %342 : vector<1x16x64xf32> to vector<16x64xf32>
    %344 = vector.shape_cast %341 : vector<16x64xf32> to vector<1x16x64xf32>
    tpu.vector_store %arg11[%c6, %c0_92, %c0_93], %344 {strides = array<i32>} : memref<16x16x64xf32, #tpu.memory_space<vmem>>, vector<1x16x64xf32>,
    %345 = vector.extract_strided_slice %102 {offsets = [6, 0], sizes = [1, 32], strides = [1, 1]} : vector<32x32xf32> to vector<1x32xf32>
    %346 = vector.extract_strided_slice %104 {offsets = [0, 6], sizes = [16, 1], strides = [1, 1]} : vector<16x32xf32> to vector<16x1xf32>
    %347 = vector.broadcast %345 : vector<1x32xf32> to vector<16x32xf32>
    %348 = vector.broadcast %346 : vector<16x1xf32> to vector<16x32xf32>
    %349 = arith.mulf %347, %348 : vector<16x32xf32>
    %350 = vector.extract_strided_slice %102 {offsets = [22, 0], sizes = [1, 32], strides = [1, 1]} : vector<32x32xf32> to vector<1x32xf32>
    %351 = vector.extract_strided_slice %104 {offsets = [0, 22], sizes = [16, 1], strides = [1, 1]} : vector<16x32xf32> to vector<16x1xf32>
    %352 = vector.broadcast %350 : vector<1x32xf32> to vector<16x32xf32>
    %353 = vector.broadcast %351 : vector<16x1xf32> to vector<16x32xf32>
    %354 = arith.mulf %352, %353 : vector<16x32xf32>
    %355 = tpu.concatenate %349, %354 in 1 : vector<16x32xf32>, vector<16x32xf32> -> vector<16x64xf32>
    %c6_94 = arith.constant 6 : index
    %c0_95 = arith.constant 0 : index
    %c0_96 = arith.constant 0 : index
    %356 = vector.load %arg12[%c6_94, %c0_95, %c0_96] : memref<16x16x64xf32, #tpu.memory_space<vmem>>, vector<1x16x64xf32>
    %357 = vector.shape_cast %356 : vector<1x16x64xf32> to vector<16x64xf32>
    %358 = vector.shape_cast %355 : vector<16x64xf32> to vector<1x16x64xf32>
    tpu.vector_store %arg12[%c6_94, %c0_95, %c0_96], %358 {strides = array<i32>} : memref<16x16x64xf32, #tpu.memory_space<vmem>>, vector<1x16x64xf32>,
    %359 = vector.extract_strided_slice %106 {offsets = [0, 6], sizes = [16, 1], strides = [1, 1]} : vector<16x32xf32> to vector<16x1xf32>
    %360 = vector.broadcast %359 : vector<16x1xf32> to vector<16x32xf32>
    %361 = vector.broadcast %111 : vector<1x32xf32> to vector<16x32xf32>
    %362 = arith.mulf %360, %361 : vector<16x32xf32>
    %363 = vector.extract_strided_slice %106 {offsets = [0, 22], sizes = [16, 1], strides = [1, 1]} : vector<16x32xf32> to vector<16x1xf32>
    %364 = vector.broadcast %363 : vector<16x1xf32> to vector<16x32xf32>
    %365 = vector.broadcast %111 : vector<1x32xf32> to vector<16x32xf32>
    %366 = arith.mulf %364, %365 : vector<16x32xf32>
    %367 = tpu.concatenate %362, %366 in 1 : vector<16x32xf32>, vector<16x32xf32> -> vector<16x64xf32>
    %c6_97 = arith.constant 6 : index
    %c0_98 = arith.constant 0 : index
    %c0_99 = arith.constant 0 : index
    %368 = vector.load %arg13[%c6_97, %c0_98, %c0_99] : memref<16x16x64xf32, #tpu.memory_space<vmem>>, vector<1x16x64xf32>
    %369 = vector.shape_cast %368 : vector<1x16x64xf32> to vector<16x64xf32>
    %370 = vector.shape_cast %367 : vector<16x64xf32> to vector<1x16x64xf32>
    tpu.vector_store %arg13[%c6_97, %c0_98, %c0_99], %370 {strides = array<i32>} : memref<16x16x64xf32, #tpu.memory_space<vmem>>, vector<1x16x64xf32>,
    %371 = vector.extract_strided_slice %101 {offsets = [7, 0], sizes = [1, 32], strides = [1, 1]} : vector<32x32xf32> to vector<1x32xf32>
    %372 = vector.broadcast %371 : vector<1x32xf32> to vector<16x32xf32>
    %373 = arith.mulf %372, %110 : vector<16x32xf32>
    %374 = vector.extract_strided_slice %101 {offsets = [23, 0], sizes = [1, 32], strides = [1, 1]} : vector<32x32xf32> to vector<1x32xf32>
    %375 = vector.broadcast %374 : vector<1x32xf32> to vector<16x32xf32>
    %376 = arith.mulf %375, %110 : vector<16x32xf32>
    %377 = tpu.concatenate %373, %376 in 1 : vector<16x32xf32>, vector<16x32xf32> -> vector<16x64xf32>
    %378 = math.exp %377 : vector<16x64xf32>
    %c7 = arith.constant 7 : index
    %c0_100 = arith.constant 0 : index
    %c0_101 = arith.constant 0 : index
    %379 = vector.load %arg11[%c7, %c0_100, %c0_101] : memref<16x16x64xf32, #tpu.memory_space<vmem>>, vector<1x16x64xf32>
    %380 = vector.shape_cast %379 : vector<1x16x64xf32> to vector<16x64xf32>
    %381 = vector.shape_cast %378 : vector<16x64xf32> to vector<1x16x64xf32>
    tpu.vector_store %arg11[%c7, %c0_100, %c0_101], %381 {strides = array<i32>} : memref<16x16x64xf32, #tpu.memory_space<vmem>>, vector<1x16x64xf32>,
    %382 = vector.extract_strided_slice %102 {offsets = [7, 0], sizes = [1, 32], strides = [1, 1]} : vector<32x32xf32> to vector<1x32xf32>
    %383 = vector.extract_strided_slice %104 {offsets = [0, 7], sizes = [16, 1], strides = [1, 1]} : vector<16x32xf32> to vector<16x1xf32>
    %384 = vector.broadcast %382 : vector<1x32xf32> to vector<16x32xf32>
    %385 = vector.broadcast %383 : vector<16x1xf32> to vector<16x32xf32>
    %386 = arith.mulf %384, %385 : vector<16x32xf32>
    %387 = vector.extract_strided_slice %102 {offsets = [23, 0], sizes = [1, 32], strides = [1, 1]} : vector<32x32xf32> to vector<1x32xf32>
    %388 = vector.extract_strided_slice %104 {offsets = [0, 23], sizes = [16, 1], strides = [1, 1]} : vector<16x32xf32> to vector<16x1xf32>
    %389 = vector.broadcast %387 : vector<1x32xf32> to vector<16x32xf32>
    %390 = vector.broadcast %388 : vector<16x1xf32> to vector<16x32xf32>
    %391 = arith.mulf %389, %390 : vector<16x32xf32>
    %392 = tpu.concatenate %386, %391 in 1 : vector<16x32xf32>, vector<16x32xf32> -> vector<16x64xf32>
    %c7_102 = arith.constant 7 : index
    %c0_103 = arith.constant 0 : index
    %c0_104 = arith.constant 0 : index
    %393 = vector.load %arg12[%c7_102, %c0_103, %c0_104] : memref<16x16x64xf32, #tpu.memory_space<vmem>>, vector<1x16x64xf32>
    %394 = vector.shape_cast %393 : vector<1x16x64xf32> to vector<16x64xf32>
    %395 = vector.shape_cast %392 : vector<16x64xf32> to vector<1x16x64xf32>
    tpu.vector_store %arg12[%c7_102, %c0_103, %c0_104], %395 {strides = array<i32>} : memref<16x16x64xf32, #tpu.memory_space<vmem>>, vector<1x16x64xf32>,
    %396 = vector.extract_strided_slice %106 {offsets = [0, 7], sizes = [16, 1], strides = [1, 1]} : vector<16x32xf32> to vector<16x1xf32>
    %397 = vector.broadcast %396 : vector<16x1xf32> to vector<16x32xf32>
    %398 = vector.broadcast %111 : vector<1x32xf32> to vector<16x32xf32>
    %399 = arith.mulf %397, %398 : vector<16x32xf32>
    %400 = vector.extract_strided_slice %106 {offsets = [0, 23], sizes = [16, 1], strides = [1, 1]} : vector<16x32xf32> to vector<16x1xf32>
    %401 = vector.broadcast %400 : vector<16x1xf32> to vector<16x32xf32>
    %402 = vector.broadcast %111 : vector<1x32xf32> to vector<16x32xf32>
    %403 = arith.mulf %401, %402 : vector<16x32xf32>
    %404 = tpu.concatenate %399, %403 in 1 : vector<16x32xf32>, vector<16x32xf32> -> vector<16x64xf32>
    %c7_105 = arith.constant 7 : index
    %c0_106 = arith.constant 0 : index
    %c0_107 = arith.constant 0 : index
    %405 = vector.load %arg13[%c7_105, %c0_106, %c0_107] : memref<16x16x64xf32, #tpu.memory_space<vmem>>, vector<1x16x64xf32>
    %406 = vector.shape_cast %405 : vector<1x16x64xf32> to vector<16x64xf32>
    %407 = vector.shape_cast %404 : vector<16x64xf32> to vector<1x16x64xf32>
    tpu.vector_store %arg13[%c7_105, %c0_106, %c0_107], %407 {strides = array<i32>} : memref<16x16x64xf32, #tpu.memory_space<vmem>>, vector<1x16x64xf32>,
    %408 = vector.extract_strided_slice %101 {offsets = [8, 0], sizes = [1, 32], strides = [1, 1]} : vector<32x32xf32> to vector<1x32xf32>
    %409 = vector.broadcast %408 : vector<1x32xf32> to vector<16x32xf32>
    %410 = arith.mulf %409, %110 : vector<16x32xf32>
    %411 = vector.extract_strided_slice %101 {offsets = [24, 0], sizes = [1, 32], strides = [1, 1]} : vector<32x32xf32> to vector<1x32xf32>
    %412 = vector.broadcast %411 : vector<1x32xf32> to vector<16x32xf32>
    %413 = arith.mulf %412, %110 : vector<16x32xf32>
    %414 = tpu.concatenate %410, %413 in 1 : vector<16x32xf32>, vector<16x32xf32> -> vector<16x64xf32>
    %415 = math.exp %414 : vector<16x64xf32>
    %c8 = arith.constant 8 : index
    %c0_108 = arith.constant 0 : index
    %c0_109 = arith.constant 0 : index
    %416 = vector.load %arg11[%c8, %c0_108, %c0_109] : memref<16x16x64xf32, #tpu.memory_space<vmem>>, vector<1x16x64xf32>
    %417 = vector.shape_cast %416 : vector<1x16x64xf32> to vector<16x64xf32>
    %418 = vector.shape_cast %415 : vector<16x64xf32> to vector<1x16x64xf32>
    tpu.vector_store %arg11[%c8, %c0_108, %c0_109], %418 {strides = array<i32>} : memref<16x16x64xf32, #tpu.memory_space<vmem>>, vector<1x16x64xf32>,
    %419 = vector.extract_strided_slice %102 {offsets = [8, 0], sizes = [1, 32], strides = [1, 1]} : vector<32x32xf32> to vector<1x32xf32>
    %420 = vector.extract_strided_slice %104 {offsets = [0, 8], sizes = [16, 1], strides = [1, 1]} : vector<16x32xf32> to vector<16x1xf32>
    %421 = vector.broadcast %419 : vector<1x32xf32> to vector<16x32xf32>
    %422 = vector.broadcast %420 : vector<16x1xf32> to vector<16x32xf32>
    %423 = arith.mulf %421, %422 : vector<16x32xf32>
    %424 = vector.extract_strided_slice %102 {offsets = [24, 0], sizes = [1, 32], strides = [1, 1]} : vector<32x32xf32> to vector<1x32xf32>
    %425 = vector.extract_strided_slice %104 {offsets = [0, 24], sizes = [16, 1], strides = [1, 1]} : vector<16x32xf32> to vector<16x1xf32>
    %426 = vector.broadcast %424 : vector<1x32xf32> to vector<16x32xf32>
    %427 = vector.broadcast %425 : vector<16x1xf32> to vector<16x32xf32>
    %428 = arith.mulf %426, %427 : vector<16x32xf32>
    %429 = tpu.concatenate %423, %428 in 1 : vector<16x32xf32>, vector<16x32xf32> -> vector<16x64xf32>
    %c8_110 = arith.constant 8 : index
    %c0_111 = arith.constant 0 : index
    %c0_112 = arith.constant 0 : index
    %430 = vector.load %arg12[%c8_110, %c0_111, %c0_112] : memref<16x16x64xf32, #tpu.memory_space<vmem>>, vector<1x16x64xf32>
    %431 = vector.shape_cast %430 : vector<1x16x64xf32> to vector<16x64xf32>
    %432 = vector.shape_cast %429 : vector<16x64xf32> to vector<1x16x64xf32>
    tpu.vector_store %arg12[%c8_110, %c0_111, %c0_112], %432 {strides = array<i32>} : memref<16x16x64xf32, #tpu.memory_space<vmem>>, vector<1x16x64xf32>,
    %433 = vector.extract_strided_slice %106 {offsets = [0, 8], sizes = [16, 1], strides = [1, 1]} : vector<16x32xf32> to vector<16x1xf32>
    %434 = vector.broadcast %433 : vector<16x1xf32> to vector<16x32xf32>
    %435 = vector.broadcast %111 : vector<1x32xf32> to vector<16x32xf32>
    %436 = arith.mulf %434, %435 : vector<16x32xf32>
    %437 = vector.extract_strided_slice %106 {offsets = [0, 24], sizes = [16, 1], strides = [1, 1]} : vector<16x32xf32> to vector<16x1xf32>
    %438 = vector.broadcast %437 : vector<16x1xf32> to vector<16x32xf32>
    %439 = vector.broadcast %111 : vector<1x32xf32> to vector<16x32xf32>
    %440 = arith.mulf %438, %439 : vector<16x32xf32>
    %441 = tpu.concatenate %436, %440 in 1 : vector<16x32xf32>, vector<16x32xf32> -> vector<16x64xf32>
    %c8_113 = arith.constant 8 : index
    %c0_114 = arith.constant 0 : index
    %c0_115 = arith.constant 0 : index
    %442 = vector.load %arg13[%c8_113, %c0_114, %c0_115] : memref<16x16x64xf32, #tpu.memory_space<vmem>>, vector<1x16x64xf32>
    %443 = vector.shape_cast %442 : vector<1x16x64xf32> to vector<16x64xf32>
    %444 = vector.shape_cast %441 : vector<16x64xf32> to vector<1x16x64xf32>
    tpu.vector_store %arg13[%c8_113, %c0_114, %c0_115], %444 {strides = array<i32>} : memref<16x16x64xf32, #tpu.memory_space<vmem>>, vector<1x16x64xf32>,
    %445 = vector.extract_strided_slice %101 {offsets = [9, 0], sizes = [1, 32], strides = [1, 1]} : vector<32x32xf32> to vector<1x32xf32>
    %446 = vector.broadcast %445 : vector<1x32xf32> to vector<16x32xf32>
    %447 = arith.mulf %446, %110 : vector<16x32xf32>
    %448 = vector.extract_strided_slice %101 {offsets = [25, 0], sizes = [1, 32], strides = [1, 1]} : vector<32x32xf32> to vector<1x32xf32>
    %449 = vector.broadcast %448 : vector<1x32xf32> to vector<16x32xf32>
    %450 = arith.mulf %449, %110 : vector<16x32xf32>
    %451 = tpu.concatenate %447, %450 in 1 : vector<16x32xf32>, vector<16x32xf32> -> vector<16x64xf32>
    %452 = math.exp %451 : vector<16x64xf32>
    %c9 = arith.constant 9 : index
    %c0_116 = arith.constant 0 : index
    %c0_117 = arith.constant 0 : index
    %453 = vector.load %arg11[%c9, %c0_116, %c0_117] : memref<16x16x64xf32, #tpu.memory_space<vmem>>, vector<1x16x64xf32>
    %454 = vector.shape_cast %453 : vector<1x16x64xf32> to vector<16x64xf32>
    %455 = vector.shape_cast %452 : vector<16x64xf32> to vector<1x16x64xf32>
    tpu.vector_store %arg11[%c9, %c0_116, %c0_117], %455 {strides = array<i32>} : memref<16x16x64xf32, #tpu.memory_space<vmem>>, vector<1x16x64xf32>,
    %456 = vector.extract_strided_slice %102 {offsets = [9, 0], sizes = [1, 32], strides = [1, 1]} : vector<32x32xf32> to vector<1x32xf32>
    %457 = vector.extract_strided_slice %104 {offsets = [0, 9], sizes = [16, 1], strides = [1, 1]} : vector<16x32xf32> to vector<16x1xf32>
    %458 = vector.broadcast %456 : vector<1x32xf32> to vector<16x32xf32>
    %459 = vector.broadcast %457 : vector<16x1xf32> to vector<16x32xf32>
    %460 = arith.mulf %458, %459 : vector<16x32xf32>
    %461 = vector.extract_strided_slice %102 {offsets = [25, 0], sizes = [1, 32], strides = [1, 1]} : vector<32x32xf32> to vector<1x32xf32>
    %462 = vector.extract_strided_slice %104 {offsets = [0, 25], sizes = [16, 1], strides = [1, 1]} : vector<16x32xf32> to vector<16x1xf32>
    %463 = vector.broadcast %461 : vector<1x32xf32> to vector<16x32xf32>
    %464 = vector.broadcast %462 : vector<16x1xf32> to vector<16x32xf32>
    %465 = arith.mulf %463, %464 : vector<16x32xf32>
    %466 = tpu.concatenate %460, %465 in 1 : vector<16x32xf32>, vector<16x32xf32> -> vector<16x64xf32>
    %c9_118 = arith.constant 9 : index
    %c0_119 = arith.constant 0 : index
    %c0_120 = arith.constant 0 : index
    %467 = vector.load %arg12[%c9_118, %c0_119, %c0_120] : memref<16x16x64xf32, #tpu.memory_space<vmem>>, vector<1x16x64xf32>
    %468 = vector.shape_cast %467 : vector<1x16x64xf32> to vector<16x64xf32>
    %469 = vector.shape_cast %466 : vector<16x64xf32> to vector<1x16x64xf32>
    tpu.vector_store %arg12[%c9_118, %c0_119, %c0_120], %469 {strides = array<i32>} : memref<16x16x64xf32, #tpu.memory_space<vmem>>, vector<1x16x64xf32>,
    %470 = vector.extract_strided_slice %106 {offsets = [0, 9], sizes = [16, 1], strides = [1, 1]} : vector<16x32xf32> to vector<16x1xf32>
    %471 = vector.broadcast %470 : vector<16x1xf32> to vector<16x32xf32>
    %472 = vector.broadcast %111 : vector<1x32xf32> to vector<16x32xf32>
    %473 = arith.mulf %471, %472 : vector<16x32xf32>
    %474 = vector.extract_strided_slice %106 {offsets = [0, 25], sizes = [16, 1], strides = [1, 1]} : vector<16x32xf32> to vector<16x1xf32>
    %475 = vector.broadcast %474 : vector<16x1xf32> to vector<16x32xf32>
    %476 = vector.broadcast %111 : vector<1x32xf32> to vector<16x32xf32>
    %477 = arith.mulf %475, %476 : vector<16x32xf32>
    %478 = tpu.concatenate %473, %477 in 1 : vector<16x32xf32>, vector<16x32xf32> -> vector<16x64xf32>
    %c9_121 = arith.constant 9 : index
    %c0_122 = arith.constant 0 : index
    %c0_123 = arith.constant 0 : index
    %479 = vector.load %arg13[%c9_121, %c0_122, %c0_123] : memref<16x16x64xf32, #tpu.memory_space<vmem>>, vector<1x16x64xf32>
    %480 = vector.shape_cast %479 : vector<1x16x64xf32> to vector<16x64xf32>
    %481 = vector.shape_cast %478 : vector<16x64xf32> to vector<1x16x64xf32>
    tpu.vector_store %arg13[%c9_121, %c0_122, %c0_123], %481 {strides = array<i32>} : memref<16x16x64xf32, #tpu.memory_space<vmem>>, vector<1x16x64xf32>,
    %482 = vector.extract_strided_slice %101 {offsets = [10, 0], sizes = [1, 32], strides = [1, 1]} : vector<32x32xf32> to vector<1x32xf32>
    %483 = vector.broadcast %482 : vector<1x32xf32> to vector<16x32xf32>
    %484 = arith.mulf %483, %110 : vector<16x32xf32>
    %485 = vector.extract_strided_slice %101 {offsets = [26, 0], sizes = [1, 32], strides = [1, 1]} : vector<32x32xf32> to vector<1x32xf32>
    %486 = vector.broadcast %485 : vector<1x32xf32> to vector<16x32xf32>
    %487 = arith.mulf %486, %110 : vector<16x32xf32>
    %488 = tpu.concatenate %484, %487 in 1 : vector<16x32xf32>, vector<16x32xf32> -> vector<16x64xf32>
    %489 = math.exp %488 : vector<16x64xf32>
    %c10 = arith.constant 10 : index
    %c0_124 = arith.constant 0 : index
    %c0_125 = arith.constant 0 : index
    %490 = vector.load %arg11[%c10, %c0_124, %c0_125] : memref<16x16x64xf32, #tpu.memory_space<vmem>>, vector<1x16x64xf32>
    %491 = vector.shape_cast %490 : vector<1x16x64xf32> to vector<16x64xf32>
    %492 = vector.shape_cast %489 : vector<16x64xf32> to vector<1x16x64xf32>
    tpu.vector_store %arg11[%c10, %c0_124, %c0_125], %492 {strides = array<i32>} : memref<16x16x64xf32, #tpu.memory_space<vmem>>, vector<1x16x64xf32>,
    %493 = vector.extract_strided_slice %102 {offsets = [10, 0], sizes = [1, 32], strides = [1, 1]} : vector<32x32xf32> to vector<1x32xf32>
    %494 = vector.extract_strided_slice %104 {offsets = [0, 10], sizes = [16, 1], strides = [1, 1]} : vector<16x32xf32> to vector<16x1xf32>
    %495 = vector.broadcast %493 : vector<1x32xf32> to vector<16x32xf32>
    %496 = vector.broadcast %494 : vector<16x1xf32> to vector<16x32xf32>
    %497 = arith.mulf %495, %496 : vector<16x32xf32>
    %498 = vector.extract_strided_slice %102 {offsets = [26, 0], sizes = [1, 32], strides = [1, 1]} : vector<32x32xf32> to vector<1x32xf32>
    %499 = vector.extract_strided_slice %104 {offsets = [0, 26], sizes = [16, 1], strides = [1, 1]} : vector<16x32xf32> to vector<16x1xf32>
    %500 = vector.broadcast %498 : vector<1x32xf32> to vector<16x32xf32>
    %501 = vector.broadcast %499 : vector<16x1xf32> to vector<16x32xf32>
    %502 = arith.mulf %500, %501 : vector<16x32xf32>
    %503 = tpu.concatenate %497, %502 in 1 : vector<16x32xf32>, vector<16x32xf32> -> vector<16x64xf32>
    %c10_126 = arith.constant 10 : index
    %c0_127 = arith.constant 0 : index
    %c0_128 = arith.constant 0 : index
    %504 = vector.load %arg12[%c10_126, %c0_127, %c0_128] : memref<16x16x64xf32, #tpu.memory_space<vmem>>, vector<1x16x64xf32>
    %505 = vector.shape_cast %504 : vector<1x16x64xf32> to vector<16x64xf32>
    %506 = vector.shape_cast %503 : vector<16x64xf32> to vector<1x16x64xf32>
    tpu.vector_store %arg12[%c10_126, %c0_127, %c0_128], %506 {strides = array<i32>} : memref<16x16x64xf32, #tpu.memory_space<vmem>>, vector<1x16x64xf32>,
    %507 = vector.extract_strided_slice %106 {offsets = [0, 10], sizes = [16, 1], strides = [1, 1]} : vector<16x32xf32> to vector<16x1xf32>
    %508 = vector.broadcast %507 : vector<16x1xf32> to vector<16x32xf32>
    %509 = vector.broadcast %111 : vector<1x32xf32> to vector<16x32xf32>
    %510 = arith.mulf %508, %509 : vector<16x32xf32>
    %511 = vector.extract_strided_slice %106 {offsets = [0, 26], sizes = [16, 1], strides = [1, 1]} : vector<16x32xf32> to vector<16x1xf32>
    %512 = vector.broadcast %511 : vector<16x1xf32> to vector<16x32xf32>
    %513 = vector.broadcast %111 : vector<1x32xf32> to vector<16x32xf32>
    %514 = arith.mulf %512, %513 : vector<16x32xf32>
    %515 = tpu.concatenate %510, %514 in 1 : vector<16x32xf32>, vector<16x32xf32> -> vector<16x64xf32>
    %c10_129 = arith.constant 10 : index
    %c0_130 = arith.constant 0 : index
    %c0_131 = arith.constant 0 : index
    %516 = vector.load %arg13[%c10_129, %c0_130, %c0_131] : memref<16x16x64xf32, #tpu.memory_space<vmem>>, vector<1x16x64xf32>
    %517 = vector.shape_cast %516 : vector<1x16x64xf32> to vector<16x64xf32>
    %518 = vector.shape_cast %515 : vector<16x64xf32> to vector<1x16x64xf32>
    tpu.vector_store %arg13[%c10_129, %c0_130, %c0_131], %518 {strides = array<i32>} : memref<16x16x64xf32, #tpu.memory_space<vmem>>, vector<1x16x64xf32>,
    %519 = vector.extract_strided_slice %101 {offsets = [11, 0], sizes = [1, 32], strides = [1, 1]} : vector<32x32xf32> to vector<1x32xf32>
    %520 = vector.broadcast %519 : vector<1x32xf32> to vector<16x32xf32>
    %521 = arith.mulf %520, %110 : vector<16x32xf32>
    %522 = vector.extract_strided_slice %101 {offsets = [27, 0], sizes = [1, 32], strides = [1, 1]} : vector<32x32xf32> to vector<1x32xf32>
    %523 = vector.broadcast %522 : vector<1x32xf32> to vector<16x32xf32>
    %524 = arith.mulf %523, %110 : vector<16x32xf32>
    %525 = tpu.concatenate %521, %524 in 1 : vector<16x32xf32>, vector<16x32xf32> -> vector<16x64xf32>
    %526 = math.exp %525 : vector<16x64xf32>
    %c11 = arith.constant 11 : index
    %c0_132 = arith.constant 0 : index
    %c0_133 = arith.constant 0 : index
    %527 = vector.load %arg11[%c11, %c0_132, %c0_133] : memref<16x16x64xf32, #tpu.memory_space<vmem>>, vector<1x16x64xf32>
    %528 = vector.shape_cast %527 : vector<1x16x64xf32> to vector<16x64xf32>
    %529 = vector.shape_cast %526 : vector<16x64xf32> to vector<1x16x64xf32>
    tpu.vector_store %arg11[%c11, %c0_132, %c0_133], %529 {strides = array<i32>} : memref<16x16x64xf32, #tpu.memory_space<vmem>>, vector<1x16x64xf32>,
    %530 = vector.extract_strided_slice %102 {offsets = [11, 0], sizes = [1, 32], strides = [1, 1]} : vector<32x32xf32> to vector<1x32xf32>
    %531 = vector.extract_strided_slice %104 {offsets = [0, 11], sizes = [16, 1], strides = [1, 1]} : vector<16x32xf32> to vector<16x1xf32>
    %532 = vector.broadcast %530 : vector<1x32xf32> to vector<16x32xf32>
    %533 = vector.broadcast %531 : vector<16x1xf32> to vector<16x32xf32>
    %534 = arith.mulf %532, %533 : vector<16x32xf32>
    %535 = vector.extract_strided_slice %102 {offsets = [27, 0], sizes = [1, 32], strides = [1, 1]} : vector<32x32xf32> to vector<1x32xf32>
    %536 = vector.extract_strided_slice %104 {offsets = [0, 27], sizes = [16, 1], strides = [1, 1]} : vector<16x32xf32> to vector<16x1xf32>
    %537 = vector.broadcast %535 : vector<1x32xf32> to vector<16x32xf32>
    %538 = vector.broadcast %536 : vector<16x1xf32> to vector<16x32xf32>
    %539 = arith.mulf %537, %538 : vector<16x32xf32>
    %540 = tpu.concatenate %534, %539 in 1 : vector<16x32xf32>, vector<16x32xf32> -> vector<16x64xf32>
    %c11_134 = arith.constant 11 : index
    %c0_135 = arith.constant 0 : index
    %c0_136 = arith.constant 0 : index
    %541 = vector.load %arg12[%c11_134, %c0_135, %c0_136] : memref<16x16x64xf32, #tpu.memory_space<vmem>>, vector<1x16x64xf32>
    %542 = vector.shape_cast %541 : vector<1x16x64xf32> to vector<16x64xf32>
    %543 = vector.shape_cast %540 : vector<16x64xf32> to vector<1x16x64xf32>
    tpu.vector_store %arg12[%c11_134, %c0_135, %c0_136], %543 {strides = array<i32>} : memref<16x16x64xf32, #tpu.memory_space<vmem>>, vector<1x16x64xf32>,
    %544 = vector.extract_strided_slice %106 {offsets = [0, 11], sizes = [16, 1], strides = [1, 1]} : vector<16x32xf32> to vector<16x1xf32>
    %545 = vector.broadcast %544 : vector<16x1xf32> to vector<16x32xf32>
    %546 = vector.broadcast %111 : vector<1x32xf32> to vector<16x32xf32>
    %547 = arith.mulf %545, %546 : vector<16x32xf32>
    %548 = vector.extract_strided_slice %106 {offsets = [0, 27], sizes = [16, 1], strides = [1, 1]} : vector<16x32xf32> to vector<16x1xf32>
    %549 = vector.broadcast %548 : vector<16x1xf32> to vector<16x32xf32>
    %550 = vector.broadcast %111 : vector<1x32xf32> to vector<16x32xf32>
    %551 = arith.mulf %549, %550 : vector<16x32xf32>
    %552 = tpu.concatenate %547, %551 in 1 : vector<16x32xf32>, vector<16x32xf32> -> vector<16x64xf32>
    %c11_137 = arith.constant 11 : index
    %c0_138 = arith.constant 0 : index
    %c0_139 = arith.constant 0 : index
    %553 = vector.load %arg13[%c11_137, %c0_138, %c0_139] : memref<16x16x64xf32, #tpu.memory_space<vmem>>, vector<1x16x64xf32>
    %554 = vector.shape_cast %553 : vector<1x16x64xf32> to vector<16x64xf32>
    %555 = vector.shape_cast %552 : vector<16x64xf32> to vector<1x16x64xf32>
    tpu.vector_store %arg13[%c11_137, %c0_138, %c0_139], %555 {strides = array<i32>} : memref<16x16x64xf32, #tpu.memory_space<vmem>>, vector<1x16x64xf32>,
    %556 = vector.extract_strided_slice %101 {offsets = [12, 0], sizes = [1, 32], strides = [1, 1]} : vector<32x32xf32> to vector<1x32xf32>
    %557 = vector.broadcast %556 : vector<1x32xf32> to vector<16x32xf32>
    %558 = arith.mulf %557, %110 : vector<16x32xf32>
    %559 = vector.extract_strided_slice %101 {offsets = [28, 0], sizes = [1, 32], strides = [1, 1]} : vector<32x32xf32> to vector<1x32xf32>
    %560 = vector.broadcast %559 : vector<1x32xf32> to vector<16x32xf32>
    %561 = arith.mulf %560, %110 : vector<16x32xf32>
    %562 = tpu.concatenate %558, %561 in 1 : vector<16x32xf32>, vector<16x32xf32> -> vector<16x64xf32>
    %563 = math.exp %562 : vector<16x64xf32>
    %c12 = arith.constant 12 : index
    %c0_140 = arith.constant 0 : index
    %c0_141 = arith.constant 0 : index
    %564 = vector.load %arg11[%c12, %c0_140, %c0_141] : memref<16x16x64xf32, #tpu.memory_space<vmem>>, vector<1x16x64xf32>
    %565 = vector.shape_cast %564 : vector<1x16x64xf32> to vector<16x64xf32>
    %566 = vector.shape_cast %563 : vector<16x64xf32> to vector<1x16x64xf32>
    tpu.vector_store %arg11[%c12, %c0_140, %c0_141], %566 {strides = array<i32>} : memref<16x16x64xf32, #tpu.memory_space<vmem>>, vector<1x16x64xf32>,
    %567 = vector.extract_strided_slice %102 {offsets = [12, 0], sizes = [1, 32], strides = [1, 1]} : vector<32x32xf32> to vector<1x32xf32>
    %568 = vector.extract_strided_slice %104 {offsets = [0, 12], sizes = [16, 1], strides = [1, 1]} : vector<16x32xf32> to vector<16x1xf32>
    %569 = vector.broadcast %567 : vector<1x32xf32> to vector<16x32xf32>
    %570 = vector.broadcast %568 : vector<16x1xf32> to vector<16x32xf32>
    %571 = arith.mulf %569, %570 : vector<16x32xf32>
    %572 = vector.extract_strided_slice %102 {offsets = [28, 0], sizes = [1, 32], strides = [1, 1]} : vector<32x32xf32> to vector<1x32xf32>
    %573 = vector.extract_strided_slice %104 {offsets = [0, 28], sizes = [16, 1], strides = [1, 1]} : vector<16x32xf32> to vector<16x1xf32>
    %574 = vector.broadcast %572 : vector<1x32xf32> to vector<16x32xf32>
    %575 = vector.broadcast %573 : vector<16x1xf32> to vector<16x32xf32>
    %576 = arith.mulf %574, %575 : vector<16x32xf32>
    %577 = tpu.concatenate %571, %576 in 1 : vector<16x32xf32>, vector<16x32xf32> -> vector<16x64xf32>
    %c12_142 = arith.constant 12 : index
    %c0_143 = arith.constant 0 : index
    %c0_144 = arith.constant 0 : index
    %578 = vector.load %arg12[%c12_142, %c0_143, %c0_144] : memref<16x16x64xf32, #tpu.memory_space<vmem>>, vector<1x16x64xf32>
    %579 = vector.shape_cast %578 : vector<1x16x64xf32> to vector<16x64xf32>
    %580 = vector.shape_cast %577 : vector<16x64xf32> to vector<1x16x64xf32>
    tpu.vector_store %arg12[%c12_142, %c0_143, %c0_144], %580 {strides = array<i32>} : memref<16x16x64xf32, #tpu.memory_space<vmem>>, vector<1x16x64xf32>,
    %581 = vector.extract_strided_slice %106 {offsets = [0, 12], sizes = [16, 1], strides = [1, 1]} : vector<16x32xf32> to vector<16x1xf32>
    %582 = vector.broadcast %581 : vector<16x1xf32> to vector<16x32xf32>
    %583 = vector.broadcast %111 : vector<1x32xf32> to vector<16x32xf32>
    %584 = arith.mulf %582, %583 : vector<16x32xf32>
    %585 = vector.extract_strided_slice %106 {offsets = [0, 28], sizes = [16, 1], strides = [1, 1]} : vector<16x32xf32> to vector<16x1xf32>
    %586 = vector.broadcast %585 : vector<16x1xf32> to vector<16x32xf32>
    %587 = vector.broadcast %111 : vector<1x32xf32> to vector<16x32xf32>
    %588 = arith.mulf %586, %587 : vector<16x32xf32>
    %589 = tpu.concatenate %584, %588 in 1 : vector<16x32xf32>, vector<16x32xf32> -> vector<16x64xf32>
    %c12_145 = arith.constant 12 : index
    %c0_146 = arith.constant 0 : index
    %c0_147 = arith.constant 0 : index
    %590 = vector.load %arg13[%c12_145, %c0_146, %c0_147] : memref<16x16x64xf32, #tpu.memory_space<vmem>>, vector<1x16x64xf32>
    %591 = vector.shape_cast %590 : vector<1x16x64xf32> to vector<16x64xf32>
    %592 = vector.shape_cast %589 : vector<16x64xf32> to vector<1x16x64xf32>
    tpu.vector_store %arg13[%c12_145, %c0_146, %c0_147], %592 {strides = array<i32>} : memref<16x16x64xf32, #tpu.memory_space<vmem>>, vector<1x16x64xf32>,
    %593 = vector.extract_strided_slice %101 {offsets = [13, 0], sizes = [1, 32], strides = [1, 1]} : vector<32x32xf32> to vector<1x32xf32>
    %594 = vector.broadcast %593 : vector<1x32xf32> to vector<16x32xf32>
    %595 = arith.mulf %594, %110 : vector<16x32xf32>
    %596 = vector.extract_strided_slice %101 {offsets = [29, 0], sizes = [1, 32], strides = [1, 1]} : vector<32x32xf32> to vector<1x32xf32>
    %597 = vector.broadcast %596 : vector<1x32xf32> to vector<16x32xf32>
    %598 = arith.mulf %597, %110 : vector<16x32xf32>
    %599 = tpu.concatenate %595, %598 in 1 : vector<16x32xf32>, vector<16x32xf32> -> vector<16x64xf32>
    %600 = math.exp %599 : vector<16x64xf32>
    %c13 = arith.constant 13 : index
    %c0_148 = arith.constant 0 : index
    %c0_149 = arith.constant 0 : index
    %601 = vector.load %arg11[%c13, %c0_148, %c0_149] : memref<16x16x64xf32, #tpu.memory_space<vmem>>, vector<1x16x64xf32>
    %602 = vector.shape_cast %601 : vector<1x16x64xf32> to vector<16x64xf32>
    %603 = vector.shape_cast %600 : vector<16x64xf32> to vector<1x16x64xf32>
    tpu.vector_store %arg11[%c13, %c0_148, %c0_149], %603 {strides = array<i32>} : memref<16x16x64xf32, #tpu.memory_space<vmem>>, vector<1x16x64xf32>,
    %604 = vector.extract_strided_slice %102 {offsets = [13, 0], sizes = [1, 32], strides = [1, 1]} : vector<32x32xf32> to vector<1x32xf32>
    %605 = vector.extract_strided_slice %104 {offsets = [0, 13], sizes = [16, 1], strides = [1, 1]} : vector<16x32xf32> to vector<16x1xf32>
    %606 = vector.broadcast %604 : vector<1x32xf32> to vector<16x32xf32>
    %607 = vector.broadcast %605 : vector<16x1xf32> to vector<16x32xf32>
    %608 = arith.mulf %606, %607 : vector<16x32xf32>
    %609 = vector.extract_strided_slice %102 {offsets = [29, 0], sizes = [1, 32], strides = [1, 1]} : vector<32x32xf32> to vector<1x32xf32>
    %610 = vector.extract_strided_slice %104 {offsets = [0, 29], sizes = [16, 1], strides = [1, 1]} : vector<16x32xf32> to vector<16x1xf32>
    %611 = vector.broadcast %609 : vector<1x32xf32> to vector<16x32xf32>
    %612 = vector.broadcast %610 : vector<16x1xf32> to vector<16x32xf32>
    %613 = arith.mulf %611, %612 : vector<16x32xf32>
    %614 = tpu.concatenate %608, %613 in 1 : vector<16x32xf32>, vector<16x32xf32> -> vector<16x64xf32>
    %c13_150 = arith.constant 13 : index
    %c0_151 = arith.constant 0 : index
    %c0_152 = arith.constant 0 : index
    %615 = vector.load %arg12[%c13_150, %c0_151, %c0_152] : memref<16x16x64xf32, #tpu.memory_space<vmem>>, vector<1x16x64xf32>
    %616 = vector.shape_cast %615 : vector<1x16x64xf32> to vector<16x64xf32>
    %617 = vector.shape_cast %614 : vector<16x64xf32> to vector<1x16x64xf32>
    tpu.vector_store %arg12[%c13_150, %c0_151, %c0_152], %617 {strides = array<i32>} : memref<16x16x64xf32, #tpu.memory_space<vmem>>, vector<1x16x64xf32>,
    %618 = vector.extract_strided_slice %106 {offsets = [0, 13], sizes = [16, 1], strides = [1, 1]} : vector<16x32xf32> to vector<16x1xf32>
    %619 = vector.broadcast %618 : vector<16x1xf32> to vector<16x32xf32>
    %620 = vector.broadcast %111 : vector<1x32xf32> to vector<16x32xf32>
    %621 = arith.mulf %619, %620 : vector<16x32xf32>
    %622 = vector.extract_strided_slice %106 {offsets = [0, 29], sizes = [16, 1], strides = [1, 1]} : vector<16x32xf32> to vector<16x1xf32>
    %623 = vector.broadcast %622 : vector<16x1xf32> to vector<16x32xf32>
    %624 = vector.broadcast %111 : vector<1x32xf32> to vector<16x32xf32>
    %625 = arith.mulf %623, %624 : vector<16x32xf32>
    %626 = tpu.concatenate %621, %625 in 1 : vector<16x32xf32>, vector<16x32xf32> -> vector<16x64xf32>
    %c13_153 = arith.constant 13 : index
    %c0_154 = arith.constant 0 : index
    %c0_155 = arith.constant 0 : index
    %627 = vector.load %arg13[%c13_153, %c0_154, %c0_155] : memref<16x16x64xf32, #tpu.memory_space<vmem>>, vector<1x16x64xf32>
    %628 = vector.shape_cast %627 : vector<1x16x64xf32> to vector<16x64xf32>
    %629 = vector.shape_cast %626 : vector<16x64xf32> to vector<1x16x64xf32>
    tpu.vector_store %arg13[%c13_153, %c0_154, %c0_155], %629 {strides = array<i32>} : memref<16x16x64xf32, #tpu.memory_space<vmem>>, vector<1x16x64xf32>,
    %630 = vector.extract_strided_slice %101 {offsets = [14, 0], sizes = [1, 32], strides = [1, 1]} : vector<32x32xf32> to vector<1x32xf32>
    %631 = vector.broadcast %630 : vector<1x32xf32> to vector<16x32xf32>
    %632 = arith.mulf %631, %110 : vector<16x32xf32>
    %633 = vector.extract_strided_slice %101 {offsets = [30, 0], sizes = [1, 32], strides = [1, 1]} : vector<32x32xf32> to vector<1x32xf32>
    %634 = vector.broadcast %633 : vector<1x32xf32> to vector<16x32xf32>
    %635 = arith.mulf %634, %110 : vector<16x32xf32>
    %636 = tpu.concatenate %632, %635 in 1 : vector<16x32xf32>, vector<16x32xf32> -> vector<16x64xf32>
    %637 = math.exp %636 : vector<16x64xf32>
    %c14 = arith.constant 14 : index
    %c0_156 = arith.constant 0 : index
    %c0_157 = arith.constant 0 : index
    %638 = vector.load %arg11[%c14, %c0_156, %c0_157] : memref<16x16x64xf32, #tpu.memory_space<vmem>>, vector<1x16x64xf32>
    %639 = vector.shape_cast %638 : vector<1x16x64xf32> to vector<16x64xf32>
    %640 = vector.shape_cast %637 : vector<16x64xf32> to vector<1x16x64xf32>
    tpu.vector_store %arg11[%c14, %c0_156, %c0_157], %640 {strides = array<i32>} : memref<16x16x64xf32, #tpu.memory_space<vmem>>, vector<1x16x64xf32>,
    %641 = vector.extract_strided_slice %102 {offsets = [14, 0], sizes = [1, 32], strides = [1, 1]} : vector<32x32xf32> to vector<1x32xf32>
    %642 = vector.extract_strided_slice %104 {offsets = [0, 14], sizes = [16, 1], strides = [1, 1]} : vector<16x32xf32> to vector<16x1xf32>
    %643 = vector.broadcast %641 : vector<1x32xf32> to vector<16x32xf32>
    %644 = vector.broadcast %642 : vector<16x1xf32> to vector<16x32xf32>
    %645 = arith.mulf %643, %644 : vector<16x32xf32>
    %646 = vector.extract_strided_slice %102 {offsets = [30, 0], sizes = [1, 32], strides = [1, 1]} : vector<32x32xf32> to vector<1x32xf32>
    %647 = vector.extract_strided_slice %104 {offsets = [0, 30], sizes = [16, 1], strides = [1, 1]} : vector<16x32xf32> to vector<16x1xf32>
    %648 = vector.broadcast %646 : vector<1x32xf32> to vector<16x32xf32>
    %649 = vector.broadcast %647 : vector<16x1xf32> to vector<16x32xf32>
    %650 = arith.mulf %648, %649 : vector<16x32xf32>
    %651 = tpu.concatenate %645, %650 in 1 : vector<16x32xf32>, vector<16x32xf32> -> vector<16x64xf32>
    %c14_158 = arith.constant 14 : index
    %c0_159 = arith.constant 0 : index
    %c0_160 = arith.constant 0 : index
    %652 = vector.load %arg12[%c14_158, %c0_159, %c0_160] : memref<16x16x64xf32, #tpu.memory_space<vmem>>, vector<1x16x64xf32>
    %653 = vector.shape_cast %652 : vector<1x16x64xf32> to vector<16x64xf32>
    %654 = vector.shape_cast %651 : vector<16x64xf32> to vector<1x16x64xf32>
    tpu.vector_store %arg12[%c14_158, %c0_159, %c0_160], %654 {strides = array<i32>} : memref<16x16x64xf32, #tpu.memory_space<vmem>>, vector<1x16x64xf32>,
    %655 = vector.extract_strided_slice %106 {offsets = [0, 14], sizes = [16, 1], strides = [1, 1]} : vector<16x32xf32> to vector<16x1xf32>
    %656 = vector.broadcast %655 : vector<16x1xf32> to vector<16x32xf32>
    %657 = vector.broadcast %111 : vector<1x32xf32> to vector<16x32xf32>
    %658 = arith.mulf %656, %657 : vector<16x32xf32>
    %659 = vector.extract_strided_slice %106 {offsets = [0, 30], sizes = [16, 1], strides = [1, 1]} : vector<16x32xf32> to vector<16x1xf32>
    %660 = vector.broadcast %659 : vector<16x1xf32> to vector<16x32xf32>
    %661 = vector.broadcast %111 : vector<1x32xf32> to vector<16x32xf32>
    %662 = arith.mulf %660, %661 : vector<16x32xf32>
    %663 = tpu.concatenate %658, %662 in 1 : vector<16x32xf32>, vector<16x32xf32> -> vector<16x64xf32>
    %c14_161 = arith.constant 14 : index
    %c0_162 = arith.constant 0 : index
    %c0_163 = arith.constant 0 : index
    %664 = vector.load %arg13[%c14_161, %c0_162, %c0_163] : memref<16x16x64xf32, #tpu.memory_space<vmem>>, vector<1x16x64xf32>
    %665 = vector.shape_cast %664 : vector<1x16x64xf32> to vector<16x64xf32>
    %666 = vector.shape_cast %663 : vector<16x64xf32> to vector<1x16x64xf32>
    tpu.vector_store %arg13[%c14_161, %c0_162, %c0_163], %666 {strides = array<i32>} : memref<16x16x64xf32, #tpu.memory_space<vmem>>, vector<1x16x64xf32>,
    %667 = vector.extract_strided_slice %101 {offsets = [15, 0], sizes = [1, 32], strides = [1, 1]} : vector<32x32xf32> to vector<1x32xf32>
    %668 = vector.broadcast %667 : vector<1x32xf32> to vector<16x32xf32>
    %669 = arith.mulf %668, %110 : vector<16x32xf32>
    %670 = vector.extract_strided_slice %101 {offsets = [31, 0], sizes = [1, 32], strides = [1, 1]} : vector<32x32xf32> to vector<1x32xf32>
    %671 = vector.broadcast %670 : vector<1x32xf32> to vector<16x32xf32>
    %672 = arith.mulf %671, %110 : vector<16x32xf32>
    %673 = tpu.concatenate %669, %672 in 1 : vector<16x32xf32>, vector<16x32xf32> -> vector<16x64xf32>
    %674 = math.exp %673 : vector<16x64xf32>
    %c15 = arith.constant 15 : index
    %c0_164 = arith.constant 0 : index
    %c0_165 = arith.constant 0 : index
    %675 = vector.load %arg11[%c15, %c0_164, %c0_165] : memref<16x16x64xf32, #tpu.memory_space<vmem>>, vector<1x16x64xf32>
    %676 = vector.shape_cast %675 : vector<1x16x64xf32> to vector<16x64xf32>
    %677 = vector.shape_cast %674 : vector<16x64xf32> to vector<1x16x64xf32>
    tpu.vector_store %arg11[%c15, %c0_164, %c0_165], %677 {strides = array<i32>} : memref<16x16x64xf32, #tpu.memory_space<vmem>>, vector<1x16x64xf32>,
    %678 = vector.extract_strided_slice %102 {offsets = [15, 0], sizes = [1, 32], strides = [1, 1]} : vector<32x32xf32> to vector<1x32xf32>
    %679 = vector.extract_strided_slice %104 {offsets = [0, 15], sizes = [16, 1], strides = [1, 1]} : vector<16x32xf32> to vector<16x1xf32>
    %680 = vector.broadcast %678 : vector<1x32xf32> to vector<16x32xf32>
    %681 = vector.broadcast %679 : vector<16x1xf32> to vector<16x32xf32>
    %682 = arith.mulf %680, %681 : vector<16x32xf32>
    %683 = vector.extract_strided_slice %102 {offsets = [31, 0], sizes = [1, 32], strides = [1, 1]} : vector<32x32xf32> to vector<1x32xf32>
    %684 = vector.extract_strided_slice %104 {offsets = [0, 31], sizes = [16, 1], strides = [1, 1]} : vector<16x32xf32> to vector<16x1xf32>
    %685 = vector.broadcast %683 : vector<1x32xf32> to vector<16x32xf32>
    %686 = vector.broadcast %684 : vector<16x1xf32> to vector<16x32xf32>
    %687 = arith.mulf %685, %686 : vector<16x32xf32>
    %688 = tpu.concatenate %682, %687 in 1 : vector<16x32xf32>, vector<16x32xf32> -> vector<16x64xf32>
    %c15_166 = arith.constant 15 : index
    %c0_167 = arith.constant 0 : index
    %c0_168 = arith.constant 0 : index
    %689 = vector.load %arg12[%c15_166, %c0_167, %c0_168] : memref<16x16x64xf32, #tpu.memory_space<vmem>>, vector<1x16x64xf32>
    %690 = vector.shape_cast %689 : vector<1x16x64xf32> to vector<16x64xf32>
    %691 = vector.shape_cast %688 : vector<16x64xf32> to vector<1x16x64xf32>
    tpu.vector_store %arg12[%c15_166, %c0_167, %c0_168], %691 {strides = array<i32>} : memref<16x16x64xf32, #tpu.memory_space<vmem>>, vector<1x16x64xf32>,
    %692 = vector.extract_strided_slice %106 {offsets = [0, 15], sizes = [16, 1], strides = [1, 1]} : vector<16x32xf32> to vector<16x1xf32>
    %693 = vector.broadcast %692 : vector<16x1xf32> to vector<16x32xf32>
    %694 = vector.broadcast %111 : vector<1x32xf32> to vector<16x32xf32>
    %695 = arith.mulf %693, %694 : vector<16x32xf32>
    %696 = vector.extract_strided_slice %106 {offsets = [0, 31], sizes = [16, 1], strides = [1, 1]} : vector<16x32xf32> to vector<16x1xf32>
    %697 = vector.broadcast %696 : vector<16x1xf32> to vector<16x32xf32>
    %698 = vector.broadcast %111 : vector<1x32xf32> to vector<16x32xf32>
    %699 = arith.mulf %697, %698 : vector<16x32xf32>
    %700 = tpu.concatenate %695, %699 in 1 : vector<16x32xf32>, vector<16x32xf32> -> vector<16x64xf32>
    %c15_169 = arith.constant 15 : index
    %c0_170 = arith.constant 0 : index
    %c0_171 = arith.constant 0 : index
    %701 = vector.load %arg13[%c15_169, %c0_170, %c0_171] : memref<16x16x64xf32, #tpu.memory_space<vmem>>, vector<1x16x64xf32>
    %702 = vector.shape_cast %701 : vector<1x16x64xf32> to vector<16x64xf32>
    %703 = vector.shape_cast %700 : vector<16x64xf32> to vector<1x16x64xf32>
    tpu.vector_store %arg13[%c15_169, %c0_170, %c0_171], %703 {strides = array<i32>} : memref<16x16x64xf32, #tpu.memory_space<vmem>>, vector<1x16x64xf32>,
    %cst_172 = arith.constant 0.000000e+00 : f32
    %704 = vector.broadcast %cst_172 : f32 to vector<16x64xf32>
    %c0_173 = arith.constant 0 : index
    %c0_174 = arith.constant 0 : index
    %c0_175 = arith.constant 0 : index
    %705 = vector.load %arg11[%c0_173, %c0_174, %c0_175] : memref<16x16x64xf32, #tpu.memory_space<vmem>>, vector<1x16x64xf32>
    %706 = vector.shape_cast %705 : vector<1x16x64xf32> to vector<16x64xf32>
    %707 = arith.mulf %706, %704 : vector<16x64xf32>
    %c0_176 = arith.constant 0 : index
    %c0_177 = arith.constant 0 : index
    %c0_178 = arith.constant 0 : index
    %708 = vector.load %arg12[%c0_176, %c0_177, %c0_178] : memref<16x16x64xf32, #tpu.memory_space<vmem>>, vector<1x16x64xf32>
    %709 = vector.shape_cast %708 : vector<1x16x64xf32> to vector<16x64xf32>
    %710 = arith.addf %707, %709 : vector<16x64xf32>
    %c0_179 = arith.constant 0 : index
    %c0_180 = arith.constant 0 : index
    %c0_181 = arith.constant 0 : index
    %711 = vector.load %arg13[%c0_179, %c0_180, %c0_181] : memref<16x16x64xf32, #tpu.memory_space<vmem>>, vector<1x16x64xf32>
    %712 = vector.shape_cast %711 : vector<1x16x64xf32> to vector<16x64xf32>
    %713 = arith.mulf %712, %710 : vector<16x64xf32>
    %cst_182 = arith.constant dense<0.000000e+00> : vector<64xf32>
    %714 = vector.multi_reduction <add>, %713, %cst_182 [0] : vector<16x64xf32> to vector<64xf32>
    %715 = vector.shape_cast %714 : vector<64xf32> to vector<1x64xf32>
    %c1_183 = arith.constant 1 : index
    %c0_184 = arith.constant 0 : index
    %c0_185 = arith.constant 0 : index
    %716 = vector.load %arg11[%c1_183, %c0_184, %c0_185] : memref<16x16x64xf32, #tpu.memory_space<vmem>>, vector<1x16x64xf32>
    %717 = vector.shape_cast %716 : vector<1x16x64xf32> to vector<16x64xf32>
    %718 = arith.mulf %717, %710 : vector<16x64xf32>
    %c1_186 = arith.constant 1 : index
    %c0_187 = arith.constant 0 : index
    %c0_188 = arith.constant 0 : index
    %719 = vector.load %arg12[%c1_186, %c0_187, %c0_188] : memref<16x16x64xf32, #tpu.memory_space<vmem>>, vector<1x16x64xf32>
    %720 = vector.shape_cast %719 : vector<1x16x64xf32> to vector<16x64xf32>
    %721 = arith.addf %718, %720 : vector<16x64xf32>
    %c1_189 = arith.constant 1 : index
    %c0_190 = arith.constant 0 : index
    %c0_191 = arith.constant 0 : index
    %722 = vector.load %arg13[%c1_189, %c0_190, %c0_191] : memref<16x16x64xf32, #tpu.memory_space<vmem>>, vector<1x16x64xf32>
    %723 = vector.shape_cast %722 : vector<1x16x64xf32> to vector<16x64xf32>
    %724 = arith.mulf %723, %721 : vector<16x64xf32>
    %cst_192 = arith.constant dense<0.000000e+00> : vector<64xf32>
    %725 = vector.multi_reduction <add>, %724, %cst_192 [0] : vector<16x64xf32> to vector<64xf32>
    %726 = vector.shape_cast %725 : vector<64xf32> to vector<1x64xf32>
    %c2_193 = arith.constant 2 : index
    %c0_194 = arith.constant 0 : index
    %c0_195 = arith.constant 0 : index
    %727 = vector.load %arg11[%c2_193, %c0_194, %c0_195] : memref<16x16x64xf32, #tpu.memory_space<vmem>>, vector<1x16x64xf32>
    %728 = vector.shape_cast %727 : vector<1x16x64xf32> to vector<16x64xf32>
    %729 = arith.mulf %728, %721 : vector<16x64xf32>
    %c2_196 = arith.constant 2 : index
    %c0_197 = arith.constant 0 : index
    %c0_198 = arith.constant 0 : index
    %730 = vector.load %arg12[%c2_196, %c0_197, %c0_198] : memref<16x16x64xf32, #tpu.memory_space<vmem>>, vector<1x16x64xf32>
    %731 = vector.shape_cast %730 : vector<1x16x64xf32> to vector<16x64xf32>
    %732 = arith.addf %729, %731 : vector<16x64xf32>
    %c2_199 = arith.constant 2 : index
    %c0_200 = arith.constant 0 : index
    %c0_201 = arith.constant 0 : index
    %733 = vector.load %arg13[%c2_199, %c0_200, %c0_201] : memref<16x16x64xf32, #tpu.memory_space<vmem>>, vector<1x16x64xf32>
    %734 = vector.shape_cast %733 : vector<1x16x64xf32> to vector<16x64xf32>
    %735 = arith.mulf %734, %732 : vector<16x64xf32>
    %cst_202 = arith.constant dense<0.000000e+00> : vector<64xf32>
    %736 = vector.multi_reduction <add>, %735, %cst_202 [0] : vector<16x64xf32> to vector<64xf32>
    %737 = vector.shape_cast %736 : vector<64xf32> to vector<1x64xf32>
    %c3_203 = arith.constant 3 : index
    %c0_204 = arith.constant 0 : index
    %c0_205 = arith.constant 0 : index
    %738 = vector.load %arg11[%c3_203, %c0_204, %c0_205] : memref<16x16x64xf32, #tpu.memory_space<vmem>>, vector<1x16x64xf32>
    %739 = vector.shape_cast %738 : vector<1x16x64xf32> to vector<16x64xf32>
    %740 = arith.mulf %739, %732 : vector<16x64xf32>
    %c3_206 = arith.constant 3 : index
    %c0_207 = arith.constant 0 : index
    %c0_208 = arith.constant 0 : index
    %741 = vector.load %arg12[%c3_206, %c0_207, %c0_208] : memref<16x16x64xf32, #tpu.memory_space<vmem>>, vector<1x16x64xf32>
    %742 = vector.shape_cast %741 : vector<1x16x64xf32> to vector<16x64xf32>
    %743 = arith.addf %740, %742 : vector<16x64xf32>
    %c3_209 = arith.constant 3 : index
    %c0_210 = arith.constant 0 : index
    %c0_211 = arith.constant 0 : index
    %744 = vector.load %arg13[%c3_209, %c0_210, %c0_211] : memref<16x16x64xf32, #tpu.memory_space<vmem>>, vector<1x16x64xf32>
    %745 = vector.shape_cast %744 : vector<1x16x64xf32> to vector<16x64xf32>
    %746 = arith.mulf %745, %743 : vector<16x64xf32>
    %cst_212 = arith.constant dense<0.000000e+00> : vector<64xf32>
    %747 = vector.multi_reduction <add>, %746, %cst_212 [0] : vector<16x64xf32> to vector<64xf32>
    %748 = vector.shape_cast %747 : vector<64xf32> to vector<1x64xf32>
    %c4_213 = arith.constant 4 : index
    %c0_214 = arith.constant 0 : index
    %c0_215 = arith.constant 0 : index
    %749 = vector.load %arg11[%c4_213, %c0_214, %c0_215] : memref<16x16x64xf32, #tpu.memory_space<vmem>>, vector<1x16x64xf32>
    %750 = vector.shape_cast %749 : vector<1x16x64xf32> to vector<16x64xf32>
    %751 = arith.mulf %750, %743 : vector<16x64xf32>
    %c4_216 = arith.constant 4 : index
    %c0_217 = arith.constant 0 : index
    %c0_218 = arith.constant 0 : index
    %752 = vector.load %arg12[%c4_216, %c0_217, %c0_218] : memref<16x16x64xf32, #tpu.memory_space<vmem>>, vector<1x16x64xf32>
    %753 = vector.shape_cast %752 : vector<1x16x64xf32> to vector<16x64xf32>
    %754 = arith.addf %751, %753 : vector<16x64xf32>
    %c4_219 = arith.constant 4 : index
    %c0_220 = arith.constant 0 : index
    %c0_221 = arith.constant 0 : index
    %755 = vector.load %arg13[%c4_219, %c0_220, %c0_221] : memref<16x16x64xf32, #tpu.memory_space<vmem>>, vector<1x16x64xf32>
    %756 = vector.shape_cast %755 : vector<1x16x64xf32> to vector<16x64xf32>
    %757 = arith.mulf %756, %754 : vector<16x64xf32>
    %cst_222 = arith.constant dense<0.000000e+00> : vector<64xf32>
    %758 = vector.multi_reduction <add>, %757, %cst_222 [0] : vector<16x64xf32> to vector<64xf32>
    %759 = vector.shape_cast %758 : vector<64xf32> to vector<1x64xf32>
    %c5_223 = arith.constant 5 : index
    %c0_224 = arith.constant 0 : index
    %c0_225 = arith.constant 0 : index
    %760 = vector.load %arg11[%c5_223, %c0_224, %c0_225] : memref<16x16x64xf32, #tpu.memory_space<vmem>>, vector<1x16x64xf32>
    %761 = vector.shape_cast %760 : vector<1x16x64xf32> to vector<16x64xf32>
    %762 = arith.mulf %761, %754 : vector<16x64xf32>
    %c5_226 = arith.constant 5 : index
    %c0_227 = arith.constant 0 : index
    %c0_228 = arith.constant 0 : index
    %763 = vector.load %arg12[%c5_226, %c0_227, %c0_228] : memref<16x16x64xf32, #tpu.memory_space<vmem>>, vector<1x16x64xf32>
    %764 = vector.shape_cast %763 : vector<1x16x64xf32> to vector<16x64xf32>
    %765 = arith.addf %762, %764 : vector<16x64xf32>
    %c5_229 = arith.constant 5 : index
    %c0_230 = arith.constant 0 : index
    %c0_231 = arith.constant 0 : index
    %766 = vector.load %arg13[%c5_229, %c0_230, %c0_231] : memref<16x16x64xf32, #tpu.memory_space<vmem>>, vector<1x16x64xf32>
    %767 = vector.shape_cast %766 : vector<1x16x64xf32> to vector<16x64xf32>
    %768 = arith.mulf %767, %765 : vector<16x64xf32>
    %cst_232 = arith.constant dense<0.000000e+00> : vector<64xf32>
    %769 = vector.multi_reduction <add>, %768, %cst_232 [0] : vector<16x64xf32> to vector<64xf32>
    %770 = vector.shape_cast %769 : vector<64xf32> to vector<1x64xf32>
    %c6_233 = arith.constant 6 : index
    %c0_234 = arith.constant 0 : index
    %c0_235 = arith.constant 0 : index
    %771 = vector.load %arg11[%c6_233, %c0_234, %c0_235] : memref<16x16x64xf32, #tpu.memory_space<vmem>>, vector<1x16x64xf32>
    %772 = vector.shape_cast %771 : vector<1x16x64xf32> to vector<16x64xf32>
    %773 = arith.mulf %772, %765 : vector<16x64xf32>
    %c6_236 = arith.constant 6 : index
    %c0_237 = arith.constant 0 : index
    %c0_238 = arith.constant 0 : index
    %774 = vector.load %arg12[%c6_236, %c0_237, %c0_238] : memref<16x16x64xf32, #tpu.memory_space<vmem>>, vector<1x16x64xf32>
    %775 = vector.shape_cast %774 : vector<1x16x64xf32> to vector<16x64xf32>
    %776 = arith.addf %773, %775 : vector<16x64xf32>
    %c6_239 = arith.constant 6 : index
    %c0_240 = arith.constant 0 : index
    %c0_241 = arith.constant 0 : index
    %777 = vector.load %arg13[%c6_239, %c0_240, %c0_241] : memref<16x16x64xf32, #tpu.memory_space<vmem>>, vector<1x16x64xf32>
    %778 = vector.shape_cast %777 : vector<1x16x64xf32> to vector<16x64xf32>
    %779 = arith.mulf %778, %776 : vector<16x64xf32>
    %cst_242 = arith.constant dense<0.000000e+00> : vector<64xf32>
    %780 = vector.multi_reduction <add>, %779, %cst_242 [0] : vector<16x64xf32> to vector<64xf32>
    %781 = vector.shape_cast %780 : vector<64xf32> to vector<1x64xf32>
    %c7_243 = arith.constant 7 : index
    %c0_244 = arith.constant 0 : index
    %c0_245 = arith.constant 0 : index
    %782 = vector.load %arg11[%c7_243, %c0_244, %c0_245] : memref<16x16x64xf32, #tpu.memory_space<vmem>>, vector<1x16x64xf32>
    %783 = vector.shape_cast %782 : vector<1x16x64xf32> to vector<16x64xf32>
    %784 = arith.mulf %783, %776 : vector<16x64xf32>
    %c7_246 = arith.constant 7 : index
    %c0_247 = arith.constant 0 : index
    %c0_248 = arith.constant 0 : index
    %785 = vector.load %arg12[%c7_246, %c0_247, %c0_248] : memref<16x16x64xf32, #tpu.memory_space<vmem>>, vector<1x16x64xf32>
    %786 = vector.shape_cast %785 : vector<1x16x64xf32> to vector<16x64xf32>
    %787 = arith.addf %784, %786 : vector<16x64xf32>
    %c7_249 = arith.constant 7 : index
    %c0_250 = arith.constant 0 : index
    %c0_251 = arith.constant 0 : index
    %788 = vector.load %arg13[%c7_249, %c0_250, %c0_251] : memref<16x16x64xf32, #tpu.memory_space<vmem>>, vector<1x16x64xf32>
    %789 = vector.shape_cast %788 : vector<1x16x64xf32> to vector<16x64xf32>
    %790 = arith.mulf %789, %787 : vector<16x64xf32>
    %cst_252 = arith.constant dense<0.000000e+00> : vector<64xf32>
    %791 = vector.multi_reduction <add>, %790, %cst_252 [0] : vector<16x64xf32> to vector<64xf32>
    %792 = vector.shape_cast %791 : vector<64xf32> to vector<1x64xf32>
    %c8_253 = arith.constant 8 : index
    %c0_254 = arith.constant 0 : index
    %c0_255 = arith.constant 0 : index
    %793 = vector.load %arg11[%c8_253, %c0_254, %c0_255] : memref<16x16x64xf32, #tpu.memory_space<vmem>>, vector<1x16x64xf32>
    %794 = vector.shape_cast %793 : vector<1x16x64xf32> to vector<16x64xf32>
    %795 = arith.mulf %794, %787 : vector<16x64xf32>
    %c8_256 = arith.constant 8 : index
    %c0_257 = arith.constant 0 : index
    %c0_258 = arith.constant 0 : index
    %796 = vector.load %arg12[%c8_256, %c0_257, %c0_258] : memref<16x16x64xf32, #tpu.memory_space<vmem>>, vector<1x16x64xf32>
    %797 = vector.shape_cast %796 : vector<1x16x64xf32> to vector<16x64xf32>
    %798 = arith.addf %795, %797 : vector<16x64xf32>
    %c8_259 = arith.constant 8 : index
    %c0_260 = arith.constant 0 : index
    %c0_261 = arith.constant 0 : index
    %799 = vector.load %arg13[%c8_259, %c0_260, %c0_261] : memref<16x16x64xf32, #tpu.memory_space<vmem>>, vector<1x16x64xf32>
    %800 = vector.shape_cast %799 : vector<1x16x64xf32> to vector<16x64xf32>
    %801 = arith.mulf %800, %798 : vector<16x64xf32>
    %cst_262 = arith.constant dense<0.000000e+00> : vector<64xf32>
    %802 = vector.multi_reduction <add>, %801, %cst_262 [0] : vector<16x64xf32> to vector<64xf32>
    %803 = vector.shape_cast %802 : vector<64xf32> to vector<1x64xf32>
    %c9_263 = arith.constant 9 : index
    %c0_264 = arith.constant 0 : index
    %c0_265 = arith.constant 0 : index
    %804 = vector.load %arg11[%c9_263, %c0_264, %c0_265] : memref<16x16x64xf32, #tpu.memory_space<vmem>>, vector<1x16x64xf32>
    %805 = vector.shape_cast %804 : vector<1x16x64xf32> to vector<16x64xf32>
    %806 = arith.mulf %805, %798 : vector<16x64xf32>
    %c9_266 = arith.constant 9 : index
    %c0_267 = arith.constant 0 : index
    %c0_268 = arith.constant 0 : index
    %807 = vector.load %arg12[%c9_266, %c0_267, %c0_268] : memref<16x16x64xf32, #tpu.memory_space<vmem>>, vector<1x16x64xf32>
    %808 = vector.shape_cast %807 : vector<1x16x64xf32> to vector<16x64xf32>
    %809 = arith.addf %806, %808 : vector<16x64xf32>
    %c9_269 = arith.constant 9 : index
    %c0_270 = arith.constant 0 : index
    %c0_271 = arith.constant 0 : index
    %810 = vector.load %arg13[%c9_269, %c0_270, %c0_271] : memref<16x16x64xf32, #tpu.memory_space<vmem>>, vector<1x16x64xf32>
    %811 = vector.shape_cast %810 : vector<1x16x64xf32> to vector<16x64xf32>
    %812 = arith.mulf %811, %809 : vector<16x64xf32>
    %cst_272 = arith.constant dense<0.000000e+00> : vector<64xf32>
    %813 = vector.multi_reduction <add>, %812, %cst_272 [0] : vector<16x64xf32> to vector<64xf32>
    %814 = vector.shape_cast %813 : vector<64xf32> to vector<1x64xf32>
    %c10_273 = arith.constant 10 : index
    %c0_274 = arith.constant 0 : index
    %c0_275 = arith.constant 0 : index
    %815 = vector.load %arg11[%c10_273, %c0_274, %c0_275] : memref<16x16x64xf32, #tpu.memory_space<vmem>>, vector<1x16x64xf32>
    %816 = vector.shape_cast %815 : vector<1x16x64xf32> to vector<16x64xf32>
    %817 = arith.mulf %816, %809 : vector<16x64xf32>
    %c10_276 = arith.constant 10 : index
    %c0_277 = arith.constant 0 : index
    %c0_278 = arith.constant 0 : index
    %818 = vector.load %arg12[%c10_276, %c0_277, %c0_278] : memref<16x16x64xf32, #tpu.memory_space<vmem>>, vector<1x16x64xf32>
    %819 = vector.shape_cast %818 : vector<1x16x64xf32> to vector<16x64xf32>
    %820 = arith.addf %817, %819 : vector<16x64xf32>
    %c10_279 = arith.constant 10 : index
    %c0_280 = arith.constant 0 : index
    %c0_281 = arith.constant 0 : index
    %821 = vector.load %arg13[%c10_279, %c0_280, %c0_281] : memref<16x16x64xf32, #tpu.memory_space<vmem>>, vector<1x16x64xf32>
    %822 = vector.shape_cast %821 : vector<1x16x64xf32> to vector<16x64xf32>
    %823 = arith.mulf %822, %820 : vector<16x64xf32>
    %cst_282 = arith.constant dense<0.000000e+00> : vector<64xf32>
    %824 = vector.multi_reduction <add>, %823, %cst_282 [0] : vector<16x64xf32> to vector<64xf32>
    %825 = vector.shape_cast %824 : vector<64xf32> to vector<1x64xf32>
    %c11_283 = arith.constant 11 : index
    %c0_284 = arith.constant 0 : index
    %c0_285 = arith.constant 0 : index
    %826 = vector.load %arg11[%c11_283, %c0_284, %c0_285] : memref<16x16x64xf32, #tpu.memory_space<vmem>>, vector<1x16x64xf32>
    %827 = vector.shape_cast %826 : vector<1x16x64xf32> to vector<16x64xf32>
    %828 = arith.mulf %827, %820 : vector<16x64xf32>
    %c11_286 = arith.constant 11 : index
    %c0_287 = arith.constant 0 : index
    %c0_288 = arith.constant 0 : index
    %829 = vector.load %arg12[%c11_286, %c0_287, %c0_288] : memref<16x16x64xf32, #tpu.memory_space<vmem>>, vector<1x16x64xf32>
    %830 = vector.shape_cast %829 : vector<1x16x64xf32> to vector<16x64xf32>
    %831 = arith.addf %828, %830 : vector<16x64xf32>
    %c11_289 = arith.constant 11 : index
    %c0_290 = arith.constant 0 : index
    %c0_291 = arith.constant 0 : index
    %832 = vector.load %arg13[%c11_289, %c0_290, %c0_291] : memref<16x16x64xf32, #tpu.memory_space<vmem>>, vector<1x16x64xf32>
    %833 = vector.shape_cast %832 : vector<1x16x64xf32> to vector<16x64xf32>
    %834 = arith.mulf %833, %831 : vector<16x64xf32>
    %cst_292 = arith.constant dense<0.000000e+00> : vector<64xf32>
    %835 = vector.multi_reduction <add>, %834, %cst_292 [0] : vector<16x64xf32> to vector<64xf32>
    %836 = vector.shape_cast %835 : vector<64xf32> to vector<1x64xf32>
    %c12_293 = arith.constant 12 : index
    %c0_294 = arith.constant 0 : index
    %c0_295 = arith.constant 0 : index
    %837 = vector.load %arg11[%c12_293, %c0_294, %c0_295] : memref<16x16x64xf32, #tpu.memory_space<vmem>>, vector<1x16x64xf32>
    %838 = vector.shape_cast %837 : vector<1x16x64xf32> to vector<16x64xf32>
    %839 = arith.mulf %838, %831 : vector<16x64xf32>
    %c12_296 = arith.constant 12 : index
    %c0_297 = arith.constant 0 : index
    %c0_298 = arith.constant 0 : index
    %840 = vector.load %arg12[%c12_296, %c0_297, %c0_298] : memref<16x16x64xf32, #tpu.memory_space<vmem>>, vector<1x16x64xf32>
    %841 = vector.shape_cast %840 : vector<1x16x64xf32> to vector<16x64xf32>
    %842 = arith.addf %839, %841 : vector<16x64xf32>
    %c12_299 = arith.constant 12 : index
    %c0_300 = arith.constant 0 : index
    %c0_301 = arith.constant 0 : index
    %843 = vector.load %arg13[%c12_299, %c0_300, %c0_301] : memref<16x16x64xf32, #tpu.memory_space<vmem>>, vector<1x16x64xf32>
    %844 = vector.shape_cast %843 : vector<1x16x64xf32> to vector<16x64xf32>
    %845 = arith.mulf %844, %842 : vector<16x64xf32>
    %cst_302 = arith.constant dense<0.000000e+00> : vector<64xf32>
    %846 = vector.multi_reduction <add>, %845, %cst_302 [0] : vector<16x64xf32> to vector<64xf32>
    %847 = vector.shape_cast %846 : vector<64xf32> to vector<1x64xf32>
    %c13_303 = arith.constant 13 : index
    %c0_304 = arith.constant 0 : index
    %c0_305 = arith.constant 0 : index
    %848 = vector.load %arg11[%c13_303, %c0_304, %c0_305] : memref<16x16x64xf32, #tpu.memory_space<vmem>>, vector<1x16x64xf32>
    %849 = vector.shape_cast %848 : vector<1x16x64xf32> to vector<16x64xf32>
    %850 = arith.mulf %849, %842 : vector<16x64xf32>
    %c13_306 = arith.constant 13 : index
    %c0_307 = arith.constant 0 : index
    %c0_308 = arith.constant 0 : index
    %851 = vector.load %arg12[%c13_306, %c0_307, %c0_308] : memref<16x16x64xf32, #tpu.memory_space<vmem>>, vector<1x16x64xf32>
    %852 = vector.shape_cast %851 : vector<1x16x64xf32> to vector<16x64xf32>
    %853 = arith.addf %850, %852 : vector<16x64xf32>
    %c13_309 = arith.constant 13 : index
    %c0_310 = arith.constant 0 : index
    %c0_311 = arith.constant 0 : index
    %854 = vector.load %arg13[%c13_309, %c0_310, %c0_311] : memref<16x16x64xf32, #tpu.memory_space<vmem>>, vector<1x16x64xf32>
    %855 = vector.shape_cast %854 : vector<1x16x64xf32> to vector<16x64xf32>
    %856 = arith.mulf %855, %853 : vector<16x64xf32>
    %cst_312 = arith.constant dense<0.000000e+00> : vector<64xf32>
    %857 = vector.multi_reduction <add>, %856, %cst_312 [0] : vector<16x64xf32> to vector<64xf32>
    %858 = vector.shape_cast %857 : vector<64xf32> to vector<1x64xf32>
    %c14_313 = arith.constant 14 : index
    %c0_314 = arith.constant 0 : index
    %c0_315 = arith.constant 0 : index
    %859 = vector.load %arg11[%c14_313, %c0_314, %c0_315] : memref<16x16x64xf32, #tpu.memory_space<vmem>>, vector<1x16x64xf32>
    %860 = vector.shape_cast %859 : vector<1x16x64xf32> to vector<16x64xf32>
    %861 = arith.mulf %860, %853 : vector<16x64xf32>
    %c14_316 = arith.constant 14 : index
    %c0_317 = arith.constant 0 : index
    %c0_318 = arith.constant 0 : index
    %862 = vector.load %arg12[%c14_316, %c0_317, %c0_318] : memref<16x16x64xf32, #tpu.memory_space<vmem>>, vector<1x16x64xf32>
    %863 = vector.shape_cast %862 : vector<1x16x64xf32> to vector<16x64xf32>
    %864 = arith.addf %861, %863 : vector<16x64xf32>
    %c14_319 = arith.constant 14 : index
    %c0_320 = arith.constant 0 : index
    %c0_321 = arith.constant 0 : index
    %865 = vector.load %arg13[%c14_319, %c0_320, %c0_321] : memref<16x16x64xf32, #tpu.memory_space<vmem>>, vector<1x16x64xf32>
    %866 = vector.shape_cast %865 : vector<1x16x64xf32> to vector<16x64xf32>
    %867 = arith.mulf %866, %864 : vector<16x64xf32>
    %cst_322 = arith.constant dense<0.000000e+00> : vector<64xf32>
    %868 = vector.multi_reduction <add>, %867, %cst_322 [0] : vector<16x64xf32> to vector<64xf32>
    %869 = vector.shape_cast %868 : vector<64xf32> to vector<1x64xf32>
    %c15_323 = arith.constant 15 : index
    %c0_324 = arith.constant 0 : index
    %c0_325 = arith.constant 0 : index
    %870 = vector.load %arg11[%c15_323, %c0_324, %c0_325] : memref<16x16x64xf32, #tpu.memory_space<vmem>>, vector<1x16x64xf32>
    %871 = vector.shape_cast %870 : vector<1x16x64xf32> to vector<16x64xf32>
    %872 = arith.mulf %871, %864 : vector<16x64xf32>
    %c15_326 = arith.constant 15 : index
    %c0_327 = arith.constant 0 : index
    %c0_328 = arith.constant 0 : index
    %873 = vector.load %arg12[%c15_326, %c0_327, %c0_328] : memref<16x16x64xf32, #tpu.memory_space<vmem>>, vector<1x16x64xf32>
    %874 = vector.shape_cast %873 : vector<1x16x64xf32> to vector<16x64xf32>
    %875 = arith.addf %872, %874 : vector<16x64xf32>
    %c15_329 = arith.constant 15 : index
    %c0_330 = arith.constant 0 : index
    %c0_331 = arith.constant 0 : index
    %876 = vector.load %arg13[%c15_329, %c0_330, %c0_331] : memref<16x16x64xf32, #tpu.memory_space<vmem>>, vector<1x16x64xf32>
    %877 = vector.shape_cast %876 : vector<1x16x64xf32> to vector<16x64xf32>
    %878 = arith.mulf %877, %875 : vector<16x64xf32>
    %cst_332 = arith.constant dense<0.000000e+00> : vector<64xf32>
    %879 = vector.multi_reduction <add>, %878, %cst_332 [0] : vector<16x64xf32> to vector<64xf32>
    %880 = vector.shape_cast %879 : vector<64xf32> to vector<1x64xf32>
    %881 = tpu.concatenate %715, %726, %737, %748, %759, %770, %781, %792, %803, %814, %825, %836, %847, %858, %869, %880 in 0 : vector<1x64xf32>, vector<1x64xf32>, vector<1x64xf32>, vector<1x64xf32>, vector<1x64xf32>, vector<1x64xf32>, vector<1x64xf32>, vector<1x64xf32>, vector<1x64xf32>, vector<1x64xf32>, vector<1x64xf32>, vector<1x64xf32>, vector<1x64xf32>, vector<1x64xf32>, vector<1x64xf32>, vector<1x64xf32> -> vector<16x64xf32>
    %882 = vector.extract_strided_slice %881 {offsets = [0, 0], sizes = [16, 32], strides = [1, 1]} : vector<16x64xf32> to vector<16x32xf32>
    %883 = vector.extract_strided_slice %881 {offsets = [0, 32], sizes = [16, 32], strides = [1, 1]} : vector<16x64xf32> to vector<16x32xf32>
    %884 = tpu.concatenate %882, %883 in 0 : vector<16x32xf32>, vector<16x32xf32> -> vector<32x32xf32>
    %885 = tpu.concatenate %884, %85 in 1 : vector<32x32xf32>, vector<32x64xf32> -> vector<32x96xf32>
    %c0_333 = arith.constant 0 : index
    %c0_334 = arith.constant 0 : index
    %886 = vector.load %arg9[%c0_333, %c0_334] : memref<96x32xf32, #tpu.memory_space<vmem>>, vector<96x32xf32>
    %cst_335 = arith.constant dense<0.000000e+00> : vector<32x32xf32>
    %887 = tpu.matmul %885, %886, %cst_335 {dimension_numbers = #tpu.dot_dimension_numbers<[1], [0], [0], [1], [0, 0, 1, 1], [], []>} : vector<32x96xf32>, vector<96x32xf32>, vector<32x32xf32> -> vector<32x32xf32>
    %c0_336 = arith.constant 0 : index
    %c0_337 = arith.constant 0 : index
    %888 = vector.load %arg10[%c0_336, %c0_337] : memref<32x32xf32, #tpu.memory_space<vmem>>, vector<32x32xf32>
    tpu.vector_store %arg10[%c0_336, %c0_337], %887 {strides = array<i32>} : memref<32x32xf32, #tpu.memory_space<vmem>>, vector<32x32xf32>,
    return
  }
  func.func @transform_0(%arg0: i32) -> (i32, i32) {
    %c0_i32 = arith.constant 0 : i32
    %c0_i32_0 = arith.constant 0 : i32
    %c0_i32_1 = arith.constant 0 : i32
    return %c0_i32, %c0_i32_0 : i32, i32
  }
  func.func @transform_1(%arg0: i32) -> (i32, i32) {
    %c0_i32 = arith.constant 0 : i32
    %c0_i32_0 = arith.constant 0 : i32
    %c0_i32_1 = arith.constant 0 : i32
    return %c0_i32, %c0_i32_0 : i32, i32
  }
  func.func @transform_2(%arg0: i32) -> (i32, i32) {
    %c0_i32 = arith.constant 0 : i32
    %c0_i32_0 = arith.constant 0 : i32
    %c0_i32_1 = arith.constant 0 : i32
    return %c0_i32, %c0_i32_0 : i32, i32
  }
  func.func @transform_3(%arg0: i32) -> (i32, i32) {
    %c0_i32 = arith.constant 0 : i32
    %c0_i32_0 = arith.constant 0 : i32
    %c0_i32_1 = arith.constant 0 : i32
    return %c0_i32, %c0_i32_0 : i32, i32
  }
  func.func @transform_4(%arg0: i32) -> (i32, i32) {
    %c0_i32 = arith.constant 0 : i32
    %c0_i32_0 = arith.constant 0 : i32
    %c0_i32_1 = arith.constant 0 : i32
    return %c0_i32, %c0_i32_0 : i32, i32
  }
  func.func @transform_5(%arg0: i32) -> (i32, i32) {
    %c0_i32 = arith.constant 0 : i32
    %c0_i32_0 = arith.constant 0 : i32
    %c0_i32_1 = arith.constant 0 : i32
    return %c0_i32, %c0_i32_0 : i32, i32
  }
  func.func @transform_6(%arg0: i32) -> (i32, i32) {
    %c0_i32 = arith.constant 0 : i32
    %c0_i32_0 = arith.constant 0 : i32
    %c0_i32_1 = arith.constant 0 : i32
    return %c0_i32, %c0_i32_0 : i32, i32
  }
  func.func @transform_7(%arg0: i32) -> (i32, i32) {
    %c0_i32 = arith.constant 0 : i32
    %c0_i32_0 = arith.constant 0 : i32
    %c0_i32_1 = arith.constant 0 : i32
    return %c0_i32, %c0_i32_0 : i32, i32
  }
  func.func @transform_8(%arg0: i32) -> (i32, i32) {
    %c0_i32 = arith.constant 0 : i32
    %c0_i32_0 = arith.constant 0 : i32
    %c0_i32_1 = arith.constant 0 : i32
    return %c0_i32, %c0_i32_0 : i32, i32
  }
  func.func @transform_9(%arg0: i32) -> (i32, i32) {
    %c0_i32 = arith.constant 0 : i32
    %c0_i32_0 = arith.constant 0 : i32
    %c0_i32_1 = arith.constant 0 : i32
    return %c0_i32, %c0_i32_0 : i32, i32
  }
}

</mosaic_0001>

<llo_original>
// kernel: tpu_custom_call.1
$region0: #{tpu_custom_call.1}
  #allocation0 [shape = 'u32[]', space=smem, size = 0x4, offset = 0x4, fixed_abs, tag = 'smem constant byte address 0x4 - core index']
  #allocation1 [shape = 'u32[144,128]{1,0:T(1,128)}', space=vmem, size = 0x12000, scoped, tag = 'internal scratch']
  #allocation2 [shape = 'f32[16,16,64]{2,1,0:T(8,128)}', space=vmem, size = 0x20000, scoped, tag = 'scratch operand']
  #allocation3 [shape = 'f32[16,16,64]{2,1,0:T(8,128)}', space=vmem, size = 0x20000, scoped, tag = 'scratch operand']
  #allocation4 [shape = 'f32[16,16,64]{2,1,0:T(8,128)}', space=vmem, size = 0x20000, scoped, tag = 'scratch operand']
  %s0 = inlined_call_operand.vmem [shape: f32[32,32], index: 0, kind: input, shape index: {}]
  %s1 = inlined_call_operand.vmem [shape: f32[32,64], index: 1, kind: input, shape index: {}]
  %s2 = inlined_call_operand.hbm [shape: f32[4,64], index: 2, kind: input, shape index: {}]
  %s3 = inlined_call_operand.vmem [shape: f32[32,32], index: 3, kind: input, shape index: {}]
  %s4 = inlined_call_operand.vmem [shape: f32[1,32], index: 4, kind: input, shape index: {}]
  %s5 = inlined_call_operand.vmem [shape: f32[16,32], index: 5, kind: input, shape index: {}]
  %s6 = inlined_call_operand.vmem [shape: f32[16,32], index: 6, kind: input, shape index: {}]
  %s7 = inlined_call_operand.hbm [shape: f32[16,32], index: 7, kind: input, shape index: {}]
  %s8 = inlined_call_operand.vmem [shape: f32[96,32], index: 8, kind: input, shape index: {}]
  %s9 = inlined_call_operand.hbm [shape: f32[32,32], index: 9, kind: output, shape index: {}]
  %s10 = sld [smem:[#allocation0]]
  $region54: #{tpu_custom_call.1} parent=0
    _
  %s12 = ssub.s32 1, %s10
  %s13 = scalar_select 0, %s12, %s10
  $region1: #{tpu_custom_call.1} parent=0
    #allocation5 [shape = 'u8[2048]{0}', space=vmem, size = 0x800, scoped, tag = 'input window, operand 2, single buffered']
    #allocation6 [shape = 's32[1]{0}', space=sflag, size = 0x4, scoped, tag = 'scoped memory for tpu_custom_call.1']
    #allocation7 [shape = 's32[1]{0}', space=sflag, size = 0x4, scoped, tag = 'scoped memory for tpu_custom_call.1']
    #allocation8 [shape = 'u8[8192]{0}', space=vmem, size = 0x2000, scoped, tag = 'input window, operand 7, single buffered']
    #allocation9 [shape = 's32[1]{0}', space=sflag, size = 0x4, scoped, tag = 'scoped memory for tpu_custom_call.1']
    #allocation10 [shape = 'u8[16384]{0}', space=vmem, size = 0x4000, scoped, tag = 'output window, operand 0, single buffered']
    %14 = vsyncpa [#allocation6], 0
    %15 = vsyncpa [#allocation9], 0
    %16 = vsyncpa [#allocation7], 0
    // Predicated region
    $region2: #{tpu_custom_call.1} parent=1 // pred_check
      _
    $region3: #{tpu_custom_call.1} parent=1 // pred_check_branch
      %18 = sbr.rel (0) target = $region5
    $region4: #{tpu_custom_call.1} parent=1 // pred_region
      _
    $region5: #{tpu_custom_call.1} parent=1 // pred_fallthru
      _
    // Predicated region
    $region6: #{tpu_custom_call.1} parent=1 // pred_check
      _
    $region7: #{tpu_custom_call.1} parent=1 // pred_check_branch
      %20 = sbr.rel (0) target = $region9
    $region8: #{tpu_custom_call.1} parent=1 // pred_region
      _
    $region9: #{tpu_custom_call.1} parent=1 // pred_fallthru
      _
    // Predicated region
    $region10: #{tpu_custom_call.1} parent=1 // pred_check
      _
    $region11: #{tpu_custom_call.1} parent=1 // pred_check_branch
      %22 = sbr.rel (0) target = $region13
    $region12: #{tpu_custom_call.1} parent=1 // pred_region
      %s24 = ssub.s32 64, 64
      %25 = vsyncadd [#allocation6], %s24
      %s27 = sshll.u32 [#allocation5], 4
      %s28 = int_to_ptr.vmem [resolvable:$true] %s27
      %30 = dma.hbm_to_vmem [thread:$0]  %s2, 64, %s28, [#allocation6]
    $region13: #{tpu_custom_call.1} parent=1 // pred_fallthru
      _
    // Predicated region
    $region14: #{tpu_custom_call.1} parent=1 // pred_check
      _
    $region15: #{tpu_custom_call.1} parent=1 // pred_check_branch
      %32 = sbr.rel (0) target = $region17
    $region16: #{tpu_custom_call.1} parent=1 // pred_region
      _
    $region17: #{tpu_custom_call.1} parent=1 // pred_fallthru
      _
    // Predicated region
    $region18: #{tpu_custom_call.1} parent=1 // pred_check
      _
    $region19: #{tpu_custom_call.1} parent=1 // pred_check_branch
      %34 = sbr.rel (0) target = $region21
    $region20: #{tpu_custom_call.1} parent=1 // pred_region
      _
    $region21: #{tpu_custom_call.1} parent=1 // pred_fallthru
      _
    // Predicated region
    $region22: #{tpu_custom_call.1} parent=1 // pred_check
      _
    $region23: #{tpu_custom_call.1} parent=1 // pred_check_branch
      %36 = sbr.rel (0) target = $region25
    $region24: #{tpu_custom_call.1} parent=1 // pred_region
      _
    $region25: #{tpu_custom_call.1} parent=1 // pred_fallthru
      _
    // Predicated region
    $region26: #{tpu_custom_call.1} parent=1 // pred_check
      _
    $region27: #{tpu_custom_call.1} parent=1 // pred_check_branch
      %38 = sbr.rel (0) target = $region29
    $region28: #{tpu_custom_call.1} parent=1 // pred_region
      _
    $region29: #{tpu_custom_call.1} parent=1 // pred_fallthru
      _
    // Predicated region
    $region30: #{tpu_custom_call.1} parent=1 // pred_check
      _
    $region31: #{tpu_custom_call.1} parent=1 // pred_check_branch
      %40 = sbr.rel (0) target = $region33
    $region32: #{tpu_custom_call.1} parent=1 // pred_region
      %s42 = ssub.s32 256, 256
      %43 = vsyncadd [#allocation9], %s42
      %s44 = sshll.u32 [#allocation8], 4
      %s45 = int_to_ptr.vmem [resolvable:$true] %s44
      %50 = dma.hbm_to_vmem [thread:$0]  %s7, 256, %s45, [#allocation9], 128, 128, 8
    $region33: #{tpu_custom_call.1} parent=1 // pred_fallthru
      _
    // Predicated region
    $region34: #{tpu_custom_call.1} parent=1 // pred_check
      _
    $region35: #{tpu_custom_call.1} parent=1 // pred_check_branch
      %52 = sbr.rel (0) target = $region37
    $region36: #{tpu_custom_call.1} parent=1 // pred_region
      _
    $region37: #{tpu_custom_call.1} parent=1 // pred_fallthru
      _
    // Predicated region
    $region38: #{tpu_custom_call.1} parent=1 // pred_check
      _
    $region39: #{tpu_custom_call.1} parent=1 // pred_check_branch
      %54 = sbr.rel (0) target = $region41
    $region40: #{tpu_custom_call.1} parent=1 // pred_region
      %55 = dma.done [#allocation6], 64
    $region41: #{tpu_custom_call.1} parent=1 // pred_fallthru
      _
    // Predicated region
    $region42: #{tpu_custom_call.1} parent=1 // pred_check
      _
    $region43: #{tpu_custom_call.1} parent=1 // pred_check_branch
      %57 = sbr.rel (0) target = $region45
    $region44: #{tpu_custom_call.1} parent=1 // pred_region
      %58 = dma.done [#allocation9], 256
    $region45: #{tpu_custom_call.1} parent=1 // pred_fallthru
      _
    %v59 = vld [vmem:[%s0] sm:$0xff]
    %v60 = vld [vmem:[%s0 + $0x8] sm:$0xff]
    %v61 = vld [vmem:[%s0 + $0x10] sm:$0xff]
    %v62 = vld [vmem:[%s0 + $0x18] sm:$0xff]
    %v63 = vld [vmem:[%s1] sm:$0xff]
    %v64 = vld [vmem:[%s1 + $0x8] sm:$0xff]
    %v65 = vld [vmem:[%s1 + $0x10] sm:$0xff]
    %v66 = vld [vmem:[%s1 + $0x18] sm:$0xff]
    %vm67 = vcmask 261120
    %v69 = vsel %vm67, %v59, 0
    %v72 = vsel %vm67, %v60, 0
    %v75 = vsel %vm67, %v61, 0
    %v78 = vsel %vm67, %v62, 0
    %80 = vmatprep.subr.mxu0 0.0
    %81 = vmatpush1.msra.mxu0 0.0
    %82 = vmatprep.subr.mxu0 0.0
    %83 = vmatpush1.msra.mxu0 0.0
    %84 = vmatprep.subr.mxu0 0.0
    %85 = vmatpush1.msra.mxu0 0.0
    %86 = vmatprep.subr.mxu0 0.0
    %87 = vmatpush1.msra.mxu0 0.0
    %88 = vmatprep.subr.mxu0 0.0
    %89 = vmatpush1.msra.mxu0 0.0
    %90 = vmatprep.subr.mxu0 0.0
    %91 = vmatpush1.msra.mxu0 0.0
    %92 = vmatprep.subr.mxu0 0.0
    %93 = vmatpush1.msra.mxu0 0.0
    %94 = vmatprep.subr.mxu0 0.0
    %95 = vmatpush1.msra.mxu0 0.0
    %96 = vmatprep.subr.mxu0 0.0
    %97 = vmatpush1.msra.mxu0 0.0
    %98 = vmatprep.subr.mxu0 0.0
    %99 = vmatpush1.msra.mxu0 0.0
    %100 = vmatprep.subr.mxu0 0.0
    %101 = vmatpush1.msra.mxu0 0.0
    %102 = vmatprep.subr.mxu0 0.0
    %103 = vmatpush1.msra.mxu0 0.0
    %104 = vmatprep.subr.mxu0 0.0
    %105 = vmatpush1.msra.mxu0 %v66
    %106 = vmatprep.subr.mxu0 0.0
    %107 = vmatpush1.msra.mxu0 %v65
    %108 = vmatprep.subr.mxu0 0.0
    %109 = vmatpush1.msra.mxu0 %v64
    %110 = vmatprep.subr.mxu0 0.0
    %111 = vmatpush1.msra.mxu0 %v63
    %112 = vmatprep.subr.mxu0 0.0
    %113 = vmatpush2.msra.mxu0 0.0
    %114 = vmatprep.subr.mxu0 0.0
    %115 = vmatpush2.msra.mxu0 0.0
    %116 = vmatprep.subr.mxu0 0.0
    %117 = vmatpush2.msra.mxu0 0.0
    %118 = vmatprep.subr.mxu0 0.0
    %119 = vmatpush2.msra.mxu0 0.0
    %120 = vmatprep.subr.mxu0 0.0
    %121 = vmatpush2.msra.mxu0 0.0
    %122 = vmatprep.subr.mxu0 0.0
    %123 = vmatpush2.msra.mxu0 0.0
    %124 = vmatprep.subr.mxu0 0.0
    %125 = vmatpush2.msra.mxu0 0.0
    %126 = vmatprep.subr.mxu0 0.0
    %127 = vmatpush2.msra.mxu0 0.0
    %128 = vmatprep.subr.mxu0 0.0
    %129 = vmatpush2.msra.mxu0 0.0
    %130 = vmatprep.subr.mxu0 0.0
    %131 = vmatpush2.msra.mxu0 0.0
    %132 = vmatprep.subr.mxu0 0.0
    %133 = vmatpush2.msra.mxu0 0.0
    %134 = vmatprep.subr.mxu0 0.0
    %135 = vmatpush2.msra.mxu0 0.0
    %136 = vmatprep.subr.mxu0 0.0
    %137 = vmatpush2.msra.mxu0 0.0
    %138 = vmatprep.subr.mxu0 0.0
    %139 = vmatpush2.msra.mxu0 0.0
    %140 = vmatprep.subr.mxu0 0.0
    %141 = vmatpush2.msra.mxu0 0.0
    %142 = vmatprep.subr.mxu0 0.0
    %143 = vmatpush2.msra.mxu0 0.0
    %144 = vmatprep.mubr.f32.mxu0 0.0
    %145 = vmatmul.mubr.f32.gmra.mxu0 %v69
    %v146 = vpop.f32.mrf.mxu0
    %v147 = vadd.f32 0.0, %v146
    %v148 = vpop.f32.mrf.mxu0
    %149 = vmatprep.mubr.f32.mxu0 0.0
    %150 = vmatmul.mubr.f32.gmra.mxu0 %v72
    %v151 = vpop.f32.mrf.mxu0
    %v152 = vadd.f32 0.0, %v151
    %v153 = vpop.f32.mrf.mxu0
    %154 = vmatprep.mubr.f32.mxu0 0.0
    %155 = vmatmul.mubr.f32.gmra.mxu0 %v75
    %v156 = vpop.f32.mrf.mxu0
    %v157 = vadd.f32 0.0, %v156
    %v158 = vpop.f32.mrf.mxu0
    %159 = vmatprep.mubr.f32.mxu0 0.0
    %160 = vmatmul.mubr.f32.gmra.mxu0 %v78
    %v161 = vpop.f32.mrf.mxu0
    %v162 = vadd.f32 0.0, %v161
    %v163 = vpop.f32.mrf.mxu0
    %164 = vdwg.mxu0
    %v165 = vld [vmem:[#allocation5] sm:$0xf]
    %v166 = vlaneseq
    %v167 = vshrl.u32 %v166, 7
    %v168 = vadd.s32 %v167, 8
    %v169 = vadd.s32 %v167, 16
    %v170 = vadd.s32 %v167, 24
    %vm171 = vcmp.lt.s32.totalorder %v167, 0
    %v172 = vsub.s32 0, %v167
    %v173 = vsel %vm171, %v172, %v167
    %v174 = vshrl.u32 %v173, 4
    %v175 = vand.u32 %v173, 15
    %v176 = vsub.s32 0, %v175
    %v177 = vsel %vm171, %v176, %v175
    %vm178 = vcmp.lt.s32.totalorder %v168, 0
    %v179 = vsub.s32 0, %v168
    %v180 = vsel %vm178, %v179, %v168
    %v181 = vshrl.u32 %v180, 4
    %v182 = vand.u32 %v180, 15
    %v183 = vsub.s32 0, %v182
    %v184 = vsel %vm178, %v183, %v182
    %vm185 = vcmp.lt.s32.totalorder %v169, 0
    %v186 = vsub.s32 0, %v169
    %v187 = vsel %vm185, %v186, %v169
    %v188 = vshrl.u32 %v187, 4
    %v189 = vand.u32 %v187, 15
    %v190 = vsub.s32 0, %v189
    %v191 = vsel %vm185, %v190, %v189
    %vm192 = vcmp.lt.s32.totalorder %v170, 0
    %v193 = vsub.s32 0, %v170
    %v194 = vsel %vm192, %v193, %v170
    %v195 = vshrl.u32 %v194, 4
    %v196 = vand.u32 %v194, 15
    %v197 = vsub.s32 0, %v196
    %v198 = vsel %vm192, %v197, %v196
    %vm199 = vcmp.ne.s32.totalorder %v177, 0
    %vm200 = vcmp.ne.s32.totalorder %v184, 0
    %vm201 = vcmp.ne.s32.totalorder %v191, 0
    %vm202 = vcmp.ne.s32.totalorder %v198, 0
    %vm203 = vcmp.lt.s32.totalorder %v177, 0
    %vm204 = vcmp.lt.s32.totalorder %v184, 0
    %vm205 = vcmp.lt.s32.totalorder %v191, 0
    %vm206 = vcmp.lt.s32.totalorder %v198, 0
    %vm207 = vmand %vm203, %vm199
    %vm208 = vmand %vm204, %vm200
    %vm209 = vmand %vm205, %vm201
    %vm210 = vmand %vm206, %vm202
    %v211 = vadd.s32 %v177, 16
    %v212 = vadd.s32 %v184, 16
    %v213 = vadd.s32 %v191, 16
    %v214 = vadd.s32 %v198, 16
    %v215 = vsel %vm207, %v211, %v177
    %v216 = vsel %vm208, %v212, %v184
    %v217 = vsel %vm209, %v213, %v191
    %v218 = vsel %vm210, %v214, %v198
    %v219 = vlaneseq
    %v220 = vshrl.u32 %v219, 7
    %v221 = vsub.s32 1, %v220
    %v222 = vrot.slane %v165, %v221
    %v223 = vmul.f32 %v147, %v222
    %v224 = vmul.f32 %v152, %v222
    %v225 = vmul.f32 %v157, %v222
    %v226 = vmul.f32 %v162, %v222
    %v227 = vrot.slane %v147, 7
    %v228 = vrot.slane %v152, 7
    %v229 = vrot.slane %v157, 7
    %v230 = vrot.slane %v162, 7
    %vm231 = vcmp.lt.s32.totalorder %v167, 1
    %v232 = vsel %vm231, %v229, %v230
    %v233 = vsel %vm231, %v228, %v229
    %v234 = vsel %vm231, %v227, %v228
    %v235 = vsel %vm231, %v230, %v227
    %v236 = vadd.s32 %v215, 4294967295
    %v237 = vadd.s32 %v216, 4294967295
    %v238 = vadd.s32 %v217, 4294967295
    %v239 = vadd.s32 %v218, 4294967295
    %vm240 = vcmp.ge.s32.totalorder %v236, 0
    %vm241 = vcmp.ge.s32.totalorder %v237, 0
    %vm242 = vcmp.ge.s32.totalorder %v238, 0
    %vm243 = vcmp.ge.s32.totalorder %v239, 0
    %vm244 = vcmp.lt.s32.totalorder %v236, 16
    %vm245 = vcmp.lt.s32.totalorder %v237, 16
    %vm246 = vcmp.lt.s32.totalorder %v238, 16
    %vm247 = vcmp.lt.s32.totalorder %v239, 16
    %vm248 = vmand %vm240, %vm244
    %vm249 = vmand %vm241, %vm245
    %vm250 = vmand %vm242, %vm246
    %vm251 = vmand %vm243, %vm247
    %v252 = vsel %vm248, 1, 0
    %v253 = vsel %vm249, 1, 0
    %v254 = vsel %vm250, 1, 0
    %v255 = vsel %vm251, 1, 0
    %vm256 = vcmp.eq.s32.totalorder %v252, 1
    %vm257 = vcmp.eq.s32.totalorder %v253, 1
    %vm258 = vcmp.eq.s32.totalorder %v254, 1
    %vm259 = vcmp.eq.s32.totalorder %v255, 1
    %v260 = vsel %vm256, %v235, 0.0
    %v261 = vsel %vm257, %v234, 0.0
    %v262 = vsel %vm258, %v233, 0.0
    %v263 = vsel %vm259, %v232, 0.0
    %v264 = vlaneseq
    %v265 = vshrl.u32 %v264, 7
    %v266 = vsub.s32 0, %v265
    %v267 = vrot.slane %v165, %v266
    %v268 = vmul.f32 %v260, %v267
    %v269 = vmul.f32 %v261, %v267
    %v270 = vmul.f32 %v262, %v267
    %v271 = vmul.f32 %v263, %v267
    %v272 = vadd.f32 %v223, %v268
    %v273 = vadd.f32 %v224, %v269
    %v274 = vadd.f32 %v225, %v270
    %v275 = vadd.f32 %v226, %v271
    %v276 = vrot.slane %v147, 1
    %v277 = vrot.slane %v152, 1
    %v278 = vrot.slane %v157, 1
    %v279 = vrot.slane %v162, 1
    %vm280 = vcmp.lt.s32.totalorder %v167, 7
    %v281 = vsel %vm280, %v278, %v279
    %v282 = vsel %vm280, %v277, %v278
    %v283 = vsel %vm280, %v276, %v277
    %v284 = vsel %vm280, %v279, %v276
    %v285 = vadd.s32 %v215, 1
    %v286 = vadd.s32 %v216, 1
    %v287 = vadd.s32 %v217, 1
    %v288 = vadd.s32 %v218, 1
    %vm289 = vcmp.ge.s32.totalorder %v285, 0
    %vm290 = vcmp.ge.s32.totalorder %v286, 0
    %vm291 = vcmp.ge.s32.totalorder %v287, 0
    %vm292 = vcmp.ge.s32.totalorder %v288, 0
    %vm293 = vcmp.lt.s32.totalorder %v285, 16
    %vm294 = vcmp.lt.s32.totalorder %v286, 16
    %vm295 = vcmp.lt.s32.totalorder %v287, 16
    %vm296 = vcmp.lt.s32.totalorder %v288, 16
    %vm297 = vmand %vm289, %vm293
    %vm298 = vmand %vm290, %vm294
    %vm299 = vmand %vm291, %vm295
    %vm300 = vmand %vm292, %vm296
    %v301 = vsel %vm297, 1, 0
    %v302 = vsel %vm298, 1, 0
    %v303 = vsel %vm299, 1, 0
    %v304 = vsel %vm300, 1, 0
    %vm305 = vcmp.eq.s32.totalorder %v301, 1
    %vm306 = vcmp.eq.s32.totalorder %v302, 1
    %vm307 = vcmp.eq.s32.totalorder %v303, 1
    %vm308 = vcmp.eq.s32.totalorder %v304, 1
    %v309 = vsel %vm305, %v283, 0.0
    %v310 = vsel %vm306, %v282, 0.0
    %v311 = vsel %vm307, %v281, 0.0
    %v312 = vsel %vm308, %v284, 0.0
    %v313 = vlaneseq
    %v314 = vshrl.u32 %v313, 7
    %v315 = vsub.s32 2, %v314
    %v316 = vrot.slane %v165, %v315
    %v317 = vmul.f32 %v309, %v316
    %v318 = vmul.f32 %v310, %v316
    %v319 = vmul.f32 %v311, %v316
    %v320 = vmul.f32 %v312, %v316
    %v321 = vadd.f32 %v272, %v317
    %v322 = vadd.f32 %v273, %v318
    %v323 = vadd.f32 %v274, %v319
    %v324 = vadd.f32 %v275, %v320
    %v325 = vrot.slane %v147, 2
    %v326 = vrot.slane %v152, 2
    %v327 = vrot.slane %v157, 2
    %v328 = vrot.slane %v162, 2
    %vm329 = vcmp.lt.s32.totalorder %v167, 6
    %v330 = vsel %vm329, %v327, %v328
    %v331 = vsel %vm329, %v326, %v327
    %v332 = vsel %vm329, %v325, %v326
    %v333 = vsel %vm329, %v328, %v325
    %v334 = vadd.s32 %v215, 2
    %v335 = vadd.s32 %v216, 2
    %v336 = vadd.s32 %v217, 2
    %v337 = vadd.s32 %v218, 2
    %vm338 = vcmp.ge.s32.totalorder %v334, 0
    %vm339 = vcmp.ge.s32.totalorder %v335, 0
    %vm340 = vcmp.ge.s32.totalorder %v336, 0
    %vm341 = vcmp.ge.s32.totalorder %v337, 0
    %vm342 = vcmp.lt.s32.totalorder %v334, 16
    %vm343 = vcmp.lt.s32.totalorder %v335, 16
    %vm344 = vcmp.lt.s32.totalorder %v336, 16
    %vm345 = vcmp.lt.s32.totalorder %v337, 16
    %vm346 = vmand %vm338, %vm342
    %vm347 = vmand %vm339, %vm343
    %vm348 = vmand %vm340, %vm344
    %vm349 = vmand %vm341, %vm345
    %v350 = vsel %vm346, 1, 0
    %v351 = vsel %vm347, 1, 0
    %v352 = vsel %vm348, 1, 0
    %v353 = vsel %vm349, 1, 0
    %vm354 = vcmp.eq.s32.totalorder %v350, 1
    %vm355 = vcmp.eq.s32.totalorder %v351, 1
    %vm356 = vcmp.eq.s32.totalorder %v352, 1
    %vm357 = vcmp.eq.s32.totalorder %v353, 1
    %v358 = vsel %vm354, %v332, 0.0
    %v359 = vsel %vm355, %v331, 0.0
    %v360 = vsel %vm356, %v330, 0.0
    %v361 = vsel %vm357, %v333, 0.0
    %v362 = vlaneseq
    %v363 = vshrl.u32 %v362, 7
    %v364 = vsub.s32 3, %v363
    %v365 = vrot.slane %v165, %v364
    %v366 = vmul.f32 %v358, %v365
    %v367 = vmul.f32 %v359, %v365
    %v368 = vmul.f32 %v360, %v365
    %v369 = vmul.f32 %v361, %v365
    %v370 = vadd.f32 %v321, %v366
    %v371 = vadd.f32 %v322, %v367
    %v372 = vadd.f32 %v323, %v368
    %v373 = vadd.f32 %v324, %v369
    %v374 = vsub.f32 0.0, %v370
    %v375 = vsub.f32 0.0, %v371
    %v376 = vsub.f32 0.0, %v372
    %v377 = vsub.f32 0.0, %v373
    %v378 = vmul.f32 %v374, 1.442695
    %v379 = vpow.pop %v378
    %v380 = vmul.f32 %v375, 1.442695
    %v381 = vpow.pop %v380
    %v382 = vmul.f32 %v376, 1.442695
    %v383 = vpow.pop %v382
    %v384 = vmul.f32 %v377, 1.442695
    %v385 = vpow.pop %v384
    %v386 = vadd.f32 %v379, 1.0
    %v387 = vadd.f32 %v381, 1.0
    %v388 = vadd.f32 %v383, 1.0
    %v389 = vadd.f32 %v385, 1.0
    %v390 = vrcp.pop %v386
    %v391 = vmul.f32 1.0, %v390
    %v392 = vrcp.pop %v387
    %v393 = vmul.f32 1.0, %v392
    %v394 = vrcp.pop %v388
    %v395 = vmul.f32 1.0, %v394
    %v396 = vrcp.pop %v389
    %v397 = vmul.f32 1.0, %v396
    %v398 = vmul.f32 %v370, %v391
    %v399 = vmul.f32 %v371, %v393
    %v400 = vmul.f32 %v372, %v395
    %v401 = vmul.f32 %v373, %v397
    %v402 = vld [vmem:[%s3] sm:$0xff]
    %v403 = vld [vmem:[%s3 + $0x8] sm:$0xff]
    %v404 = vld [vmem:[%s3 + $0x10] sm:$0xff]
    %v405 = vld [vmem:[%s3 + $0x18] sm:$0xff]
    %v406 = vld [vmem:[%s4] sm:$0x1]
    %v408 = vlaneseq
    %v409 = vshrl.u32 %v408, 7
    %v410 = vsub.s32 0, %v409
    %v411 = vrot.slane %v406, %v410
    %v414 = vsel %vm67, %v398, 0
    %v417 = vsel %vm67, %v399, 0
    %v420 = vsel %vm67, %v400, 0
    %v423 = vsel %vm67, %v401, 0
    %425 = vmatprep.subr.mxu0 0.0
    %426 = vmatpush1.msra.mxu0 0.0
    %427 = vmatprep.subr.mxu0 0.0
    %428 = vmatpush1.msra.mxu0 0.0
    %429 = vmatprep.subr.mxu0 0.0
    %430 = vmatpush1.msra.mxu0 0.0
    %431 = vmatprep.subr.mxu0 0.0
    %432 = vmatpush1.msra.mxu0 0.0
    %433 = vmatprep.subr.mxu0 0.0
    %434 = vmatpush1.msra.mxu0 0.0
    %435 = vmatprep.subr.mxu0 0.0
    %436 = vmatpush1.msra.mxu0 0.0
    %437 = vmatprep.subr.mxu0 0.0
    %438 = vmatpush1.msra.mxu0 0.0
    %439 = vmatprep.subr.mxu0 0.0
    %440 = vmatpush1.msra.mxu0 0.0
    %441 = vmatprep.subr.mxu0 0.0
    %442 = vmatpush1.msra.mxu0 0.0
    %443 = vmatprep.subr.mxu0 0.0
    %444 = vmatpush1.msra.mxu0 0.0
    %445 = vmatprep.subr.mxu0 0.0
    %446 = vmatpush1.msra.mxu0 0.0
    %447 = vmatprep.subr.mxu0 0.0
    %448 = vmatpush1.msra.mxu0 0.0
    %449 = vmatprep.subr.mxu0 0.0
    %450 = vmatpush1.msra.mxu0 %v405
    %451 = vmatprep.subr.mxu0 0.0
    %452 = vmatpush1.msra.mxu0 %v404
    %453 = vmatprep.subr.mxu0 0.0
    %454 = vmatpush1.msra.mxu0 %v403
    %455 = vmatprep.subr.mxu0 0.0
    %456 = vmatpush1.msra.mxu0 %v402
    %457 = vmatprep.subr.mxu0 0.0
    %458 = vmatpush2.msra.mxu0 0.0
    %459 = vmatprep.subr.mxu0 0.0
    %460 = vmatpush2.msra.mxu0 0.0
    %461 = vmatprep.subr.mxu0 0.0
    %462 = vmatpush2.msra.mxu0 0.0
    %463 = vmatprep.subr.mxu0 0.0
    %464 = vmatpush2.msra.mxu0 0.0
    %465 = vmatprep.subr.mxu0 0.0
    %466 = vmatpush2.msra.mxu0 0.0
    %467 = vmatprep.subr.mxu0 0.0
    %468 = vmatpush2.msra.mxu0 0.0
    %469 = vmatprep.subr.mxu0 0.0
    %470 = vmatpush2.msra.mxu0 0.0
    %471 = vmatprep.subr.mxu0 0.0
    %472 = vmatpush2.msra.mxu0 0.0
    %473 = vmatprep.subr.mxu0 0.0
    %474 = vmatpush2.msra.mxu0 0.0
    %475 = vmatprep.subr.mxu0 0.0
    %476 = vmatpush2.msra.mxu0 0.0
    %477 = vmatprep.subr.mxu0 0.0
    %478 = vmatpush2.msra.mxu0 0.0
    %479 = vmatprep.subr.mxu0 0.0
    %480 = vmatpush2.msra.mxu0 0.0
    %481 = vmatprep.subr.mxu0 0.0
    %482 = vmatpush2.msra.mxu0 0.0
    %483 = vmatprep.subr.mxu0 0.0
    %484 = vmatpush2.msra.mxu0 0.0
    %485 = vmatprep.subr.mxu0 0.0
    %486 = vmatpush2.msra.mxu0 0.0
    %487 = vmatprep.subr.mxu0 0.0
    %488 = vmatpush2.msra.mxu0 0.0
    %489 = vmatprep.mubr.f32.mxu0 0.0
    %490 = vmatmul.mubr.f32.gmra.mxu0 %v414
    %v491 = vpop.f32.mrf.mxu0
    %v492 = vadd.f32 %v411, %v491
    %v493 = vpop.f32.mrf.mxu0
    %494 = vmatprep.mubr.f32.mxu0 0.0
    %495 = vmatmul.mubr.f32.gmra.mxu0 %v417
    %v496 = vpop.f32.mrf.mxu0
    %v497 = vadd.f32 %v411, %v496
    %v498 = vpop.f32.mrf.mxu0
    %499 = vmatprep.mubr.f32.mxu0 0.0
    %500 = vmatmul.mubr.f32.gmra.mxu0 %v420
    %v501 = vpop.f32.mrf.mxu0
    %v502 = vadd.f32 %v411, %v501
    %v503 = vpop.f32.mrf.mxu0
    %504 = vmatprep.mubr.f32.mxu0 0.0
    %505 = vmatmul.mubr.f32.gmra.mxu0 %v423
    %v506 = vpop.f32.mrf.mxu0
    %v507 = vadd.f32 %v411, %v506
    %v508 = vpop.f32.mrf.mxu0
    %509 = vdwg.mxu0
    %v510 = vmax.f32 %v492, 0.0
    %v511 = vmax.f32 %v497, 0.0
    %v512 = vmax.f32 %v502, 0.0
    %v513 = vmax.f32 %v507, 0.0
    %v514 = vand.u32 2147483647, %v492
    %v515 = vand.u32 2147483647, %v497
    %v516 = vand.u32 2147483647, %v502
    %v517 = vand.u32 2147483647, %v507
    %v518 = vsub.f32 0.0, %v514
    %v519 = vsub.f32 0.0, %v515
    %v520 = vsub.f32 0.0, %v516
    %v521 = vsub.f32 0.0, %v517
    %v522 = vmul.f32 %v518, 1.442695
    %v523 = vpow.pop %v522
    %v524 = vmul.f32 %v519, 1.442695
    %v525 = vpow.pop %v524
    %v526 = vmul.f32 %v520, 1.442695
    %v527 = vpow.pop %v526
    %v528 = vmul.f32 %v521, 1.442695
    %v529 = vpow.pop %v528
    %v530 = vadd.f32 %v523, 1.0
    %v531 = vadd.f32 %v525, 1.0
    %v532 = vadd.f32 %v527, 1.0
    %v533 = vadd.f32 %v529, 1.0
    %v534 = vlog2.pop %v530
    %v535 = vmul.f32 %v534, 0.6931472
    %v536 = vlog2.pop %v531
    %v537 = vmul.f32 %v536, 0.6931472
    %v538 = vlog2.pop %v532
    %v539 = vmul.f32 %v538, 0.6931472
    %v540 = vlog2.pop %v533
    %v541 = vmul.f32 %v540, 0.6931472
    %v542 = vadd.f32 %v510, %v535
    %v543 = vadd.f32 %v511, %v537
    %v544 = vadd.f32 %v512, %v539
    %v545 = vadd.f32 %v513, %v541
    %v546 = vmul.f32 %v542, %v398
    %v547 = vmul.f32 %v543, %v399
    %v548 = vmul.f32 %v544, %v400
    %v549 = vmul.f32 %v545, %v401
    %v550 = vld [vmem:[%s5] sm:$0xff]
    %v551 = vld [vmem:[%s5 + $0x8] sm:$0xff]
    %v553 = vsel %vm67, %v550, 0
    %v556 = vsel %vm67, %v551, 0
    %558 = vmatprep.subr.mxu0 0.0
    %559 = vmatpush1.xpose.msra.mxu0 0.0
    %560 = vmatprep.subr.mxu0 0.0
    %561 = vmatpush1.xpose.msra.mxu0 0.0
    %562 = vmatprep.subr.mxu0 0.0
    %563 = vmatpush1.xpose.msra.mxu0 0.0
    %564 = vmatprep.subr.mxu0 0.0
    %565 = vmatpush1.xpose.msra.mxu0 0.0
    %566 = vmatprep.subr.mxu0 0.0
    %567 = vmatpush1.xpose.msra.mxu0 0.0
    %568 = vmatprep.subr.mxu0 0.0
    %569 = vmatpush1.xpose.msra.mxu0 0.0
    %570 = vmatprep.subr.mxu0 0.0
    %571 = vmatpush1.xpose.msra.mxu0 0.0
    %572 = vmatprep.subr.mxu0 0.0
    %573 = vmatpush1.xpose.msra.mxu0 0.0
    %574 = vmatprep.subr.mxu0 0.0
    %575 = vmatpush1.xpose.msra.mxu0 0.0
    %576 = vmatprep.subr.mxu0 0.0
    %577 = vmatpush1.xpose.msra.mxu0 0.0
    %578 = vmatprep.subr.mxu0 0.0
    %579 = vmatpush1.xpose.msra.mxu0 0.0
    %580 = vmatprep.subr.mxu0 0.0
    %581 = vmatpush1.xpose.msra.mxu0 0.0
    %582 = vmatprep.subr.mxu0 0.0
    %583 = vmatpush1.xpose.msra.mxu0 %v423
    %584 = vmatprep.subr.mxu0 0.0
    %585 = vmatpush1.xpose.msra.mxu0 %v420
    %586 = vmatprep.subr.mxu0 0.0
    %587 = vmatpush1.xpose.msra.mxu0 %v417
    %588 = vmatprep.subr.mxu0 0.0
    %589 = vmatpush1.xpose.msra.mxu0 %v414
    %590 = vmatprep.subr.mxu0 0.0
    %591 = vmatpush2.xpose.msra.mxu0 0.0
    %592 = vmatprep.subr.mxu0 0.0
    %593 = vmatpush2.xpose.msra.mxu0 0.0
    %594 = vmatprep.subr.mxu0 0.0
    %595 = vmatpush2.xpose.msra.mxu0 0.0
    %596 = vmatprep.subr.mxu0 0.0
    %597 = vmatpush2.xpose.msra.mxu0 0.0
    %598 = vmatprep.subr.mxu0 0.0
    %599 = vmatpush2.xpose.msra.mxu0 0.0
    %600 = vmatprep.subr.mxu0 0.0
    %601 = vmatpush2.xpose.msra.mxu0 0.0
    %602 = vmatprep.subr.mxu0 0.0
    %603 = vmatpush2.xpose.msra.mxu0 0.0
    %604 = vmatprep.subr.mxu0 0.0
    %605 = vmatpush2.xpose.msra.mxu0 0.0
    %606 = vmatprep.subr.mxu0 0.0
    %607 = vmatpush2.xpose.msra.mxu0 0.0
    %608 = vmatprep.subr.mxu0 0.0
    %609 = vmatpush2.xpose.msra.mxu0 0.0
    %610 = vmatprep.subr.mxu0 0.0
    %611 = vmatpush2.xpose.msra.mxu0 0.0
    %612 = vmatprep.subr.mxu0 0.0
    %613 = vmatpush2.xpose.msra.mxu0 0.0
    %614 = vmatprep.subr.mxu0 0.0
    %615 = vmatpush2.xpose.msra.mxu0 0.0
    %616 = vmatprep.subr.mxu0 0.0
    %617 = vmatpush2.xpose.msra.mxu0 0.0
    %618 = vmatprep.subr.mxu0 0.0
    %619 = vmatpush2.xpose.msra.mxu0 0.0
    %620 = vmatprep.subr.mxu0 0.0
    %621 = vmatpush2.xpose.msra.mxu0 0.0
    %622 = vmatprep.mubr.f32.mxu0 0.0
    %623 = vmatmul.mubr.f32.gmra.mxu0 %v553
    %v624 = vpop.f32.mrf.mxu0
    %v625 = vadd.f32 0.0, %v624
    %v626 = vpop.f32.mrf.mxu0
    %627 = vmatprep.mubr.f32.mxu0 0.0
    %628 = vmatmul.mubr.f32.gmra.mxu0 %v556
    %v629 = vpop.f32.mrf.mxu0
    %v630 = vadd.f32 0.0, %v629
    %v631 = vpop.f32.mrf.mxu0
    %632 = vdwg.mxu0
    %v633 = vld [vmem:[%s6] sm:$0xff]
    %v634 = vld [vmem:[%s6 + $0x8] sm:$0xff]
    %v636 = vsel %vm67, %v633, 0
    %v639 = vsel %vm67, %v634, 0
    %641 = vmatprep.subr.mxu0 0.0
    %642 = vmatpush1.xpose.msra.mxu0 0.0
    %643 = vmatprep.subr.mxu0 0.0
    %644 = vmatpush1.xpose.msra.mxu0 0.0
    %645 = vmatprep.subr.mxu0 0.0
    %646 = vmatpush1.xpose.msra.mxu0 0.0
    %647 = vmatprep.subr.mxu0 0.0
    %648 = vmatpush1.xpose.msra.mxu0 0.0
    %649 = vmatprep.subr.mxu0 0.0
    %650 = vmatpush1.xpose.msra.mxu0 0.0
    %651 = vmatprep.subr.mxu0 0.0
    %652 = vmatpush1.xpose.msra.mxu0 0.0
    %653 = vmatprep.subr.mxu0 0.0
    %654 = vmatpush1.xpose.msra.mxu0 0.0
    %655 = vmatprep.subr.mxu0 0.0
    %656 = vmatpush1.xpose.msra.mxu0 0.0
    %657 = vmatprep.subr.mxu0 0.0
    %658 = vmatpush1.xpose.msra.mxu0 0.0
    %659 = vmatprep.subr.mxu0 0.0
    %660 = vmatpush1.xpose.msra.mxu0 0.0
    %661 = vmatprep.subr.mxu0 0.0
    %662 = vmatpush1.xpose.msra.mxu0 0.0
    %663 = vmatprep.subr.mxu0 0.0
    %664 = vmatpush1.xpose.msra.mxu0 0.0
    %665 = vmatprep.subr.mxu0 0.0
    %666 = vmatpush1.xpose.msra.mxu0 %v423
    %667 = vmatprep.subr.mxu0 0.0
    %668 = vmatpush1.xpose.msra.mxu0 %v420
    %669 = vmatprep.subr.mxu0 0.0
    %670 = vmatpush1.xpose.msra.mxu0 %v417
    %671 = vmatprep.subr.mxu0 0.0
    %672 = vmatpush1.xpose.msra.mxu0 %v414
    %673 = vmatprep.subr.mxu0 0.0
    %674 = vmatpush2.xpose.msra.mxu0 0.0
    %675 = vmatprep.subr.mxu0 0.0
    %676 = vmatpush2.xpose.msra.mxu0 0.0
    %677 = vmatprep.subr.mxu0 0.0
    %678 = vmatpush2.xpose.msra.mxu0 0.0
    %679 = vmatprep.subr.mxu0 0.0
    %680 = vmatpush2.xpose.msra.mxu0 0.0
    %681 = vmatprep.subr.mxu0 0.0
    %682 = vmatpush2.xpose.msra.mxu0 0.0
    %683 = vmatprep.subr.mxu0 0.0
    %684 = vmatpush2.xpose.msra.mxu0 0.0
    %685 = vmatprep.subr.mxu0 0.0
    %686 = vmatpush2.xpose.msra.mxu0 0.0
    %687 = vmatprep.subr.mxu0 0.0
    %688 = vmatpush2.xpose.msra.mxu0 0.0
    %689 = vmatprep.subr.mxu0 0.0
    %690 = vmatpush2.xpose.msra.mxu0 0.0
    %691 = vmatprep.subr.mxu0 0.0
    %692 = vmatpush2.xpose.msra.mxu0 0.0
    %693 = vmatprep.subr.mxu0 0.0
    %694 = vmatpush2.xpose.msra.mxu0 0.0
    %695 = vmatprep.subr.mxu0 0.0
    %696 = vmatpush2.xpose.msra.mxu0 0.0
    %697 = vmatprep.subr.mxu0 0.0
    %698 = vmatpush2.xpose.msra.mxu0 0.0
    %699 = vmatprep.subr.mxu0 0.0
    %700 = vmatpush2.xpose.msra.mxu0 0.0
    %701 = vmatprep.subr.mxu0 0.0
    %702 = vmatpush2.xpose.msra.mxu0 0.0
    %703 = vmatprep.subr.mxu0 0.0
    %704 = vmatpush2.xpose.msra.mxu0 0.0
    %705 = vmatprep.mubr.f32.mxu0 0.0
    %706 = vmatmul.mubr.f32.gmra.mxu0 %v636
    %v707 = vpop.f32.mrf.mxu0
    %v708 = vadd.f32 0.0, %v707
    %v709 = vpop.f32.mrf.mxu0
    %710 = vmatprep.mubr.f32.mxu0 0.0
    %711 = vmatmul.mubr.f32.gmra.mxu0 %v639
    %v712 = vpop.f32.mrf.mxu0
    %v713 = vadd.f32 0.0, %v712
    %v714 = vpop.f32.mrf.mxu0
    %715 = vdwg.mxu0
    %v716 = vld [vmem:[#allocation8] sm:$0xff]
    %v717 = vld [vmem:[#allocation8 + $0x8] sm:$0xff]
    %v718 = vmul.f32 %v716, 1.442695
    %v719 = vpow.pop %v718
    %v720 = vmul.f32 %v717, 1.442695
    %v721 = vpow.pop %v720
    %v722 = vsub.f32 0.0, %v719
    %v723 = vsub.f32 0.0, %v721
    %v724 = vlaneseq
    %v725 = vshrl.u32 %v724, 7
    %v726 = vsub.s32 0, %v725
    %v727 = vrot.slane %v542, %v726
    %v728 = vmul.f32 %v727, %v722
    %v729 = vmul.f32 %v727, %v723
    %v730 = vlaneseq
    %v731 = vshrl.u32 %v730, 7
    %v732 = vsub.s32 0, %v731
    %v733 = vrot.slane %v544, %v732
    %v734 = vmul.f32 %v733, %v722
    %v735 = vmul.f32 %v733, %v723
    %738 = vrot.lane.b32.xlu0 %v734, 32
    %v739 = vpop.permute.xlu0 %738
    %740 = vrot.lane.b32.xlu0 %v735, 32
    %v741 = vpop.permute.xlu0 %740
    %v744 = vsel %vm67, %v728, %v739
    %v745 = vsel %vm67, %v729, %v741
    %v746 = vmul.f32 %v744, 1.442695
    %v747 = vpow.pop %v746
    %v748 = vmul.f32 %v745, 1.442695
    %v749 = vpow.pop %v748
    %vm750 = vcmask 523264
    %751 = vst.msk [vmem:[#allocation2] sm:$0xff] %vm750, %v747
    %752 = vst.msk [vmem:[#allocation2 + $0x8] sm:$0xff] %vm750, %v749
    %v753 = vlaneseq
    %v754 = vshrl.u32 %v753, 7
    %v755 = vsub.s32 0, %v754
    %v756 = vrot.slane %v546, %v755
    %758 = vset.pattern.permute.xlu0 0
    %759 = vperm.xlu0 %758, %v625
    %v760 = vpop.permute.xlu0 %759
    %763 = vset.pattern.permute.xlu0 0
    %764 = vperm.xlu0 %763, %v630
    %v765 = vpop.permute.xlu0 %764
    %v767 = vmul.f32 %v756, %v760
    %v768 = vmul.f32 %v756, %v765
    %v769 = vlaneseq
    %v770 = vshrl.u32 %v769, 7
    %v771 = vsub.s32 0, %v770
    %v772 = vrot.slane %v548, %v771
    %773 = vset.pattern.permute.xlu0 16
    %774 = vperm.xlu0 %773, %v625
    %v775 = vpop.permute.xlu0 %774
    %777 = vset.pattern.permute.xlu0 16
    %778 = vperm.xlu0 %777, %v630
    %v779 = vpop.permute.xlu0 %778
    %v781 = vmul.f32 %v772, %v775
    %v782 = vmul.f32 %v772, %v779
    %785 = vrot.lane.b32.xlu0 %v781, 32
    %v786 = vpop.permute.xlu0 %785
    %787 = vrot.lane.b32.xlu0 %v782, 32
    %v788 = vpop.permute.xlu0 %787
    %v791 = vsel %vm67, %v767, %v786
    %v792 = vsel %vm67, %v768, %v788
    %793 = vst.msk [vmem:[#allocation3] sm:$0xff] %vm750, %v791
    %794 = vst.msk [vmem:[#allocation3 + $0x8] sm:$0xff] %vm750, %v792
    %796 = vset.pattern.permute.xlu0 0
    %797 = vperm.xlu0 %796, %v708
    %v798 = vpop.permute.xlu0 %797
    %801 = vset.pattern.permute.xlu0 0
    %802 = vperm.xlu0 %801, %v713
    %v803 = vpop.permute.xlu0 %802
    %805 = vset.pattern.permute.xlu0 16
    %806 = vperm.xlu0 %805, %v708
    %v807 = vpop.permute.xlu0 %806
    %809 = vset.pattern.permute.xlu0 16
    %810 = vperm.xlu0 %809, %v713
    %v811 = vpop.permute.xlu0 %810
    %v813 = vsel %vm67, %v798, %v807
    %v814 = vsel %vm67, %v803, %v811
    %815 = vst.msk [vmem:[#allocation4] sm:$0xff] %vm750, %v813
    %816 = vst.msk [vmem:[#allocation4 + $0x8] sm:$0xff] %vm750, %v814
    %v817 = vlaneseq
    %v818 = vshrl.u32 %v817, 7
    %v819 = vsub.s32 1, %v818
    %v820 = vrot.slane %v542, %v819
    %v821 = vmul.f32 %v820, %v722
    %v822 = vmul.f32 %v820, %v723
    %v823 = vlaneseq
    %v824 = vshrl.u32 %v823, 7
    %v825 = vsub.s32 1, %v824
    %v826 = vrot.slane %v544, %v825
    %v827 = vmul.f32 %v826, %v722
    %v828 = vmul.f32 %v826, %v723
    %831 = vrot.lane.b32.xlu0 %v827, 32
    %v832 = vpop.permute.xlu0 %831
    %833 = vrot.lane.b32.xlu0 %v828, 32
    %v834 = vpop.permute.xlu0 %833
    %v837 = vsel %vm67, %v821, %v832
    %v838 = vsel %vm67, %v822, %v834
    %v839 = vmul.f32 %v837, 1.442695
    %v840 = vpow.pop %v839
    %v841 = vmul.f32 %v838, 1.442695
    %v842 = vpow.pop %v841
    %s843 = scalar_lea.vmem [#allocation2], 16
    %844 = vst.msk [vmem:[%s843] sm:$0xff] %vm750, %v840
    %845 = vst.msk [vmem:[%s843 + $0x8] sm:$0xff] %vm750, %v842
    %v846 = vlaneseq
    %v847 = vshrl.u32 %v846, 7
    %v848 = vsub.s32 1, %v847
    %v849 = vrot.slane %v546, %v848
    %850 = vset.pattern.permute.xlu0 1
    %851 = vperm.xlu0 %850, %v625
    %v852 = vpop.permute.xlu0 %851
    %854 = vset.pattern.permute.xlu0 1
    %855 = vperm.xlu0 %854, %v630
    %v856 = vpop.permute.xlu0 %855
    %v858 = vmul.f32 %v849, %v852
    %v859 = vmul.f32 %v849, %v856
    %v860 = vlaneseq
    %v861 = vshrl.u32 %v860, 7
    %v862 = vsub.s32 1, %v861
    %v863 = vrot.slane %v548, %v862
    %864 = vset.pattern.permute.xlu0 17
    %865 = vperm.xlu0 %864, %v625
    %v866 = vpop.permute.xlu0 %865
    %868 = vset.pattern.permute.xlu0 17
    %869 = vperm.xlu0 %868, %v630
    %v870 = vpop.permute.xlu0 %869
    %v872 = vmul.f32 %v863, %v866
    %v873 = vmul.f32 %v863, %v870
    %876 = vrot.lane.b32.xlu0 %v872, 32
    %v877 = vpop.permute.xlu0 %876
    %878 = vrot.lane.b32.xlu0 %v873, 32
    %v879 = vpop.permute.xlu0 %878
    %v882 = vsel %vm67, %v858, %v877
    %v883 = vsel %vm67, %v859, %v879
    %s884 = scalar_lea.vmem [#allocation3], 16
    %885 = vst.msk [vmem:[%s884] sm:$0xff] %vm750, %v882
    %886 = vst.msk [vmem:[%s884 + $0x8] sm:$0xff] %vm750, %v883
    %887 = vset.pattern.permute.xlu0 1
    %888 = vperm.xlu0 %887, %v708
    %v889 = vpop.permute.xlu0 %888
    %891 = vset.pattern.permute.xlu0 1
    %892 = vperm.xlu0 %891, %v713
    %v893 = vpop.permute.xlu0 %892
    %895 = vset.pattern.permute.xlu0 17
    %896 = vperm.xlu0 %895, %v708
    %v897 = vpop.permute.xlu0 %896
    %899 = vset.pattern.permute.xlu0 17
    %900 = vperm.xlu0 %899, %v713
    %v901 = vpop.permute.xlu0 %900
    %v903 = vsel %vm67, %v889, %v897
    %v904 = vsel %vm67, %v893, %v901
    %s905 = scalar_lea.vmem [#allocation4], 16
    %906 = vst.msk [vmem:[%s905] sm:$0xff] %vm750, %v903
    %907 = vst.msk [vmem:[%s905 + $0x8] sm:$0xff] %vm750, %v904
    %v908 = vlaneseq
    %v909 = vshrl.u32 %v908, 7
    %v910 = vsub.s32 2, %v909
    %v911 = vrot.slane %v542, %v910
    %v912 = vmul.f32 %v911, %v722
    %v913 = vmul.f32 %v911, %v723
    %v914 = vlaneseq
    %v915 = vshrl.u32 %v914, 7
    %v916 = vsub.s32 2, %v915
    %v917 = vrot.slane %v544, %v916
    %v918 = vmul.f32 %v917, %v722
    %v919 = vmul.f32 %v917, %v723
    %922 = vrot.lane.b32.xlu0 %v918, 32
    %v923 = vpop.permute.xlu0 %922
    %924 = vrot.lane.b32.xlu0 %v919, 32
    %v925 = vpop.permute.xlu0 %924
    %v928 = vsel %vm67, %v912, %v923
    %v929 = vsel %vm67, %v913, %v925
    %v930 = vmul.f32 %v928, 1.442695
    %v931 = vpow.pop %v930
    %v932 = vmul.f32 %v929, 1.442695
    %v933 = vpow.pop %v932
    %s934 = scalar_lea.vmem [#allocation2], 32
    %935 = vst.msk [vmem:[%s934] sm:$0xff] %vm750, %v931
    %936 = vst.msk [vmem:[%s934 + $0x8] sm:$0xff] %vm750, %v933
    %v937 = vlaneseq
    %v938 = vshrl.u32 %v937, 7
    %v939 = vsub.s32 2, %v938
    %v940 = vrot.slane %v546, %v939
    %941 = vset.pattern.permute.xlu0 2
    %942 = vperm.xlu0 %941, %v625
    %v943 = vpop.permute.xlu0 %942
    %945 = vset.pattern.permute.xlu0 2
    %946 = vperm.xlu0 %945, %v630
    %v947 = vpop.permute.xlu0 %946
    %v949 = vmul.f32 %v940, %v943
    %v950 = vmul.f32 %v940, %v947
    %v951 = vlaneseq
    %v952 = vshrl.u32 %v951, 7
    %v953 = vsub.s32 2, %v952
    %v954 = vrot.slane %v548, %v953
    %955 = vset.pattern.permute.xlu0 18
    %956 = vperm.xlu0 %955, %v625
    %v957 = vpop.permute.xlu0 %956
    %959 = vset.pattern.permute.xlu0 18
    %960 = vperm.xlu0 %959, %v630
    %v961 = vpop.permute.xlu0 %960
    %v963 = vmul.f32 %v954, %v957
    %v964 = vmul.f32 %v954, %v961
    %967 = vrot.lane.b32.xlu0 %v963, 32
    %v968 = vpop.permute.xlu0 %967
    %969 = vrot.lane.b32.xlu0 %v964, 32
    %v970 = vpop.permute.xlu0 %969
    %v973 = vsel %vm67, %v949, %v968
    %v974 = vsel %vm67, %v950, %v970
    %s975 = scalar_lea.vmem [#allocation3], 32
    %976 = vst.msk [vmem:[%s975] sm:$0xff] %vm750, %v973
    %977 = vst.msk [vmem:[%s975 + $0x8] sm:$0xff] %vm750, %v974
    %978 = vset.pattern.permute.xlu0 2
    %979 = vperm.xlu0 %978, %v708
    %v980 = vpop.permute.xlu0 %979
    %982 = vset.pattern.permute.xlu0 2
    %983 = vperm.xlu0 %982, %v713
    %v984 = vpop.permute.xlu0 %983
    %986 = vset.pattern.permute.xlu0 18
    %987 = vperm.xlu0 %986, %v708
    %v988 = vpop.permute.xlu0 %987
    %990 = vset.pattern.permute.xlu0 18
    %991 = vperm.xlu0 %990, %v713
    %v992 = vpop.permute.xlu0 %991
    %v994 = vsel %vm67, %v980, %v988
    %v995 = vsel %vm67, %v984, %v992
    %s996 = scalar_lea.vmem [#allocation4], 32
    %997 = vst.msk [vmem:[%s996] sm:$0xff] %vm750, %v994
    %998 = vst.msk [vmem:[%s996 + $0x8] sm:$0xff] %vm750, %v995
    %v999 = vlaneseq
    %v1000 = vshrl.u32 %v999, 7
    %v1001 = vsub.s32 3, %v1000
    %v1002 = vrot.slane %v542, %v1001
    %v1003 = vmul.f32 %v1002, %v722
    %v1004 = vmul.f32 %v1002, %v723
    %v1005 = vlaneseq
    %v1006 = vshrl.u32 %v1005, 7
    %v1007 = vsub.s32 3, %v1006
    %v1008 = vrot.slane %v544, %v1007
    %v1009 = vmul.f32 %v1008, %v722
    %v1010 = vmul.f32 %v1008, %v723
    %1013 = vrot.lane.b32.xlu0 %v1009, 32
    %v1014 = vpop.permute.xlu0 %1013
    %1015 = vrot.lane.b32.xlu0 %v1010, 32
    %v1016 = vpop.permute.xlu0 %1015
    %v1019 = vsel %vm67, %v1003, %v1014
    %v1020 = vsel %vm67, %v1004, %v1016
    %v1021 = vmul.f32 %v1019, 1.442695
    %v1022 = vpow.pop %v1021
    %v1023 = vmul.f32 %v1020, 1.442695
    %v1024 = vpow.pop %v1023
    %s1025 = scalar_lea.vmem [#allocation2], 48
    %1026 = vst.msk [vmem:[%s1025] sm:$0xff] %vm750, %v1022
    %1027 = vst.msk [vmem:[%s1025 + $0x8] sm:$0xff] %vm750, %v1024
    %v1028 = vlaneseq
    %v1029 = vshrl.u32 %v1028, 7
    %v1030 = vsub.s32 3, %v1029
    %v1031 = vrot.slane %v546, %v1030
    %1032 = vset.pattern.permute.xlu0 3
    %1033 = vperm.xlu0 %1032, %v625
    %v1034 = vpop.permute.xlu0 %1033
    %1036 = vset.pattern.permute.xlu0 3
    %1037 = vperm.xlu0 %1036, %v630
    %v1038 = vpop.permute.xlu0 %1037
    %v1040 = vmul.f32 %v1031, %v1034
    %v1041 = vmul.f32 %v1031, %v1038
    %v1042 = vlaneseq
    %v1043 = vshrl.u32 %v1042, 7
    %v1044 = vsub.s32 3, %v1043
    %v1045 = vrot.slane %v548, %v1044
    %1046 = vset.pattern.permute.xlu0 19
    %1047 = vperm.xlu0 %1046, %v625
    %v1048 = vpop.permute.xlu0 %1047
    %1050 = vset.pattern.permute.xlu0 19
    %1051 = vperm.xlu0 %1050, %v630
    %v1052 = vpop.permute.xlu0 %1051
    %v1054 = vmul.f32 %v1045, %v1048
    %v1055 = vmul.f32 %v1045, %v1052
    %1058 = vrot.lane.b32.xlu0 %v1054, 32
    %v1059 = vpop.permute.xlu0 %1058
    %1060 = vrot.lane.b32.xlu0 %v1055, 32
    %v1061 = vpop.permute.xlu0 %1060
    %v1064 = vsel %vm67, %v1040, %v1059
    %v1065 = vsel %vm67, %v1041, %v1061
    %s1066 = scalar_lea.vmem [#allocation3], 48
    %1067 = vst.msk [vmem:[%s1066] sm:$0xff] %vm750, %v1064
    %1068 = vst.msk [vmem:[%s1066 + $0x8] sm:$0xff] %vm750, %v1065
    %1069 = vset.pattern.permute.xlu0 3
    %1070 = vperm.xlu0 %1069, %v708
    %v1071 = vpop.permute.xlu0 %1070
    %1073 = vset.pattern.permute.xlu0 3
    %1074 = vperm.xlu0 %1073, %v713
    %v1075 = vpop.permute.xlu0 %1074
    %1077 = vset.pattern.permute.xlu0 19
    %1078 = vperm.xlu0 %1077, %v708
    %v1079 = vpop.permute.xlu0 %1078
    %1081 = vset.pattern.permute.xlu0 19
    %1082 = vperm.xlu0 %1081, %v713
    %v1083 = vpop.permute.xlu0 %1082
    %v1085 = vsel %vm67, %v1071, %v1079
    %v1086 = vsel %vm67, %v1075, %v1083
    %s1087 = scalar_lea.vmem [#allocation4], 48
    %1088 = vst.msk [vmem:[%s1087] sm:$0xff] %vm750, %v1085
    %1089 = vst.msk [vmem:[%s1087 + $0x8] sm:$0xff] %vm750, %v1086
    %v1090 = vlaneseq
    %v1091 = vshrl.u32 %v1090, 7
    %v1092 = vsub.s32 4, %v1091
    %v1093 = vrot.slane %v542, %v1092
    %v1094 = vmul.f32 %v1093, %v722
    %v1095 = vmul.f32 %v1093, %v723
    %v1096 = vlaneseq
    %v1097 = vshrl.u32 %v1096, 7
    %v1098 = vsub.s32 4, %v1097
    %v1099 = vrot.slane %v544, %v1098
    %v1100 = vmul.f32 %v1099, %v722
    %v1101 = vmul.f32 %v1099, %v723
    %1104 = vrot.lane.b32.xlu0 %v1100, 32
    %v1105 = vpop.permute.xlu0 %1104
    %1106 = vrot.lane.b32.xlu0 %v1101, 32
    %v1107 = vpop.permute.xlu0 %1106
    %v1110 = vsel %vm67, %v1094, %v1105
    %v1111 = vsel %vm67, %v1095, %v1107
    %v1112 = vmul.f32 %v1110, 1.442695
    %v1113 = vpow.pop %v1112
    %v1114 = vmul.f32 %v1111, 1.442695
    %v1115 = vpow.pop %v1114
    %s1116 = scalar_lea.vmem [#allocation2], 64
    %1117 = vst.msk [vmem:[%s1116] sm:$0xff] %vm750, %v1113
    %1118 = vst.msk [vmem:[%s1116 + $0x8] sm:$0xff] %vm750, %v1115
    %v1119 = vlaneseq
    %v1120 = vshrl.u32 %v1119, 7
    %v1121 = vsub.s32 4, %v1120
    %v1122 = vrot.slane %v546, %v1121
    %1123 = vset.pattern.permute.xlu0 4
    %1124 = vperm.xlu0 %1123, %v625
    %v1125 = vpop.permute.xlu0 %1124
    %1127 = vset.pattern.permute.xlu0 4
    %1128 = vperm.xlu0 %1127, %v630
    %v1129 = vpop.permute.xlu0 %1128
    %v1131 = vmul.f32 %v1122, %v1125
    %v1132 = vmul.f32 %v1122, %v1129
    %v1133 = vlaneseq
    %v1134 = vshrl.u32 %v1133, 7
    %v1135 = vsub.s32 4, %v1134
    %v1136 = vrot.slane %v548, %v1135
    %1137 = vset.pattern.permute.xlu0 20
    %1138 = vperm.xlu0 %1137, %v625
    %v1139 = vpop.permute.xlu0 %1138
    %1141 = vset.pattern.permute.xlu0 20
    %1142 = vperm.xlu0 %1141, %v630
    %v1143 = vpop.permute.xlu0 %1142
    %v1145 = vmul.f32 %v1136, %v1139
    %v1146 = vmul.f32 %v1136, %v1143
    %1149 = vrot.lane.b32.xlu0 %v1145, 32
    %v1150 = vpop.permute.xlu0 %1149
    %1151 = vrot.lane.b32.xlu0 %v1146, 32
    %v1152 = vpop.permute.xlu0 %1151
    %v1155 = vsel %vm67, %v1131, %v1150
    %v1156 = vsel %vm67, %v1132, %v1152
    %s1157 = scalar_lea.vmem [#allocation3], 64
    %1158 = vst.msk [vmem:[%s1157] sm:$0xff] %vm750, %v1155
    %1159 = vst.msk [vmem:[%s1157 + $0x8] sm:$0xff] %vm750, %v1156
    %1160 = vset.pattern.permute.xlu0 4
    %1161 = vperm.xlu0 %1160, %v708
    %v1162 = vpop.permute.xlu0 %1161
    %1164 = vset.pattern.permute.xlu0 4
    %1165 = vperm.xlu0 %1164, %v713
    %v1166 = vpop.permute.xlu0 %1165
    %1168 = vset.pattern.permute.xlu0 20
    %1169 = vperm.xlu0 %1168, %v708
    %v1170 = vpop.permute.xlu0 %1169
    %1172 = vset.pattern.permute.xlu0 20
    %1173 = vperm.xlu0 %1172, %v713
    %v1174 = vpop.permute.xlu0 %1173
    %v1176 = vsel %vm67, %v1162, %v1170
    %v1177 = vsel %vm67, %v1166, %v1174
    %s1178 = scalar_lea.vmem [#allocation4], 64
    %1179 = vst.msk [vmem:[%s1178] sm:$0xff] %vm750, %v1176
    %1180 = vst.msk [vmem:[%s1178 + $0x8] sm:$0xff] %vm750, %v1177
    %v1181 = vlaneseq
    %v1182 = vshrl.u32 %v1181, 7
    %v1183 = vsub.s32 5, %v1182
    %v1184 = vrot.slane %v542, %v1183
    %v1185 = vmul.f32 %v1184, %v722
    %v1186 = vmul.f32 %v1184, %v723
    %v1187 = vlaneseq
    %v1188 = vshrl.u32 %v1187, 7
    %v1189 = vsub.s32 5, %v1188
    %v1190 = vrot.slane %v544, %v1189
    %v1191 = vmul.f32 %v1190, %v722
    %v1192 = vmul.f32 %v1190, %v723
    %1195 = vrot.lane.b32.xlu0 %v1191, 32
    %v1196 = vpop.permute.xlu0 %1195
    %1197 = vrot.lane.b32.xlu0 %v1192, 32
    %v1198 = vpop.permute.xlu0 %1197
    %v1201 = vsel %vm67, %v1185, %v1196
    %v1202 = vsel %vm67, %v1186, %v1198
    %v1203 = vmul.f32 %v1201, 1.442695
    %v1204 = vpow.pop %v1203
    %v1205 = vmul.f32 %v1202, 1.442695
    %v1206 = vpow.pop %v1205
    %s1207 = scalar_lea.vmem [#allocation2], 80
    %1208 = vst.msk [vmem:[%s1207] sm:$0xff] %vm750, %v1204
    %1209 = vst.msk [vmem:[%s1207 + $0x8] sm:$0xff] %vm750, %v1206
    %v1210 = vlaneseq
    %v1211 = vshrl.u32 %v1210, 7
    %v1212 = vsub.s32 5, %v1211
    %v1213 = vrot.slane %v546, %v1212
    %1214 = vset.pattern.permute.xlu0 5
    %1215 = vperm.xlu0 %1214, %v625
    %v1216 = vpop.permute.xlu0 %1215
    %1218 = vset.pattern.permute.xlu0 5
    %1219 = vperm.xlu0 %1218, %v630
    %v1220 = vpop.permute.xlu0 %1219
    %v1222 = vmul.f32 %v1213, %v1216
    %v1223 = vmul.f32 %v1213, %v1220
    %v1224 = vlaneseq
    %v1225 = vshrl.u32 %v1224, 7
    %v1226 = vsub.s32 5, %v1225
    %v1227 = vrot.slane %v548, %v1226
    %1228 = vset.pattern.permute.xlu0 21
    %1229 = vperm.xlu0 %1228, %v625
    %v1230 = vpop.permute.xlu0 %1229
    %1232 = vset.pattern.permute.xlu0 21
    %1233 = vperm.xlu0 %1232, %v630
    %v1234 = vpop.permute.xlu0 %1233
    %v1236 = vmul.f32 %v1227, %v1230
    %v1237 = vmul.f32 %v1227, %v1234
    %1240 = vrot.lane.b32.xlu0 %v1236, 32
    %v1241 = vpop.permute.xlu0 %1240
    %1242 = vrot.lane.b32.xlu0 %v1237, 32
    %v1243 = vpop.permute.xlu0 %1242
    %v1246 = vsel %vm67, %v1222, %v1241
    %v1247 = vsel %vm67, %v1223, %v1243
    %s1248 = scalar_lea.vmem [#allocation3], 80
    %1249 = vst.msk [vmem:[%s1248] sm:$0xff] %vm750, %v1246
    %1250 = vst.msk [vmem:[%s1248 + $0x8] sm:$0xff] %vm750, %v1247
    %1251 = vset.pattern.permute.xlu0 5
    %1252 = vperm.xlu0 %1251, %v708
    %v1253 = vpop.permute.xlu0 %1252
    %1255 = vset.pattern.permute.xlu0 5
    %1256 = vperm.xlu0 %1255, %v713
    %v1257 = vpop.permute.xlu0 %1256
    %1259 = vset.pattern.permute.xlu0 21
    %1260 = vperm.xlu0 %1259, %v708
    %v1261 = vpop.permute.xlu0 %1260
    %1263 = vset.pattern.permute.xlu0 21
    %1264 = vperm.xlu0 %1263, %v713
    %v1265 = vpop.permute.xlu0 %1264
    %v1267 = vsel %vm67, %v1253, %v1261
    %v1268 = vsel %vm67, %v1257, %v1265
    %s1269 = scalar_lea.vmem [#allocation4], 80
    %1270 = vst.msk [vmem:[%s1269] sm:$0xff] %vm750, %v1267
    %1271 = vst.msk [vmem:[%s1269 + $0x8] sm:$0xff] %vm750, %v1268
    %v1272 = vlaneseq
    %v1273 = vshrl.u32 %v1272, 7
    %v1274 = vsub.s32 6, %v1273
    %v1275 = vrot.slane %v542, %v1274
    %v1276 = vmul.f32 %v1275, %v722
    %v1277 = vmul.f32 %v1275, %v723
    %v1278 = vlaneseq
    %v1279 = vshrl.u32 %v1278, 7
    %v1280 = vsub.s32 6, %v1279
    %v1281 = vrot.slane %v544, %v1280
    %v1282 = vmul.f32 %v1281, %v722
    %v1283 = vmul.f32 %v1281, %v723
    %1286 = vrot.lane.b32.xlu0 %v1282, 32
    %v1287 = vpop.permute.xlu0 %1286
    %1288 = vrot.lane.b32.xlu0 %v1283, 32
    %v1289 = vpop.permute.xlu0 %1288
    %v1292 = vsel %vm67, %v1276, %v1287
    %v1293 = vsel %vm67, %v1277, %v1289
    %v1294 = vmul.f32 %v1292, 1.442695
    %v1295 = vpow.pop %v1294
    %v1296 = vmul.f32 %v1293, 1.442695
    %v1297 = vpow.pop %v1296
    %s1298 = scalar_lea.vmem [#allocation2], 96
    %1299 = vst.msk [vmem:[%s1298] sm:$0xff] %vm750, %v1295
    %1300 = vst.msk [vmem:[%s1298 + $0x8] sm:$0xff] %vm750, %v1297
    %v1301 = vlaneseq
    %v1302 = vshrl.u32 %v1301, 7
    %v1303 = vsub.s32 6, %v1302
    %v1304 = vrot.slane %v546, %v1303
    %1305 = vset.pattern.permute.xlu0 6
    %1306 = vperm.xlu0 %1305, %v625
    %v1307 = vpop.permute.xlu0 %1306
    %1309 = vset.pattern.permute.xlu0 6
    %1310 = vperm.xlu0 %1309, %v630
    %v1311 = vpop.permute.xlu0 %1310
    %v1313 = vmul.f32 %v1304, %v1307
    %v1314 = vmul.f32 %v1304, %v1311
    %v1315 = vlaneseq
    %v1316 = vshrl.u32 %v1315, 7
    %v1317 = vsub.s32 6, %v1316
    %v1318 = vrot.slane %v548, %v1317
    %1319 = vset.pattern.permute.xlu0 22
    %1320 = vperm.xlu0 %1319, %v625
    %v1321 = vpop.permute.xlu0 %1320
    %1323 = vset.pattern.permute.xlu0 22
    %1324 = vperm.xlu0 %1323, %v630
    %v1325 = vpop.permute.xlu0 %1324
    %v1327 = vmul.f32 %v1318, %v1321
    %v1328 = vmul.f32 %v1318, %v1325
    %1331 = vrot.lane.b32.xlu0 %v1327, 32
    %v1332 = vpop.permute.xlu0 %1331
    %1333 = vrot.lane.b32.xlu0 %v1328, 32
    %v1334 = vpop.permute.xlu0 %1333
    %v1337 = vsel %vm67, %v1313, %v1332
    %v1338 = vsel %vm67, %v1314, %v1334
    %s1339 = scalar_lea.vmem [#allocation3], 96
    %1340 = vst.msk [vmem:[%s1339] sm:$0xff] %vm750, %v1337
    %1341 = vst.msk [vmem:[%s1339 + $0x8] sm:$0xff] %vm750, %v1338
    %1342 = vset.pattern.permute.xlu0 6
    %1343 = vperm.xlu0 %1342, %v708
    %v1344 = vpop.permute.xlu0 %1343
    %1346 = vset.pattern.permute.xlu0 6
    %1347 = vperm.xlu0 %1346, %v713
    %v1348 = vpop.permute.xlu0 %1347
    %1350 = vset.pattern.permute.xlu0 22
    %1351 = vperm.xlu0 %1350, %v708
    %v1352 = vpop.permute.xlu0 %1351
    %1354 = vset.pattern.permute.xlu0 22
    %1355 = vperm.xlu0 %1354, %v713
    %v1356 = vpop.permute.xlu0 %1355
    %v1358 = vsel %vm67, %v1344, %v1352
    %v1359 = vsel %vm67, %v1348, %v1356
    %s1360 = scalar_lea.vmem [#allocation4], 96
    %1361 = vst.msk [vmem:[%s1360] sm:$0xff] %vm750, %v1358
    %1362 = vst.msk [vmem:[%s1360 + $0x8] sm:$0xff] %vm750, %v1359
    %v1363 = vlaneseq
    %v1364 = vshrl.u32 %v1363, 7
    %v1365 = vsub.s32 7, %v1364
    %v1366 = vrot.slane %v542, %v1365
    %v1367 = vmul.f32 %v1366, %v722
    %v1368 = vmul.f32 %v1366, %v723
    %v1369 = vlaneseq
    %v1370 = vshrl.u32 %v1369, 7
    %v1371 = vsub.s32 7, %v1370
    %v1372 = vrot.slane %v544, %v1371
    %v1373 = vmul.f32 %v1372, %v722
    %v1374 = vmul.f32 %v1372, %v723
    %1377 = vrot.lane.b32.xlu0 %v1373, 32
    %v1378 = vpop.permute.xlu0 %1377
    %1379 = vrot.lane.b32.xlu0 %v1374, 32
    %v1380 = vpop.permute.xlu0 %1379
    %v1383 = vsel %vm67, %v1367, %v1378
    %v1384 = vsel %vm67, %v1368, %v1380
    %v1385 = vmul.f32 %v1383, 1.442695
    %v1386 = vpow.pop %v1385
    %v1387 = vmul.f32 %v1384, 1.442695
    %v1388 = vpow.pop %v1387
    %s1389 = scalar_lea.vmem [#allocation2], 112
    %1390 = vst.msk [vmem:[%s1389] sm:$0xff] %vm750, %v1386
    %1391 = vst.msk [vmem:[%s1389 + $0x8] sm:$0xff] %vm750, %v1388
    %v1392 = vlaneseq
    %v1393 = vshrl.u32 %v1392, 7
    %v1394 = vsub.s32 7, %v1393
    %v1395 = vrot.slane %v546, %v1394
    %1396 = vset.pattern.permute.xlu0 7
    %1397 = vperm.xlu0 %1396, %v625
    %v1398 = vpop.permute.xlu0 %1397
    %1400 = vset.pattern.permute.xlu0 7
    %1401 = vperm.xlu0 %1400, %v630
    %v1402 = vpop.permute.xlu0 %1401
    %v1404 = vmul.f32 %v1395, %v1398
    %v1405 = vmul.f32 %v1395, %v1402
    %v1406 = vlaneseq
    %v1407 = vshrl.u32 %v1406, 7
    %v1408 = vsub.s32 7, %v1407
    %v1409 = vrot.slane %v548, %v1408
    %1410 = vset.pattern.permute.xlu0 23
    %1411 = vperm.xlu0 %1410, %v625
    %v1412 = vpop.permute.xlu0 %1411
    %1414 = vset.pattern.permute.xlu0 23
    %1415 = vperm.xlu0 %1414, %v630
    %v1416 = vpop.permute.xlu0 %1415
    %v1418 = vmul.f32 %v1409, %v1412
    %v1419 = vmul.f32 %v1409, %v1416
    %1422 = vrot.lane.b32.xlu0 %v1418, 32
    %v1423 = vpop.permute.xlu0 %1422
    %1424 = vrot.lane.b32.xlu0 %v1419, 32
    %v1425 = vpop.permute.xlu0 %1424
    %v1428 = vsel %vm67, %v1404, %v1423
    %v1429 = vsel %vm67, %v1405, %v1425
    %s1430 = scalar_lea.vmem [#allocation3], 112
    %1431 = vst.msk [vmem:[%s1430] sm:$0xff] %vm750, %v1428
    %1432 = vst.msk [vmem:[%s1430 + $0x8] sm:$0xff] %vm750, %v1429
    %1433 = vset.pattern.permute.xlu0 7
    %1434 = vperm.xlu0 %1433, %v708
    %v1435 = vpop.permute.xlu0 %1434
    %1437 = vset.pattern.permute.xlu0 7
    %1438 = vperm.xlu0 %1437, %v713
    %v1439 = vpop.permute.xlu0 %1438
    %1441 = vset.pattern.permute.xlu0 23
    %1442 = vperm.xlu0 %1441, %v708
    %v1443 = vpop.permute.xlu0 %1442
    %1445 = vset.pattern.permute.xlu0 23
    %1446 = vperm.xlu0 %1445, %v713
    %v1447 = vpop.permute.xlu0 %1446
    %v1449 = vsel %vm67, %v1435, %v1443
    %v1450 = vsel %vm67, %v1439, %v1447
    %s1451 = scalar_lea.vmem [#allocation4], 112
    %1452 = vst.msk [vmem:[%s1451] sm:$0xff] %vm750, %v1449
    %1453 = vst.msk [vmem:[%s1451 + $0x8] sm:$0xff] %vm750, %v1450
    %v1454 = vlaneseq
    %v1455 = vshrl.u32 %v1454, 7
    %v1456 = vsub.s32 0, %v1455
    %v1457 = vrot.slane %v543, %v1456
    %v1458 = vmul.f32 %v1457, %v722
    %v1459 = vmul.f32 %v1457, %v723
    %v1460 = vlaneseq
    %v1461 = vshrl.u32 %v1460, 7
    %v1462 = vsub.s32 0, %v1461
    %v1463 = vrot.slane %v545, %v1462
    %v1464 = vmul.f32 %v1463, %v722
    %v1465 = vmul.f32 %v1463, %v723
    %1468 = vrot.lane.b32.xlu0 %v1464, 32
    %v1469 = vpop.permute.xlu0 %1468
    %1470 = vrot.lane.b32.xlu0 %v1465, 32
    %v1471 = vpop.permute.xlu0 %1470
    %v1474 = vsel %vm67, %v1458, %v1469
    %v1475 = vsel %vm67, %v1459, %v1471
    %v1476 = vmul.f32 %v1474, 1.442695
    %v1477 = vpow.pop %v1476
    %v1478 = vmul.f32 %v1475, 1.442695
    %v1479 = vpow.pop %v1478
    %s1480 = scalar_lea.vmem [#allocation2], 128
    %1481 = vst.msk [vmem:[%s1480] sm:$0xff] %vm750, %v1477
    %1482 = vst.msk [vmem:[%s1480 + $0x8] sm:$0xff] %vm750, %v1479
    %v1483 = vlaneseq
    %v1484 = vshrl.u32 %v1483, 7
    %v1485 = vsub.s32 0, %v1484
    %v1486 = vrot.slane %v547, %v1485
    %1487 = vset.pattern.permute.xlu0 8
    %1488 = vperm.xlu0 %1487, %v625
    %v1489 = vpop.permute.xlu0 %1488
    %1491 = vset.pattern.permute.xlu0 8
    %1492 = vperm.xlu0 %1491, %v630
    %v1493 = vpop.permute.xlu0 %1492
    %v1495 = vmul.f32 %v1486, %v1489
    %v1496 = vmul.f32 %v1486, %v1493
    %v1497 = vlaneseq
    %v1498 = vshrl.u32 %v1497, 7
    %v1499 = vsub.s32 0, %v1498
    %v1500 = vrot.slane %v549, %v1499
    %1501 = vset.pattern.permute.xlu0 24
    %1502 = vperm.xlu0 %1501, %v625
    %v1503 = vpop.permute.xlu0 %1502
    %1505 = vset.pattern.permute.xlu0 24
    %1506 = vperm.xlu0 %1505, %v630
    %v1507 = vpop.permute.xlu0 %1506
    %v1509 = vmul.f32 %v1500, %v1503
    %v1510 = vmul.f32 %v1500, %v1507
    %1513 = vrot.lane.b32.xlu0 %v1509, 32
    %v1514 = vpop.permute.xlu0 %1513
    %1515 = vrot.lane.b32.xlu0 %v1510, 32
    %v1516 = vpop.permute.xlu0 %1515
    %v1519 = vsel %vm67, %v1495, %v1514
    %v1520 = vsel %vm67, %v1496, %v1516
    %s1521 = scalar_lea.vmem [#allocation3], 128
    %1522 = vst.msk [vmem:[%s1521] sm:$0xff] %vm750, %v1519
    %1523 = vst.msk [vmem:[%s1521 + $0x8] sm:$0xff] %vm750, %v1520
    %1524 = vset.pattern.permute.xlu0 8
    %1525 = vperm.xlu0 %1524, %v708
    %v1526 = vpop.permute.xlu0 %1525
    %1528 = vset.pattern.permute.xlu0 8
    %1529 = vperm.xlu0 %1528, %v713
    %v1530 = vpop.permute.xlu0 %1529
    %1532 = vset.pattern.permute.xlu0 24
    %1533 = vperm.xlu0 %1532, %v708
    %v1534 = vpop.permute.xlu0 %1533
    %1536 = vset.pattern.permute.xlu0 24
    %1537 = vperm.xlu0 %1536, %v713
    %v1538 = vpop.permute.xlu0 %1537
    %v1540 = vsel %vm67, %v1526, %v1534
    %v1541 = vsel %vm67, %v1530, %v1538
    %s1542 = scalar_lea.vmem [#allocation4], 128
    %1543 = vst.msk [vmem:[%s1542] sm:$0xff] %vm750, %v1540
    %1544 = vst.msk [vmem:[%s1542 + $0x8] sm:$0xff] %vm750, %v1541
    %v1545 = vlaneseq
    %v1546 = vshrl.u32 %v1545, 7
    %v1547 = vsub.s32 1, %v1546
    %v1548 = vrot.slane %v543, %v1547
    %v1549 = vmul.f32 %v1548, %v722
    %v1550 = vmul.f32 %v1548, %v723
    %v1551 = vlaneseq
    %v1552 = vshrl.u32 %v1551, 7
    %v1553 = vsub.s32 1, %v1552
    %v1554 = vrot.slane %v545, %v1553
    %v1555 = vmul.f32 %v1554, %v722
    %v1556 = vmul.f32 %v1554, %v723
    %1559 = vrot.lane.b32.xlu0 %v1555, 32
    %v1560 = vpop.permute.xlu0 %1559
    %1561 = vrot.lane.b32.xlu0 %v1556, 32
    %v1562 = vpop.permute.xlu0 %1561
    %v1565 = vsel %vm67, %v1549, %v1560
    %v1566 = vsel %vm67, %v1550, %v1562
    %v1567 = vmul.f32 %v1565, 1.442695
    %v1568 = vpow.pop %v1567
    %v1569 = vmul.f32 %v1566, 1.442695
    %v1570 = vpow.pop %v1569
    %s1571 = scalar_lea.vmem [#allocation2], 144
    %1572 = vst.msk [vmem:[%s1571] sm:$0xff] %vm750, %v1568
    %1573 = vst.msk [vmem:[%s1571 + $0x8] sm:$0xff] %vm750, %v1570
    %v1574 = vlaneseq
    %v1575 = vshrl.u32 %v1574, 7
    %v1576 = vsub.s32 1, %v1575
    %v1577 = vrot.slane %v547, %v1576
    %1578 = vset.pattern.permute.xlu0 9
    %1579 = vperm.xlu0 %1578, %v625
    %v1580 = vpop.permute.xlu0 %1579
    %1582 = vset.pattern.permute.xlu0 9
    %1583 = vperm.xlu0 %1582, %v630
    %v1584 = vpop.permute.xlu0 %1583
    %v1586 = vmul.f32 %v1577, %v1580
    %v1587 = vmul.f32 %v1577, %v1584
    %v1588 = vlaneseq
    %v1589 = vshrl.u32 %v1588, 7
    %v1590 = vsub.s32 1, %v1589
    %v1591 = vrot.slane %v549, %v1590
    %1592 = vset.pattern.permute.xlu0 25
    %1593 = vperm.xlu0 %1592, %v625
    %v1594 = vpop.permute.xlu0 %1593
    %1596 = vset.pattern.permute.xlu0 25
    %1597 = vperm.xlu0 %1596, %v630
    %v1598 = vpop.permute.xlu0 %1597
    %v1600 = vmul.f32 %v1591, %v1594
    %v1601 = vmul.f32 %v1591, %v1598
    %1604 = vrot.lane.b32.xlu0 %v1600, 32
    %v1605 = vpop.permute.xlu0 %1604
    %1606 = vrot.lane.b32.xlu0 %v1601, 32
    %v1607 = vpop.permute.xlu0 %1606
    %v1610 = vsel %vm67, %v1586, %v1605
    %v1611 = vsel %vm67, %v1587, %v1607
    %s1612 = scalar_lea.vmem [#allocation3], 144
    %1613 = vst.msk [vmem:[%s1612] sm:$0xff] %vm750, %v1610
    %1614 = vst.msk [vmem:[%s1612 + $0x8] sm:$0xff] %vm750, %v1611
    %1615 = vset.pattern.permute.xlu0 9
    %1616 = vperm.xlu0 %1615, %v708
    %v1617 = vpop.permute.xlu0 %1616
    %1619 = vset.pattern.permute.xlu0 9
    %1620 = vperm.xlu0 %1619, %v713
    %v1621 = vpop.permute.xlu0 %1620
    %1623 = vset.pattern.permute.xlu0 25
    %1624 = vperm.xlu0 %1623, %v708
    %v1625 = vpop.permute.xlu0 %1624
    %1627 = vset.pattern.permute.xlu0 25
    %1628 = vperm.xlu0 %1627, %v713
    %v1629 = vpop.permute.xlu0 %1628
    %v1631 = vsel %vm67, %v1617, %v1625
    %v1632 = vsel %vm67, %v1621, %v1629
    %s1633 = scalar_lea.vmem [#allocation4], 144
    %1634 = vst.msk [vmem:[%s1633] sm:$0xff] %vm750, %v1631
    %1635 = vst.msk [vmem:[%s1633 + $0x8] sm:$0xff] %vm750, %v1632
    %v1636 = vlaneseq
    %v1637 = vshrl.u32 %v1636, 7
    %v1638 = vsub.s32 2, %v1637
    %v1639 = vrot.slane %v543, %v1638
    %v1640 = vmul.f32 %v1639, %v722
    %v1641 = vmul.f32 %v1639, %v723
    %v1642 = vlaneseq
    %v1643 = vshrl.u32 %v1642, 7
    %v1644 = vsub.s32 2, %v1643
    %v1645 = vrot.slane %v545, %v1644
    %v1646 = vmul.f32 %v1645, %v722
    %v1647 = vmul.f32 %v1645, %v723
    %1650 = vrot.lane.b32.xlu0 %v1646, 32
    %v1651 = vpop.permute.xlu0 %1650
    %1652 = vrot.lane.b32.xlu0 %v1647, 32
    %v1653 = vpop.permute.xlu0 %1652
    %v1656 = vsel %vm67, %v1640, %v1651
    %v1657 = vsel %vm67, %v1641, %v1653
    %v1658 = vmul.f32 %v1656, 1.442695
    %v1659 = vpow.pop %v1658
    %v1660 = vmul.f32 %v1657, 1.442695
    %v1661 = vpow.pop %v1660
    %s1662 = scalar_lea.vmem [#allocation2], 160
    %1663 = vst.msk [vmem:[%s1662] sm:$0xff] %vm750, %v1659
    %1664 = vst.msk [vmem:[%s1662 + $0x8] sm:$0xff] %vm750, %v1661
    %v1665 = vlaneseq
    %v1666 = vshrl.u32 %v1665, 7
    %v1667 = vsub.s32 2, %v1666
    %v1668 = vrot.slane %v547, %v1667
    %1669 = vset.pattern.permute.xlu0 10
    %1670 = vperm.xlu0 %1669, %v625
    %v1671 = vpop.permute.xlu0 %1670
    %1673 = vset.pattern.permute.xlu0 10
    %1674 = vperm.xlu0 %1673, %v630
    %v1675 = vpop.permute.xlu0 %1674
    %v1677 = vmul.f32 %v1668, %v1671
    %v1678 = vmul.f32 %v1668, %v1675
    %v1679 = vlaneseq
    %v1680 = vshrl.u32 %v1679, 7
    %v1681 = vsub.s32 2, %v1680
    %v1682 = vrot.slane %v549, %v1681
    %1683 = vset.pattern.permute.xlu0 26
    %1684 = vperm.xlu0 %1683, %v625
    %v1685 = vpop.permute.xlu0 %1684
    %1687 = vset.pattern.permute.xlu0 26
    %1688 = vperm.xlu0 %1687, %v630
    %v1689 = vpop.permute.xlu0 %1688
    %v1691 = vmul.f32 %v1682, %v1685
    %v1692 = vmul.f32 %v1682, %v1689
    %1695 = vrot.lane.b32.xlu0 %v1691, 32
    %v1696 = vpop.permute.xlu0 %1695
    %1697 = vrot.lane.b32.xlu0 %v1692, 32
    %v1698 = vpop.permute.xlu0 %1697
    %v1701 = vsel %vm67, %v1677, %v1696
    %v1702 = vsel %vm67, %v1678, %v1698
    %s1703 = scalar_lea.vmem [#allocation3], 160
    %1704 = vst.msk [vmem:[%s1703] sm:$0xff] %vm750, %v1701
    %1705 = vst.msk [vmem:[%s1703 + $0x8] sm:$0xff] %vm750, %v1702
    %1706 = vset.pattern.permute.xlu0 10
    %1707 = vperm.xlu0 %1706, %v708
    %v1708 = vpop.permute.xlu0 %1707
    %1710 = vset.pattern.permute.xlu0 10
    %1711 = vperm.xlu0 %1710, %v713
    %v1712 = vpop.permute.xlu0 %1711
    %1714 = vset.pattern.permute.xlu0 26
    %1715 = vperm.xlu0 %1714, %v708
    %v1716 = vpop.permute.xlu0 %1715
    %1718 = vset.pattern.permute.xlu0 26
    %1719 = vperm.xlu0 %1718, %v713
    %v1720 = vpop.permute.xlu0 %1719
    %v1722 = vsel %vm67, %v1708, %v1716
    %v1723 = vsel %vm67, %v1712, %v1720
    %s1724 = scalar_lea.vmem [#allocation4], 160
    %1725 = vst.msk [vmem:[%s1724] sm:$0xff] %vm750, %v1722
    %1726 = vst.msk [vmem:[%s1724 + $0x8] sm:$0xff] %vm750, %v1723
    %v1727 = vlaneseq
    %v1728 = vshrl.u32 %v1727, 7
    %v1729 = vsub.s32 3, %v1728
    %v1730 = vrot.slane %v543, %v1729
    %v1731 = vmul.f32 %v1730, %v722
    %v1732 = vmul.f32 %v1730, %v723
    %v1733 = vlaneseq
    %v1734 = vshrl.u32 %v1733, 7
    %v1735 = vsub.s32 3, %v1734
    %v1736 = vrot.slane %v545, %v1735
    %v1737 = vmul.f32 %v1736, %v722
    %v1738 = vmul.f32 %v1736, %v723
    %1741 = vrot.lane.b32.xlu0 %v1737, 32
    %v1742 = vpop.permute.xlu0 %1741
    %1743 = vrot.lane.b32.xlu0 %v1738, 32
    %v1744 = vpop.permute.xlu0 %1743
    %v1747 = vsel %vm67, %v1731, %v1742
    %v1748 = vsel %vm67, %v1732, %v1744
    %v1749 = vmul.f32 %v1747, 1.442695
    %v1750 = vpow.pop %v1749
    %v1751 = vmul.f32 %v1748, 1.442695
    %v1752 = vpow.pop %v1751
    %s1753 = scalar_lea.vmem [#allocation2], 176
    %1754 = vst.msk [vmem:[%s1753] sm:$0xff] %vm750, %v1750
    %1755 = vst.msk [vmem:[%s1753 + $0x8] sm:$0xff] %vm750, %v1752
    %v1756 = vlaneseq
    %v1757 = vshrl.u32 %v1756, 7
    %v1758 = vsub.s32 3, %v1757
    %v1759 = vrot.slane %v547, %v1758
    %1760 = vset.pattern.permute.xlu0 11
    %1761 = vperm.xlu0 %1760, %v625
    %v1762 = vpop.permute.xlu0 %1761
    %1764 = vset.pattern.permute.xlu0 11
    %1765 = vperm.xlu0 %1764, %v630
    %v1766 = vpop.permute.xlu0 %1765
    %v1768 = vmul.f32 %v1759, %v1762
    %v1769 = vmul.f32 %v1759, %v1766
    %v1770 = vlaneseq
    %v1771 = vshrl.u32 %v1770, 7
    %v1772 = vsub.s32 3, %v1771
    %v1773 = vrot.slane %v549, %v1772
    %1774 = vset.pattern.permute.xlu0 27
    %1775 = vperm.xlu0 %1774, %v625
    %v1776 = vpop.permute.xlu0 %1775
    %1778 = vset.pattern.permute.xlu0 27
    %1779 = vperm.xlu0 %1778, %v630
    %v1780 = vpop.permute.xlu0 %1779
    %v1782 = vmul.f32 %v1773, %v1776
    %v1783 = vmul.f32 %v1773, %v1780
    %1786 = vrot.lane.b32.xlu0 %v1782, 32
    %v1787 = vpop.permute.xlu0 %1786
    %1788 = vrot.lane.b32.xlu0 %v1783, 32
    %v1789 = vpop.permute.xlu0 %1788
    %v1792 = vsel %vm67, %v1768, %v1787
    %v1793 = vsel %vm67, %v1769, %v1789
    %s1794 = scalar_lea.vmem [#allocation3], 176
    %1795 = vst.msk [vmem:[%s1794] sm:$0xff] %vm750, %v1792
    %1796 = vst.msk [vmem:[%s1794 + $0x8] sm:$0xff] %vm750, %v1793
    %1797 = vset.pattern.permute.xlu0 11
    %1798 = vperm.xlu0 %1797, %v708
    %v1799 = vpop.permute.xlu0 %1798
    %1801 = vset.pattern.permute.xlu0 11
    %1802 = vperm.xlu0 %1801, %v713
    %v1803 = vpop.permute.xlu0 %1802
    %1805 = vset.pattern.permute.xlu0 27
    %1806 = vperm.xlu0 %1805, %v708
    %v1807 = vpop.permute.xlu0 %1806
    %1809 = vset.pattern.permute.xlu0 27
    %1810 = vperm.xlu0 %1809, %v713
    %v1811 = vpop.permute.xlu0 %1810
    %v1813 = vsel %vm67, %v1799, %v1807
    %v1814 = vsel %vm67, %v1803, %v1811
    %s1815 = scalar_lea.vmem [#allocation4], 176
    %1816 = vst.msk [vmem:[%s1815] sm:$0xff] %vm750, %v1813
    %1817 = vst.msk [vmem:[%s1815 + $0x8] sm:$0xff] %vm750, %v1814
    %v1818 = vlaneseq
    %v1819 = vshrl.u32 %v1818, 7
    %v1820 = vsub.s32 4, %v1819
    %v1821 = vrot.slane %v543, %v1820
    %v1822 = vmul.f32 %v1821, %v722
    %v1823 = vmul.f32 %v1821, %v723
    %v1824 = vlaneseq
    %v1825 = vshrl.u32 %v1824, 7
    %v1826 = vsub.s32 4, %v1825
    %v1827 = vrot.slane %v545, %v1826
    %v1828 = vmul.f32 %v1827, %v722
    %v1829 = vmul.f32 %v1827, %v723
    %1832 = vrot.lane.b32.xlu0 %v1828, 32
    %v1833 = vpop.permute.xlu0 %1832
    %1834 = vrot.lane.b32.xlu0 %v1829, 32
    %v1835 = vpop.permute.xlu0 %1834
    %v1838 = vsel %vm67, %v1822, %v1833
    %v1839 = vsel %vm67, %v1823, %v1835
    %v1840 = vmul.f32 %v1838, 1.442695
    %v1841 = vpow.pop %v1840
    %v1842 = vmul.f32 %v1839, 1.442695
    %v1843 = vpow.pop %v1842
    %s1844 = scalar_lea.vmem [#allocation2], 192
    %1845 = vst.msk [vmem:[%s1844] sm:$0xff] %vm750, %v1841
    %1846 = vst.msk [vmem:[%s1844 + $0x8] sm:$0xff] %vm750, %v1843
    %v1847 = vlaneseq
    %v1848 = vshrl.u32 %v1847, 7
    %v1849 = vsub.s32 4, %v1848
    %v1850 = vrot.slane %v547, %v1849
    %1851 = vset.pattern.permute.xlu0 12
    %1852 = vperm.xlu0 %1851, %v625
    %v1853 = vpop.permute.xlu0 %1852
    %1855 = vset.pattern.permute.xlu0 12
    %1856 = vperm.xlu0 %1855, %v630
    %v1857 = vpop.permute.xlu0 %1856
    %v1859 = vmul.f32 %v1850, %v1853
    %v1860 = vmul.f32 %v1850, %v1857
    %v1861 = vlaneseq
    %v1862 = vshrl.u32 %v1861, 7
    %v1863 = vsub.s32 4, %v1862
    %v1864 = vrot.slane %v549, %v1863
    %1865 = vset.pattern.permute.xlu0 28
    %1866 = vperm.xlu0 %1865, %v625
    %v1867 = vpop.permute.xlu0 %1866
    %1869 = vset.pattern.permute.xlu0 28
    %1870 = vperm.xlu0 %1869, %v630
    %v1871 = vpop.permute.xlu0 %1870
    %v1873 = vmul.f32 %v1864, %v1867
    %v1874 = vmul.f32 %v1864, %v1871
    %1877 = vrot.lane.b32.xlu0 %v1873, 32
    %v1878 = vpop.permute.xlu0 %1877
    %1879 = vrot.lane.b32.xlu0 %v1874, 32
    %v1880 = vpop.permute.xlu0 %1879
    %v1883 = vsel %vm67, %v1859, %v1878
    %v1884 = vsel %vm67, %v1860, %v1880
    %s1885 = scalar_lea.vmem [#allocation3], 192
    %1886 = vst.msk [vmem:[%s1885] sm:$0xff] %vm750, %v1883
    %1887 = vst.msk [vmem:[%s1885 + $0x8] sm:$0xff] %vm750, %v1884
    %1888 = vset.pattern.permute.xlu0 12
    %1889 = vperm.xlu0 %1888, %v708
    %v1890 = vpop.permute.xlu0 %1889
    %1892 = vset.pattern.permute.xlu0 12
    %1893 = vperm.xlu0 %1892, %v713
    %v1894 = vpop.permute.xlu0 %1893
    %1896 = vset.pattern.permute.xlu0 28
    %1897 = vperm.xlu0 %1896, %v708
    %v1898 = vpop.permute.xlu0 %1897
    %1900 = vset.pattern.permute.xlu0 28
    %1901 = vperm.xlu0 %1900, %v713
    %v1902 = vpop.permute.xlu0 %1901
    %v1904 = vsel %vm67, %v1890, %v1898
    %v1905 = vsel %vm67, %v1894, %v1902
    %s1906 = scalar_lea.vmem [#allocation4], 192
    %1907 = vst.msk [vmem:[%s1906] sm:$0xff] %vm750, %v1904
    %1908 = vst.msk [vmem:[%s1906 + $0x8] sm:$0xff] %vm750, %v1905
    %v1909 = vlaneseq
    %v1910 = vshrl.u32 %v1909, 7
    %v1911 = vsub.s32 5, %v1910
    %v1912 = vrot.slane %v543, %v1911
    %v1913 = vmul.f32 %v1912, %v722
    %v1914 = vmul.f32 %v1912, %v723
    %v1915 = vlaneseq
    %v1916 = vshrl.u32 %v1915, 7
    %v1917 = vsub.s32 5, %v1916
    %v1918 = vrot.slane %v545, %v1917
    %v1919 = vmul.f32 %v1918, %v722
    %v1920 = vmul.f32 %v1918, %v723
    %1923 = vrot.lane.b32.xlu0 %v1919, 32
    %v1924 = vpop.permute.xlu0 %1923
    %1925 = vrot.lane.b32.xlu0 %v1920, 32
    %v1926 = vpop.permute.xlu0 %1925
    %v1929 = vsel %vm67, %v1913, %v1924
    %v1930 = vsel %vm67, %v1914, %v1926
    %v1931 = vmul.f32 %v1929, 1.442695
    %v1932 = vpow.pop %v1931
    %v1933 = vmul.f32 %v1930, 1.442695
    %v1934 = vpow.pop %v1933
    %s1935 = scalar_lea.vmem [#allocation2], 208
    %1936 = vst.msk [vmem:[%s1935] sm:$0xff] %vm750, %v1932
    %1937 = vst.msk [vmem:[%s1935 + $0x8] sm:$0xff] %vm750, %v1934
    %v1938 = vlaneseq
    %v1939 = vshrl.u32 %v1938, 7
    %v1940 = vsub.s32 5, %v1939
    %v1941 = vrot.slane %v547, %v1940
    %1942 = vset.pattern.permute.xlu0 13
    %1943 = vperm.xlu0 %1942, %v625
    %v1944 = vpop.permute.xlu0 %1943
    %1946 = vset.pattern.permute.xlu0 13
    %1947 = vperm.xlu0 %1946, %v630
    %v1948 = vpop.permute.xlu0 %1947
    %v1950 = vmul.f32 %v1941, %v1944
    %v1951 = vmul.f32 %v1941, %v1948
    %v1952 = vlaneseq
    %v1953 = vshrl.u32 %v1952, 7
    %v1954 = vsub.s32 5, %v1953
    %v1955 = vrot.slane %v549, %v1954
    %1956 = vset.pattern.permute.xlu0 29
    %1957 = vperm.xlu0 %1956, %v625
    %v1958 = vpop.permute.xlu0 %1957
    %1960 = vset.pattern.permute.xlu0 29
    %1961 = vperm.xlu0 %1960, %v630
    %v1962 = vpop.permute.xlu0 %1961
    %v1964 = vmul.f32 %v1955, %v1958
    %v1965 = vmul.f32 %v1955, %v1962
    %1968 = vrot.lane.b32.xlu0 %v1964, 32
    %v1969 = vpop.permute.xlu0 %1968
    %1970 = vrot.lane.b32.xlu0 %v1965, 32
    %v1971 = vpop.permute.xlu0 %1970
    %v1974 = vsel %vm67, %v1950, %v1969
    %v1975 = vsel %vm67, %v1951, %v1971
    %s1976 = scalar_lea.vmem [#allocation3], 208
    %1977 = vst.msk [vmem:[%s1976] sm:$0xff] %vm750, %v1974
    %1978 = vst.msk [vmem:[%s1976 + $0x8] sm:$0xff] %vm750, %v1975
    %1979 = vset.pattern.permute.xlu0 13
    %1980 = vperm.xlu0 %1979, %v708
    %v1981 = vpop.permute.xlu0 %1980
    %1983 = vset.pattern.permute.xlu0 13
    %1984 = vperm.xlu0 %1983, %v713
    %v1985 = vpop.permute.xlu0 %1984
    %1987 = vset.pattern.permute.xlu0 29
    %1988 = vperm.xlu0 %1987, %v708
    %v1989 = vpop.permute.xlu0 %1988
    %1991 = vset.pattern.permute.xlu0 29
    %1992 = vperm.xlu0 %1991, %v713
    %v1993 = vpop.permute.xlu0 %1992
    %v1995 = vsel %vm67, %v1981, %v1989
    %v1996 = vsel %vm67, %v1985, %v1993
    %s1997 = scalar_lea.vmem [#allocation4], 208
    %1998 = vst.msk [vmem:[%s1997] sm:$0xff] %vm750, %v1995
    %1999 = vst.msk [vmem:[%s1997 + $0x8] sm:$0xff] %vm750, %v1996
    %v2000 = vlaneseq
    %v2001 = vshrl.u32 %v2000, 7
    %v2002 = vsub.s32 6, %v2001
    %v2003 = vrot.slane %v543, %v2002
    %v2004 = vmul.f32 %v2003, %v722
    %v2005 = vmul.f32 %v2003, %v723
    %v2006 = vlaneseq
    %v2007 = vshrl.u32 %v2006, 7
    %v2008 = vsub.s32 6, %v2007
    %v2009 = vrot.slane %v545, %v2008
    %v2010 = vmul.f32 %v2009, %v722
    %v2011 = vmul.f32 %v2009, %v723
    %2014 = vrot.lane.b32.xlu0 %v2010, 32
    %v2015 = vpop.permute.xlu0 %2014
    %2016 = vrot.lane.b32.xlu0 %v2011, 32
    %v2017 = vpop.permute.xlu0 %2016
    %v2020 = vsel %vm67, %v2004, %v2015
    %v2021 = vsel %vm67, %v2005, %v2017
    %v2022 = vmul.f32 %v2020, 1.442695
    %v2023 = vpow.pop %v2022
    %v2024 = vmul.f32 %v2021, 1.442695
    %v2025 = vpow.pop %v2024
    %s2026 = scalar_lea.vmem [#allocation2], 224
    %2027 = vst.msk [vmem:[%s2026] sm:$0xff] %vm750, %v2023
    %2028 = vst.msk [vmem:[%s2026 + $0x8] sm:$0xff] %vm750, %v2025
    %v2029 = vlaneseq
    %v2030 = vshrl.u32 %v2029, 7
    %v2031 = vsub.s32 6, %v2030
    %v2032 = vrot.slane %v547, %v2031
    %2033 = vset.pattern.permute.xlu0 14
    %2034 = vperm.xlu0 %2033, %v625
    %v2035 = vpop.permute.xlu0 %2034
    %2037 = vset.pattern.permute.xlu0 14
    %2038 = vperm.xlu0 %2037, %v630
    %v2039 = vpop.permute.xlu0 %2038
    %v2041 = vmul.f32 %v2032, %v2035
    %v2042 = vmul.f32 %v2032, %v2039
    %v2043 = vlaneseq
    %v2044 = vshrl.u32 %v2043, 7
    %v2045 = vsub.s32 6, %v2044
    %v2046 = vrot.slane %v549, %v2045
    %2047 = vset.pattern.permute.xlu0 30
    %2048 = vperm.xlu0 %2047, %v625
    %v2049 = vpop.permute.xlu0 %2048
    %2051 = vset.pattern.permute.xlu0 30
    %2052 = vperm.xlu0 %2051, %v630
    %v2053 = vpop.permute.xlu0 %2052
    %v2055 = vmul.f32 %v2046, %v2049
    %v2056 = vmul.f32 %v2046, %v2053
    %2059 = vrot.lane.b32.xlu0 %v2055, 32
    %v2060 = vpop.permute.xlu0 %2059
    %2061 = vrot.lane.b32.xlu0 %v2056, 32
    %v2062 = vpop.permute.xlu0 %2061
    %v2065 = vsel %vm67, %v2041, %v2060
    %v2066 = vsel %vm67, %v2042, %v2062
    %s2067 = scalar_lea.vmem [#allocation3], 224
    %2068 = vst.msk [vmem:[%s2067] sm:$0xff] %vm750, %v2065
    %2069 = vst.msk [vmem:[%s2067 + $0x8] sm:$0xff] %vm750, %v2066
    %2070 = vset.pattern.permute.xlu0 14
    %2071 = vperm.xlu0 %2070, %v708
    %v2072 = vpop.permute.xlu0 %2071
    %2074 = vset.pattern.permute.xlu0 14
    %2075 = vperm.xlu0 %2074, %v713
    %v2076 = vpop.permute.xlu0 %2075
    %2078 = vset.pattern.permute.xlu0 30
    %2079 = vperm.xlu0 %2078, %v708
    %v2080 = vpop.permute.xlu0 %2079
    %2082 = vset.pattern.permute.xlu0 30
    %2083 = vperm.xlu0 %2082, %v713
    %v2084 = vpop.permute.xlu0 %2083
    %v2086 = vsel %vm67, %v2072, %v2080
    %v2087 = vsel %vm67, %v2076, %v2084
    %s2088 = scalar_lea.vmem [#allocation4], 224
    %2089 = vst.msk [vmem:[%s2088] sm:$0xff] %vm750, %v2086
    %2090 = vst.msk [vmem:[%s2088 + $0x8] sm:$0xff] %vm750, %v2087
    %v2091 = vlaneseq
    %v2092 = vshrl.u32 %v2091, 7
    %v2093 = vsub.s32 7, %v2092
    %v2094 = vrot.slane %v543, %v2093
    %v2095 = vmul.f32 %v2094, %v722
    %v2096 = vmul.f32 %v2094, %v723
    %v2097 = vlaneseq
    %v2098 = vshrl.u32 %v2097, 7
    %v2099 = vsub.s32 7, %v2098
    %v2100 = vrot.slane %v545, %v2099
    %v2101 = vmul.f32 %v2100, %v722
    %v2102 = vmul.f32 %v2100, %v723
    %2105 = vrot.lane.b32.xlu0 %v2101, 32
    %v2106 = vpop.permute.xlu0 %2105
    %2107 = vrot.lane.b32.xlu0 %v2102, 32
    %v2108 = vpop.permute.xlu0 %2107
    %v2111 = vsel %vm67, %v2095, %v2106
    %v2112 = vsel %vm67, %v2096, %v2108
    %v2113 = vmul.f32 %v2111, 1.442695
    %v2114 = vpow.pop %v2113
    %v2115 = vmul.f32 %v2112, 1.442695
    %v2116 = vpow.pop %v2115
    %s2117 = scalar_lea.vmem [#allocation2], 240
    %2118 = vst.msk [vmem:[%s2117] sm:$0xff] %vm750, %v2114
    %2119 = vst.msk [vmem:[%s2117 + $0x8] sm:$0xff] %vm750, %v2116
    %v2120 = vlaneseq
    %v2121 = vshrl.u32 %v2120, 7
    %v2122 = vsub.s32 7, %v2121
    %v2123 = vrot.slane %v547, %v2122
    %2124 = vset.pattern.permute.xlu0 15
    %2125 = vperm.xlu0 %2124, %v625
    %v2126 = vpop.permute.xlu0 %2125
    %2128 = vset.pattern.permute.xlu0 15
    %2129 = vperm.xlu0 %2128, %v630
    %v2130 = vpop.permute.xlu0 %2129
    %v2132 = vmul.f32 %v2123, %v2126
    %v2133 = vmul.f32 %v2123, %v2130
    %v2134 = vlaneseq
    %v2135 = vshrl.u32 %v2134, 7
    %v2136 = vsub.s32 7, %v2135
    %v2137 = vrot.slane %v549, %v2136
    %2138 = vset.pattern.permute.xlu0 31
    %2139 = vperm.xlu0 %2138, %v625
    %v2140 = vpop.permute.xlu0 %2139
    %2142 = vset.pattern.permute.xlu0 31
    %2143 = vperm.xlu0 %2142, %v630
    %v2144 = vpop.permute.xlu0 %2143
    %v2146 = vmul.f32 %v2137, %v2140
    %v2147 = vmul.f32 %v2137, %v2144
    %2150 = vrot.lane.b32.xlu0 %v2146, 32
    %v2151 = vpop.permute.xlu0 %2150
    %2152 = vrot.lane.b32.xlu0 %v2147, 32
    %v2153 = vpop.permute.xlu0 %2152
    %v2156 = vsel %vm67, %v2132, %v2151
    %v2157 = vsel %vm67, %v2133, %v2153
    %s2158 = scalar_lea.vmem [#allocation3], 240
    %2159 = vst.msk [vmem:[%s2158] sm:$0xff] %vm750, %v2156
    %2160 = vst.msk [vmem:[%s2158 + $0x8] sm:$0xff] %vm750, %v2157
    %2161 = vset.pattern.permute.xlu0 15
    %2162 = vperm.xlu0 %2161, %v708
    %v2163 = vpop.permute.xlu0 %2162
    %2165 = vset.pattern.permute.xlu0 15
    %2166 = vperm.xlu0 %2165, %v713
    %v2167 = vpop.permute.xlu0 %2166
    %2169 = vset.pattern.permute.xlu0 31
    %2170 = vperm.xlu0 %2169, %v708
    %v2171 = vpop.permute.xlu0 %2170
    %2173 = vset.pattern.permute.xlu0 31
    %2174 = vperm.xlu0 %2173, %v713
    %v2175 = vpop.permute.xlu0 %2174
    %v2177 = vsel %vm67, %v2163, %v2171
    %v2178 = vsel %vm67, %v2167, %v2175
    %s2179 = scalar_lea.vmem [#allocation4], 240
    %2180 = vst.msk [vmem:[%s2179] sm:$0xff] %vm750, %v2177
    %2181 = vst.msk [vmem:[%s2179 + $0x8] sm:$0xff] %vm750, %v2178
    %v2182 = vld [vmem:[#allocation2] sm:$0xff]
    %v2183 = vld [vmem:[#allocation2 + $0x8] sm:$0xff]
    %v2184 = vmul.f32 %v2182, 0.0
    %v2185 = vmul.f32 %v2183, 0.0
    %v2186 = vld [vmem:[#allocation3] sm:$0xff]
    %v2187 = vld [vmem:[#allocation3 + $0x8] sm:$0xff]
    %v2188 = vadd.f32 %v2184, %v2186
    %v2189 = vadd.f32 %v2185, %v2187
    %v2190 = vld [vmem:[#allocation4] sm:$0xff]
    %v2191 = vld [vmem:[#allocation4 + $0x8] sm:$0xff]
    %v2192 = vmul.f32 %v2190, %v2188
    %v2193 = vmul.f32 %v2191, %v2189
    %v2194 = vsel %vm750, %v2192, 0.0
    %v2195 = vsel %vm750, %v2193, 0.0
    %v2196 = vadd.f32 %v2194, %v2195
    %v2197 = vrot.slane %v2196, 4
    %v2198 = vadd.f32 %v2196, %v2197
    %v2199 = vrot.slane %v2198, 2
    %v2200 = vadd.f32 %v2198, %v2199
    %v2201 = vrot.slane %v2200, 1
    %v2202 = vadd.f32 %v2200, %v2201
    %v2203 = vld [vmem:[%s843] sm:$0xff]
    %v2204 = vld [vmem:[%s843 + $0x8] sm:$0xff]
    %v2205 = vmul.f32 %v2203, %v2188
    %v2206 = vmul.f32 %v2204, %v2189
    %v2207 = vld [vmem:[%s884] sm:$0xff]
    %v2208 = vld [vmem:[%s884 + $0x8] sm:$0xff]
    %v2209 = vadd.f32 %v2205, %v2207
    %v2210 = vadd.f32 %v2206, %v2208
    %v2211 = vld [vmem:[%s905] sm:$0xff]
    %v2212 = vld [vmem:[%s905 + $0x8] sm:$0xff]
    %v2213 = vmul.f32 %v2211, %v2209
    %v2214 = vmul.f32 %v2212, %v2210
    %v2215 = vsel %vm750, %v2213, 0.0
    %v2216 = vsel %vm750, %v2214, 0.0
    %v2217 = vadd.f32 %v2215, %v2216
    %v2218 = vrot.slane %v2217, 4
    %v2219 = vadd.f32 %v2217, %v2218
    %v2220 = vrot.slane %v2219, 2
    %v2221 = vadd.f32 %v2219, %v2220
    %v2222 = vrot.slane %v2221, 1
    %v2223 = vadd.f32 %v2221, %v2222
    %v2224 = vld [vmem:[%s934] sm:$0xff]
    %v2225 = vld [vmem:[%s934 + $0x8] sm:$0xff]
    %v2226 = vmul.f32 %v2224, %v2209
    %v2227 = vmul.f32 %v2225, %v2210
    %v2228 = vld [vmem:[%s975] sm:$0xff]
    %v2229 = vld [vmem:[%s975 + $0x8] sm:$0xff]
    %v2230 = vadd.f32 %v2226, %v2228
    %v2231 = vadd.f32 %v2227, %v2229
    %v2232 = vld [vmem:[%s996] sm:$0xff]
    %v2233 = vld [vmem:[%s996 + $0x8] sm:$0xff]
    %v2234 = vmul.f32 %v2232, %v2230
    %v2235 = vmul.f32 %v2233, %v2231
    %v2236 = vsel %vm750, %v2234, 0.0
    %v2237 = vsel %vm750, %v2235, 0.0
    %v2238 = vadd.f32 %v2236, %v2237
    %v2239 = vrot.slane %v2238, 4
    %v2240 = vadd.f32 %v2238, %v2239
    %v2241 = vrot.slane %v2240, 2
    %v2242 = vadd.f32 %v2240, %v2241
    %v2243 = vrot.slane %v2242, 1
    %v2244 = vadd.f32 %v2242, %v2243
    %v2245 = vld [vmem:[%s1025] sm:$0xff]
    %v2246 = vld [vmem:[%s1025 + $0x8] sm:$0xff]
    %v2247 = vmul.f32 %v2245, %v2230
    %v2248 = vmul.f32 %v2246, %v2231
    %v2249 = vld [vmem:[%s1066] sm:$0xff]
    %v2250 = vld [vmem:[%s1066 + $0x8] sm:$0xff]
    %v2251 = vadd.f32 %v2247, %v2249
    %v2252 = vadd.f32 %v2248, %v2250
    %v2253 = vld [vmem:[%s1087] sm:$0xff]
    %v2254 = vld [vmem:[%s1087 + $0x8] sm:$0xff]
    %v2255 = vmul.f32 %v2253, %v2251
    %v2256 = vmul.f32 %v2254, %v2252
    %v2257 = vsel %vm750, %v2255, 0.0
    %v2258 = vsel %vm750, %v2256, 0.0
    %v2259 = vadd.f32 %v2257, %v2258
    %v2260 = vrot.slane %v2259, 4
    %v2261 = vadd.f32 %v2259, %v2260
    %v2262 = vrot.slane %v2261, 2
    %v2263 = vadd.f32 %v2261, %v2262
    %v2264 = vrot.slane %v2263, 1
    %v2265 = vadd.f32 %v2263, %v2264
    %v2266 = vld [vmem:[%s1116] sm:$0xff]
    %v2267 = vld [vmem:[%s1116 + $0x8] sm:$0xff]
    %v2268 = vmul.f32 %v2266, %v2251
    %v2269 = vmul.f32 %v2267, %v2252
    %v2270 = vld [vmem:[%s1157] sm:$0xff]
    %v2271 = vld [vmem:[%s1157 + $0x8] sm:$0xff]
    %v2272 = vadd.f32 %v2268, %v2270
    %v2273 = vadd.f32 %v2269, %v2271
    %v2274 = vld [vmem:[%s1178] sm:$0xff]
    %v2275 = vld [vmem:[%s1178 + $0x8] sm:$0xff]
    %v2276 = vmul.f32 %v2274, %v2272
    %v2277 = vmul.f32 %v2275, %v2273
    %v2278 = vsel %vm750, %v2276, 0.0
    %v2279 = vsel %vm750, %v2277, 0.0
    %v2280 = vadd.f32 %v2278, %v2279
    %v2281 = vrot.slane %v2280, 4
    %v2282 = vadd.f32 %v2280, %v2281
    %v2283 = vrot.slane %v2282, 2
    %v2284 = vadd.f32 %v2282, %v2283
    %v2285 = vrot.slane %v2284, 1
    %v2286 = vadd.f32 %v2284, %v2285
    %v2287 = vld [vmem:[%s1207] sm:$0xff]
    %v2288 = vld [vmem:[%s1207 + $0x8] sm:$0xff]
    %v2289 = vmul.f32 %v2287, %v2272
    %v2290 = vmul.f32 %v2288, %v2273
    %v2291 = vld [vmem:[%s1248] sm:$0xff]
    %v2292 = vld [vmem:[%s1248 + $0x8] sm:$0xff]
    %v2293 = vadd.f32 %v2289, %v2291
    %v2294 = vadd.f32 %v2290, %v2292
    %v2295 = vld [vmem:[%s1269] sm:$0xff]
    %v2296 = vld [vmem:[%s1269 + $0x8] sm:$0xff]
    %v2297 = vmul.f32 %v2295, %v2293
    %v2298 = vmul.f32 %v2296, %v2294
    %v2299 = vsel %vm750, %v2297, 0.0
    %v2300 = vsel %vm750, %v2298, 0.0
    %v2301 = vadd.f32 %v2299, %v2300
    %v2302 = vrot.slane %v2301, 4
    %v2303 = vadd.f32 %v2301, %v2302
    %v2304 = vrot.slane %v2303, 2
    %v2305 = vadd.f32 %v2303, %v2304
    %v2306 = vrot.slane %v2305, 1
    %v2307 = vadd.f32 %v2305, %v2306
    %v2308 = vld [vmem:[%s1298] sm:$0xff]
    %v2309 = vld [vmem:[%s1298 + $0x8] sm:$0xff]
    %v2310 = vmul.f32 %v2308, %v2293
    %v2311 = vmul.f32 %v2309, %v2294
    %v2312 = vld [vmem:[%s1339] sm:$0xff]
    %v2313 = vld [vmem:[%s1339 + $0x8] sm:$0xff]
    %v2314 = vadd.f32 %v2310, %v2312
    %v2315 = vadd.f32 %v2311, %v2313
    %v2316 = vld [vmem:[%s1360] sm:$0xff]
    %v2317 = vld [vmem:[%s1360 + $0x8] sm:$0xff]
    %v2318 = vmul.f32 %v2316, %v2314
    %v2319 = vmul.f32 %v2317, %v2315
    %v2320 = vsel %vm750, %v2318, 0.0
    %v2321 = vsel %vm750, %v2319, 0.0
    %v2322 = vadd.f32 %v2320, %v2321
    %v2323 = vrot.slane %v2322, 4
    %v2324 = vadd.f32 %v2322, %v2323
    %v2325 = vrot.slane %v2324, 2
    %v2326 = vadd.f32 %v2324, %v2325
    %v2327 = vrot.slane %v2326, 1
    %v2328 = vadd.f32 %v2326, %v2327
    %v2329 = vld [vmem:[%s1389] sm:$0xff]
    %v2330 = vld [vmem:[%s1389 + $0x8] sm:$0xff]
    %v2331 = vmul.f32 %v2329, %v2314
    %v2332 = vmul.f32 %v2330, %v2315
    %v2333 = vld [vmem:[%s1430] sm:$0xff]
    %v2334 = vld [vmem:[%s1430 + $0x8] sm:$0xff]
    %v2335 = vadd.f32 %v2331, %v2333
    %v2336 = vadd.f32 %v2332, %v2334
    %v2337 = vld [vmem:[%s1451] sm:$0xff]
    %v2338 = vld [vmem:[%s1451 + $0x8] sm:$0xff]
    %v2339 = vmul.f32 %v2337, %v2335
    %v2340 = vmul.f32 %v2338, %v2336
    %v2341 = vsel %vm750, %v2339, 0.0
    %v2342 = vsel %vm750, %v2340, 0.0
    %v2343 = vadd.f32 %v2341, %v2342
    %v2344 = vrot.slane %v2343, 4
    %v2345 = vadd.f32 %v2343, %v2344
    %v2346 = vrot.slane %v2345, 2
    %v2347 = vadd.f32 %v2345, %v2346
    %v2348 = vrot.slane %v2347, 1
    %v2349 = vadd.f32 %v2347, %v2348
    %v2350 = vld [vmem:[%s1480] sm:$0xff]
    %v2351 = vld [vmem:[%s1480 + $0x8] sm:$0xff]
    %v2352 = vmul.f32 %v2350, %v2335
    %v2353 = vmul.f32 %v2351, %v2336
    %v2354 = vld [vmem:[%s1521] sm:$0xff]
    %v2355 = vld [vmem:[%s1521 + $0x8] sm:$0xff]
    %v2356 = vadd.f32 %v2352, %v2354
    %v2357 = vadd.f32 %v2353, %v2355
    %v2358 = vld [vmem:[%s1542] sm:$0xff]
    %v2359 = vld [vmem:[%s1542 + $0x8] sm:$0xff]
    %v2360 = vmul.f32 %v2358, %v2356
    %v2361 = vmul.f32 %v2359, %v2357
    %v2362 = vsel %vm750, %v2360, 0.0
    %v2363 = vsel %vm750, %v2361, 0.0
    %v2364 = vadd.f32 %v2362, %v2363
    %v2365 = vrot.slane %v2364, 4
    %v2366 = vadd.f32 %v2364, %v2365
    %v2367 = vrot.slane %v2366, 2
    %v2368 = vadd.f32 %v2366, %v2367
    %v2369 = vrot.slane %v2368, 1
    %v2370 = vadd.f32 %v2368, %v2369
    %v2371 = vld [vmem:[%s1571] sm:$0xff]
    %v2372 = vld [vmem:[%s1571 + $0x8] sm:$0xff]
    %v2373 = vmul.f32 %v2371, %v2356
    %v2374 = vmul.f32 %v2372, %v2357
    %v2375 = vld [vmem:[%s1612] sm:$0xff]
    %v2376 = vld [vmem:[%s1612 + $0x8] sm:$0xff]
    %v2377 = vadd.f32 %v2373, %v2375
    %v2378 = vadd.f32 %v2374, %v2376
    %v2379 = vld [vmem:[%s1633] sm:$0xff]
    %v2380 = vld [vmem:[%s1633 + $0x8] sm:$0xff]
    %v2381 = vmul.f32 %v2379, %v2377
    %v2382 = vmul.f32 %v2380, %v2378
    %v2383 = vsel %vm750, %v2381, 0.0
    %v2384 = vsel %vm750, %v2382, 0.0
    %v2385 = vadd.f32 %v2383, %v2384
    %v2386 = vrot.slane %v2385, 4
    %v2387 = vadd.f32 %v2385, %v2386
    %v2388 = vrot.slane %v2387, 2
    %v2389 = vadd.f32 %v2387, %v2388
    %v2390 = vrot.slane %v2389, 1
    %v2391 = vadd.f32 %v2389, %v2390
    %v2392 = vld [vmem:[%s1662] sm:$0xff]
    %v2393 = vld [vmem:[%s1662 + $0x8] sm:$0xff]
    %v2394 = vmul.f32 %v2392, %v2377
    %v2395 = vmul.f32 %v2393, %v2378
    %v2396 = vld [vmem:[%s1703] sm:$0xff]
    %v2397 = vld [vmem:[%s1703 + $0x8] sm:$0xff]
    %v2398 = vadd.f32 %v2394, %v2396
    %v2399 = vadd.f32 %v2395, %v2397
    %v2400 = vld [vmem:[%s1724] sm:$0xff]
    %v2401 = vld [vmem:[%s1724 + $0x8] sm:$0xff]
    %v2402 = vmul.f32 %v2400, %v2398
    %v2403 = vmul.f32 %v2401, %v2399
    %v2404 = vsel %vm750, %v2402, 0.0
    %v2405 = vsel %vm750, %v2403, 0.0
    %v2406 = vadd.f32 %v2404, %v2405
    %v2407 = vrot.slane %v2406, 4
    %v2408 = vadd.f32 %v2406, %v2407
    %v2409 = vrot.slane %v2408, 2
    %v2410 = vadd.f32 %v2408, %v2409
    %v2411 = vrot.slane %v2410, 1
    %v2412 = vadd.f32 %v2410, %v2411
    %v2413 = vld [vmem:[%s1753] sm:$0xff]
    %v2414 = vld [vmem:[%s1753 + $0x8] sm:$0xff]
    %v2415 = vmul.f32 %v2413, %v2398
    %v2416 = vmul.f32 %v2414, %v2399
    %v2417 = vld [vmem:[%s1794] sm:$0xff]
    %v2418 = vld [vmem:[%s1794 + $0x8] sm:$0xff]
    %v2419 = vadd.f32 %v2415, %v2417
    %v2420 = vadd.f32 %v2416, %v2418
    %v2421 = vld [vmem:[%s1815] sm:$0xff]
    %v2422 = vld [vmem:[%s1815 + $0x8] sm:$0xff]
    %v2423 = vmul.f32 %v2421, %v2419
    %v2424 = vmul.f32 %v2422, %v2420
    %v2425 = vsel %vm750, %v2423, 0.0
    %v2426 = vsel %vm750, %v2424, 0.0
    %v2427 = vadd.f32 %v2425, %v2426
    %v2428 = vrot.slane %v2427, 4
    %v2429 = vadd.f32 %v2427, %v2428
    %v2430 = vrot.slane %v2429, 2
    %v2431 = vadd.f32 %v2429, %v2430
    %v2432 = vrot.slane %v2431, 1
    %v2433 = vadd.f32 %v2431, %v2432
    %v2434 = vld [vmem:[%s1844] sm:$0xff]
    %v2435 = vld [vmem:[%s1844 + $0x8] sm:$0xff]
    %v2436 = vmul.f32 %v2434, %v2419
    %v2437 = vmul.f32 %v2435, %v2420
    %v2438 = vld [vmem:[%s1885] sm:$0xff]
    %v2439 = vld [vmem:[%s1885 + $0x8] sm:$0xff]
    %v2440 = vadd.f32 %v2436, %v2438
    %v2441 = vadd.f32 %v2437, %v2439
    %v2442 = vld [vmem:[%s1906] sm:$0xff]
    %v2443 = vld [vmem:[%s1906 + $0x8] sm:$0xff]
    %v2444 = vmul.f32 %v2442, %v2440
    %v2445 = vmul.f32 %v2443, %v2441
    %v2446 = vsel %vm750, %v2444, 0.0
    %v2447 = vsel %vm750, %v2445, 0.0
    %v2448 = vadd.f32 %v2446, %v2447
    %v2449 = vrot.slane %v2448, 4
    %v2450 = vadd.f32 %v2448, %v2449
    %v2451 = vrot.slane %v2450, 2
    %v2452 = vadd.f32 %v2450, %v2451
    %v2453 = vrot.slane %v2452, 1
    %v2454 = vadd.f32 %v2452, %v2453
    %v2455 = vld [vmem:[%s1935] sm:$0xff]
    %v2456 = vld [vmem:[%s1935 + $0x8] sm:$0xff]
    %v2457 = vmul.f32 %v2455, %v2440
    %v2458 = vmul.f32 %v2456, %v2441
    %v2459 = vld [vmem:[%s1976] sm:$0xff]
    %v2460 = vld [vmem:[%s1976 + $0x8] sm:$0xff]
    %v2461 = vadd.f32 %v2457, %v2459
    %v2462 = vadd.f32 %v2458, %v2460
    %v2463 = vld [vmem:[%s1997] sm:$0xff]
    %v2464 = vld [vmem:[%s1997 + $0x8] sm:$0xff]
    %v2465 = vmul.f32 %v2463, %v2461
    %v2466 = vmul.f32 %v2464, %v2462
    %v2467 = vsel %vm750, %v2465, 0.0
    %v2468 = vsel %vm750, %v2466, 0.0
    %v2469 = vadd.f32 %v2467, %v2468
    %v2470 = vrot.slane %v2469, 4
    %v2471 = vadd.f32 %v2469, %v2470
    %v2472 = vrot.slane %v2471, 2
    %v2473 = vadd.f32 %v2471, %v2472
    %v2474 = vrot.slane %v2473, 1
    %v2475 = vadd.f32 %v2473, %v2474
    %v2476 = vld [vmem:[%s2026] sm:$0xff]
    %v2477 = vld [vmem:[%s2026 + $0x8] sm:$0xff]
    %v2478 = vmul.f32 %v2476, %v2461
    %v2479 = vmul.f32 %v2477, %v2462
    %v2480 = vld [vmem:[%s2067] sm:$0xff]
    %v2481 = vld [vmem:[%s2067 + $0x8] sm:$0xff]
    %v2482 = vadd.f32 %v2478, %v2480
    %v2483 = vadd.f32 %v2479, %v2481
    %v2484 = vld [vmem:[%s2088] sm:$0xff]
    %v2485 = vld [vmem:[%s2088 + $0x8] sm:$0xff]
    %v2486 = vmul.f32 %v2484, %v2482
    %v2487 = vmul.f32 %v2485, %v2483
    %v2488 = vsel %vm750, %v2486, 0.0
    %v2489 = vsel %vm750, %v2487, 0.0
    %v2490 = vadd.f32 %v2488, %v2489
    %v2491 = vrot.slane %v2490, 4
    %v2492 = vadd.f32 %v2490, %v2491
    %v2493 = vrot.slane %v2492, 2
    %v2494 = vadd.f32 %v2492, %v2493
    %v2495 = vrot.slane %v2494, 1
    %v2496 = vadd.f32 %v2494, %v2495
    %v2497 = vld [vmem:[%s2117] sm:$0xff]
    %v2498 = vld [vmem:[%s2117 + $0x8] sm:$0xff]
    %v2499 = vmul.f32 %v2497, %v2482
    %v2500 = vmul.f32 %v2498, %v2483
    %v2501 = vld [vmem:[%s2158] sm:$0xff]
    %v2502 = vld [vmem:[%s2158 + $0x8] sm:$0xff]
    %v2503 = vadd.f32 %v2499, %v2501
    %v2504 = vadd.f32 %v2500, %v2502
    %v2505 = vld [vmem:[%s2179] sm:$0xff]
    %v2506 = vld [vmem:[%s2179 + $0x8] sm:$0xff]
    %v2507 = vmul.f32 %v2505, %v2503
    %v2508 = vmul.f32 %v2506, %v2504
    %v2509 = vsel %vm750, %v2507, 0.0
    %v2510 = vsel %vm750, %v2508, 0.0
    %v2511 = vadd.f32 %v2509, %v2510
    %v2512 = vrot.slane %v2511, 4
    %v2513 = vadd.f32 %v2511, %v2512
    %v2514 = vrot.slane %v2513, 2
    %v2515 = vadd.f32 %v2513, %v2514
    %v2516 = vrot.slane %v2515, 1
    %v2517 = vadd.f32 %v2515, %v2516
    %vm2518 = vcmask 1040384
    %v2519 = vsel %vm2518, %v2202, %v2223
    %vm2520 = vcmask 1041408
    %v2521 = vsel %vm2520, %v2519, %v2244
    %vm2522 = vcmask 1042432
    %v2523 = vsel %vm2522, %v2521, %v2265
    %vm2524 = vcmask 1043456
    %v2525 = vsel %vm2524, %v2523, %v2286
    %vm2526 = vcmask 1044480
    %v2527 = vsel %vm2526, %v2525, %v2307
    %vm2528 = vcmask 1045504
    %v2529 = vsel %vm2528, %v2527, %v2328
    %vm2530 = vcmask 1046528
    %v2531 = vsel %vm2530, %v2529, %v2349
    %v2532 = vsel %vm2518, %v2370, %v2391
    %v2533 = vsel %vm2520, %v2532, %v2412
    %v2534 = vsel %vm2522, %v2533, %v2433
    %v2535 = vsel %vm2524, %v2534, %v2454
    %v2536 = vsel %vm2526, %v2535, %v2475
    %v2537 = vsel %vm2528, %v2536, %v2496
    %v2538 = vsel %vm2530, %v2537, %v2517
    %2541 = vrot.lane.b32.xlu0 %v2531, 96
    %v2542 = vpop.permute.xlu0 %2541
    %2543 = vrot.lane.b32.xlu0 %v2538, 96
    %v2544 = vpop.permute.xlu0 %2543
    %2547 = vrot.lane.b32.xlu0 %v398, 32
    %v2548 = vpop.permute.xlu0 %2547
    %2549 = vrot.lane.b32.xlu0 %v399, 32
    %v2550 = vpop.permute.xlu0 %2549
    %2551 = vrot.lane.b32.xlu0 %v400, 32
    %v2552 = vpop.permute.xlu0 %2551
    %2553 = vrot.lane.b32.xlu0 %v401, 32
    %v2554 = vpop.permute.xlu0 %2553
    %v2559 = vsel %vm67, %v2531, %v2548
    %v2560 = vsel %vm67, %v2538, %v2550
    %v2561 = vsel %vm67, %v2542, %v2552
    %v2562 = vsel %vm67, %v2544, %v2554
    %v2563 = vld [vmem:[%s8] sm:$0xff]
    %v2564 = vld [vmem:[%s8 + $0x8] sm:$0xff]
    %v2565 = vld [vmem:[%s8 + $0x10] sm:$0xff]
    %v2566 = vld [vmem:[%s8 + $0x18] sm:$0xff]
    %v2567 = vld [vmem:[%s8 + $0x20] sm:$0xff]
    %v2568 = vld [vmem:[%s8 + $0x28] sm:$0xff]
    %v2569 = vld [vmem:[%s8 + $0x30] sm:$0xff]
    %v2570 = vld [vmem:[%s8 + $0x38] sm:$0xff]
    %v2571 = vld [vmem:[%s8 + $0x40] sm:$0xff]
    %v2572 = vld [vmem:[%s8 + $0x48] sm:$0xff]
    %v2573 = vld [vmem:[%s8 + $0x50] sm:$0xff]
    %v2574 = vld [vmem:[%s8 + $0x58] sm:$0xff]
    %vm2575 = vcmask 785408
    %v2577 = vsel %vm2575, %v2559, 0
    %v2580 = vsel %vm2575, %v2560, 0
    %v2583 = vsel %vm2575, %v2561, 0
    %v2586 = vsel %vm2575, %v2562, 0
    %2588 = vmatprep.subr.mxu0 0.0
    %2589 = vmatpush1.msra.mxu0 0.0
    %2590 = vmatprep.subr.mxu0 0.0
    %2591 = vmatpush1.msra.mxu0 0.0
    %2592 = vmatprep.subr.mxu0 0.0
    %2593 = vmatpush1.msra.mxu0 0.0
    %2594 = vmatprep.subr.mxu0 0.0
    %2595 = vmatpush1.msra.mxu0 0.0
    %2596 = vmatprep.subr.mxu0 0.0
    %2597 = vmatpush1.msra.mxu0 %v2574
    %2598 = vmatprep.subr.mxu0 0.0
    %2599 = vmatpush1.msra.mxu0 %v2573
    %2600 = vmatprep.subr.mxu0 0.0
    %2601 = vmatpush1.msra.mxu0 %v2572
    %2602 = vmatprep.subr.mxu0 0.0
    %2603 = vmatpush1.msra.mxu0 %v2571
    %2604 = vmatprep.subr.mxu0 0.0
    %2605 = vmatpush1.msra.mxu0 %v2570
    %2606 = vmatprep.subr.mxu0 0.0
    %2607 = vmatpush1.msra.mxu0 %v2569
    %2608 = vmatprep.subr.mxu0 0.0
    %2609 = vmatpush1.msra.mxu0 %v2568
    %2610 = vmatprep.subr.mxu0 0.0
    %2611 = vmatpush1.msra.mxu0 %v2567
    %2612 = vmatprep.subr.mxu0 0.0
    %2613 = vmatpush1.msra.mxu0 %v2566
    %2614 = vmatprep.subr.mxu0 0.0
    %2615 = vmatpush1.msra.mxu0 %v2565
    %2616 = vmatprep.subr.mxu0 0.0
    %2617 = vmatpush1.msra.mxu0 %v2564
    %2618 = vmatprep.subr.mxu0 0.0
    %2619 = vmatpush1.msra.mxu0 %v2563
    %2620 = vmatprep.subr.mxu0 0.0
    %2621 = vmatpush2.msra.mxu0 0.0
    %2622 = vmatprep.subr.mxu0 0.0
    %2623 = vmatpush2.msra.mxu0 0.0
    %2624 = vmatprep.subr.mxu0 0.0
    %2625 = vmatpush2.msra.mxu0 0.0
    %2626 = vmatprep.subr.mxu0 0.0
    %2627 = vmatpush2.msra.mxu0 0.0
    %2628 = vmatprep.subr.mxu0 0.0
    %2629 = vmatpush2.msra.mxu0 0.0
    %2630 = vmatprep.subr.mxu0 0.0
    %2631 = vmatpush2.msra.mxu0 0.0
    %2632 = vmatprep.subr.mxu0 0.0
    %2633 = vmatpush2.msra.mxu0 0.0
    %2634 = vmatprep.subr.mxu0 0.0
    %2635 = vmatpush2.msra.mxu0 0.0
    %2636 = vmatprep.subr.mxu0 0.0
    %2637 = vmatpush2.msra.mxu0 0.0
    %2638 = vmatprep.subr.mxu0 0.0
    %2639 = vmatpush2.msra.mxu0 0.0
    %2640 = vmatprep.subr.mxu0 0.0
    %2641 = vmatpush2.msra.mxu0 0.0
    %2642 = vmatprep.subr.mxu0 0.0
    %2643 = vmatpush2.msra.mxu0 0.0
    %2644 = vmatprep.subr.mxu0 0.0
    %2645 = vmatpush2.msra.mxu0 0.0
    %2646 = vmatprep.subr.mxu0 0.0
    %2647 = vmatpush2.msra.mxu0 0.0
    %2648 = vmatprep.subr.mxu0 0.0
    %2649 = vmatpush2.msra.mxu0 0.0
    %2650 = vmatprep.subr.mxu0 0.0
    %2651 = vmatpush2.msra.mxu0 0.0
    %2652 = vmatprep.mubr.f32.mxu0 0.0
    %2653 = vmatmul.mubr.f32.gmra.mxu0 %v2577
    %v2654 = vpop.f32.mrf.mxu0
    %v2655 = vadd.f32 0.0, %v2654
    %v2656 = vpop.f32.mrf.mxu0
    %2657 = vmatprep.mubr.f32.mxu0 0.0
    %2658 = vmatmul.mubr.f32.gmra.mxu0 %v2580
    %v2659 = vpop.f32.mrf.mxu0
    %v2660 = vadd.f32 0.0, %v2659
    %v2661 = vpop.f32.mrf.mxu0
    %2662 = vmatprep.mubr.f32.mxu0 0.0
    %2663 = vmatmul.mubr.f32.gmra.mxu0 %v2583
    %v2664 = vpop.f32.mrf.mxu0
    %v2665 = vadd.f32 0.0, %v2664
    %v2666 = vpop.f32.mrf.mxu0
    %2667 = vmatprep.mubr.f32.mxu0 0.0
    %2668 = vmatmul.mubr.f32.gmra.mxu0 %v2586
    %v2669 = vpop.f32.mrf.mxu0
    %v2670 = vadd.f32 0.0, %v2669
    %v2671 = vpop.f32.mrf.mxu0
    %2672 = vdwg.mxu0
    %2673 = vst.msk [vmem:[#allocation10] sm:$0xff] %vm67, %v2655
    %2674 = vst.msk [vmem:[#allocation10 + $0x8] sm:$0xff] %vm67, %v2660
    %2675 = vst.msk [vmem:[#allocation10 + $0x10] sm:$0xff] %vm67, %v2665
    %2676 = vst.msk [vmem:[#allocation10 + $0x18] sm:$0xff] %vm67, %v2670
    // Predicated region
    $region46: #{tpu_custom_call.1} parent=1 // pred_check
      _
    $region47: #{tpu_custom_call.1} parent=1 // pred_check_branch
      %2678 = sbr.rel (0) target = $region49
    $region48: #{tpu_custom_call.1} parent=1 // pred_region
      %s2680 = ssub.s32 512, 512
      %2681 = vsyncadd [#allocation7], %s2680
      %s2682 = sshll.u32 [#allocation10], 4
      %s2683 = int_to_ptr.vmem [resolvable:$true] %s2682
      %2688 = dma.vmem_to_hbm [thread:$0]  %s2683, 512, %s9, [#allocation7], 128, 128, 8
    $region49: #{tpu_custom_call.1} parent=1 // pred_fallthru
      _
    // Predicated region
    $region50: #{tpu_custom_call.1} parent=1 // pred_check
      _
    $region51: #{tpu_custom_call.1} parent=1 // pred_check_branch
      %2690 = sbr.rel (0) target = $region53
    $region52: #{tpu_custom_call.1} parent=1 // pred_region
      %2691 = dma.done [#allocation7], 512
    $region53: #{tpu_custom_call.1} parent=1 // pred_fallthru
      _
    %2692 = vsyncpa [#allocation6], 1
    %2693 = vsyncpa [#allocation9], 1
    %2694 = vsyncpa [#allocation7], 1

</llo_original>
